<compile_context>
chip_gen: v7x
topology: tpu7x:2x2x1
jax: 0.10.0
libtpu: 0.0.40
codegen_flags: <defaults>
</compile_context>

<pallas_src>
import functools

import jax
import jax.numpy as jnp
from jax.experimental import pallas as pl
from jax.experimental.pallas import tpu as pltpu

EPS = 1e-5
NEG = -1e9
BF16 = jnp.bfloat16


# ---------------------------------------------------------------------------
# Shared math helpers (used by the Pallas kernel and the pure-JAX reference).
# ---------------------------------------------------------------------------
def _mm(a, b):
    """MXU matmul: bf16 operands, f32 accumulation."""
    return jnp.dot(a.astype(BF16), b.astype(BF16),
                   preferred_element_type=jnp.float32)


def _mm_nt(a, b):
    """a @ b.T (contract last dims of both) without materializing a transpose."""
    return jax.lax.dot_general(a.astype(BF16), b.astype(BF16),
                               (((1,), (1,)), ((), ())),
                               preferred_element_type=jnp.float32)


def _layer_norm(x, w, b):
    mu = jnp.mean(x, axis=-1, keepdims=True)
    var = jnp.mean((x - mu) ** 2, axis=-1, keepdims=True)
    return (x - mu) * jax.lax.rsqrt(var + EPS) * w + b


def _rows(vecs):
    """Split a packed (N, E) parameter block into N (1, E) rows."""
    return tuple(vecs[i:i + 1, :] for i in range(vecs.shape[0]))


# ---------------------------------------------------------------------------
# Fused Pallas kernel: grid axis = decoder layer. Activation slab lives in a
# VMEM scratch across grid steps; per-layer weights are streamed via BlockSpec.
# ---------------------------------------------------------------------------
def fused_decoder_kernel(H,
                         x_ref, mem_ref, samask_ref, camask_ref,
                         wqkv_sa_ref, wo_sa_ref, wq_ca_ref, wkv_ca_ref,
                         wo_ca_ref, w1_ref, w2_ref, vecs_ref, l1b_ref,
                         gate_w_ref,
                         out_ref,
                         act_ref):
    layer = pl.program_id(0)
    last = pl.num_programs(0) - 1

    @pl.when(layer == 0)
    def _():
        act_ref[...] = x_ref[...]

    x = act_ref[...]          # (BS, E)   f32  resident activation
    mem = mem_ref[...]        # (2*B*Ss, E) bf16 stacked [text ; ctrl] memories
    sa_mask = samask_ref[...]  # (BS, BS)  block-diag causal mask (per batch)
    ca_mask = camask_ref[...]  # (2BS, 2*B*Ss) combined cross mask (branch+batch)
    vecs = vecs_ref[...]      # (16, E)   packed biases / LN params
    l1b = l1b_ref[...]        # (1, F)

    BS, E = x.shape
    Dh = E // H

    (sa_bq, sa_bk, sa_bv, sa_bo,
     ca_bq, ca_bk, ca_bv, ca_bo,
     l2b, n1w, n1b, n2w, n2b, n3w, n3b, gb) = _rows(vecs)

    def softmax(s):
        s = s - jnp.max(s, axis=-1, keepdims=True)
        p = jnp.exp(s)
        return p * pl.reciprocal(jnp.sum(p, axis=-1, keepdims=True),
                                 approx=True)

    def mha_ctx(q, k, v, mask):
        # Tiny static per-head loop; the single lane concat stays within one
        # vreg lane span (no per-batch row concat -- batch handled by mask).
        ctxs = []
        for h in range(H):
            sl = slice(h * Dh, (h + 1) * Dh)
            p = softmax(_mm_nt(q[:, sl], k[:, sl]) + mask)
            ctxs.append(_mm(p, v[:, sl]))
        return jnp.concatenate(ctxs, axis=-1)

    # ---- self-attention + norm1: identical for both branches (computed once).
    # 1/sqrt(Dh) already folded into the Q weight/bias host-side.
    qkv = _mm(x, wqkv_sa_ref[...])                 # (BS, 3E) one fused dot
    q = qkv[:, 0:E] + sa_bq
    k = qkv[:, E:2 * E] + sa_bk
    v = qkv[:, 2 * E:3 * E] + sa_bv
    sa = _mm(mha_ctx(q, k, v, sa_mask), wo_sa_ref[...]) + sa_bo
    h1 = _layer_norm(x + sa, n1w, n1b)

    # ---- cross-attention: Q projection shared, K/V for both memories fused,
    #      both branches row-stacked through attention / FFN / layernorms.
    qc = _mm(h1, wq_ca_ref[...]) + ca_bq           # (BS, E)
    qc2 = jnp.concatenate([qc, qc], axis=0)        # (2BS, E) [text ; ctrl] queries
    kv = _mm(mem, wkv_ca_ref[...])                 # (2*B*Ss, 2E) one fused dot
    kc = kv[:, 0:E] + ca_bk
    vc = kv[:, E:2 * E] + ca_bv
    ca = _mm(mha_ctx(qc2, kc, vc, ca_mask), wo_ca_ref[...]) + ca_bo   # (2BS, E)

    h1s = jnp.concatenate([h1, h1], axis=0)        # (2BS, E)
    h2 = _layer_norm(h1s + ca, n2w, n2b)
    ff = _mm(jnp.maximum(_mm(h2, w1_ref[...]) + l1b, 0.0), w2_ref[...]) + l2b
    h3 = _layer_norm(h2 + ff, n3w, n3b)            # (2BS, E)

    # ---- gate: split branches back, one fused (2E -> E) dot.
    text = h3[0:BS]
    ctrl = h3[BS:2 * BS]
    g = jax.nn.sigmoid(
        _mm(jnp.concatenate([text, ctrl], axis=-1), gate_w_ref[...]) + gb)
    new = g * text + (1.0 - g) * ctrl

    act_ref[...] = new                             # feed next layer

    @pl.when(layer == last)
    def _():
        out_ref[...] = new


# ---------------------------------------------------------------------------
# BlockSpec helpers.
# ---------------------------------------------------------------------------
def _const_spec(a):
    nd = a.ndim
    return pl.BlockSpec(a.shape, lambda l: (0,) * nd)


def _layer_spec(a):
    tail = a.shape[1:]
    nz = len(tail)
    return pl.BlockSpec((None,) + tail, lambda l: (l,) + (0,) * nz)


def _block_diag_mask(block, batch):
    """Tile an additive (Sq,Sk) mask block-diagonally over the batch; -1e9 off."""
    sq, sk = block.shape
    full = jnp.full((batch * sq, batch * sk), NEG, jnp.float32)
    for b in range(batch):
        full = full.at[b * sq:(b + 1) * sq, b * sk:(b + 1) * sk].set(block)
    return full


def decoder_forward(x, text_enc_out, control_enc_out, src_mask, tgt_mask,
                    params, num_heads):
    """Batch-first Decoder forward: one pallas_call over all layers."""
    B, S_t, E = x.shape
    S_s = text_enc_out.shape[1]
    S_c = control_enc_out.shape[1]
    num_layers = params["wqkv_sa"].shape[0]

    x2 = x.reshape(B * S_t, E).astype(jnp.float32)
    # Memories are only matmul operands -> pre-cast to bf16 and row-stack them.
    mem2 = jnp.concatenate([text_enc_out.reshape(B * S_s, E),
                            control_enc_out.reshape(B * S_c, E)],
                           axis=0).astype(BF16)

    # Batch folded into rows + branches row-stacked -> block-diagonal masks.
    sa_mask = _block_diag_mask(tgt_mask.astype(jnp.float32), B)
    txt_cross = _block_diag_mask(
        jnp.zeros((S_t, S_s), jnp.float32) if src_mask is None
        else src_mask.astype(jnp.float32), B)
    ctl_cross = _block_diag_mask(jnp.zeros((S_t, S_c), jnp.float32), B)
    ca_mask = jnp.concatenate([
        jnp.concatenate(
            [txt_cross, jnp.full((B * S_t, B * S_c), NEG, jnp.float32)], axis=1),
        jnp.concatenate(
            [jnp.full((B * S_t, B * S_s), NEG, jnp.float32), ctl_cross], axis=1),
    ], axis=0)

    per_layer = [params[k] for k in
                 ("wqkv_sa", "wo_sa", "wq_ca", "wkv_ca", "wo_ca",
                  "w1", "w2", "vecs", "l1b")]
    consts_pre = [x2, mem2, sa_mask, ca_mask]
    consts_post = [params["gate_w"]]
    inputs = consts_pre + per_layer + consts_post
    in_specs = ([_const_spec(a) for a in consts_pre]
                + [_layer_spec(a) for a in per_layer]
                + [_const_spec(a) for a in consts_post])

    out2 = pl.pallas_call(
        functools.partial(fused_decoder_kernel, num_heads),
        grid=(num_layers,),
        in_specs=in_specs,
        out_specs=_const_spec(x2),
        out_shape=jax.ShapeDtypeStruct((B * S_t, E), jnp.float32),
        scratch_shapes=[pltpu.VMEM((B * S_t, E), jnp.float32)],  # resident act
        compiler_params=pltpu.CompilerParams(
            dimension_semantics=("arbitrary",)),
    )(*inputs)
    return out2.reshape(B, S_t, E)


# ---------------------------------------------------------------------------
# Host-side parameter prep: split packed in_proj weights, transpose into
# dot-ready orientation, fuse QKV / KV / gate, fold 1/sqrt(Dh) into Q, cast
# matmul weights to bf16, pack small vectors, stack layers on a leading axis.
# ---------------------------------------------------------------------------
def prep_decoder_params(layer_params, gate_params, num_heads):
    E = layer_params[0][2].shape[0]                  # out_proj weight is (E, E)
    Dh = E // num_heads
    scale = 1.0 / float(Dh) ** 0.5
    gw, gb = gate_params

    keys = ("wqkv_sa", "wo_sa", "wq_ca", "wkv_ca", "wo_ca",
            "w1", "w2", "vecs", "l1b")
    stk = {k: [] for k in keys}
    for p in layer_params:
        (sa_w, sa_b, sa_ow, sa_ob,
         ca_w, ca_b, ca_ow, ca_ob,
         l1w, l1b, l2w, l2b,
         n1w, n1b, n2w, n2b, n3w, n3b) = p
        wq_s = sa_w[0:E].T * scale                   # scale folded into Q
        wk_s = sa_w[E:2 * E].T
        wv_s = sa_w[2 * E:3 * E].T
        wq_c = ca_w[0:E].T * scale
        wk_c = ca_w[E:2 * E].T
        wv_c = ca_w[2 * E:3 * E].T
        stk["wqkv_sa"].append(jnp.concatenate([wq_s, wk_s, wv_s], axis=1))
        stk["wo_sa"].append(sa_ow.T)
        stk["wq_ca"].append(wq_c)
        stk["wkv_ca"].append(jnp.concatenate([wk_c, wv_c], axis=1))
        stk["wo_ca"].append(ca_ow.T)
        stk["w1"].append(l1w.T)                      # (E, F)
        stk["w2"].append(l2w.T)                      # (F, E)
        stk["l1b"].append(l1b)                       # (1, F)
        stk["vecs"].append(jnp.concatenate([
            sa_b[:, 0:E] * scale, sa_b[:, E:2 * E], sa_b[:, 2 * E:3 * E], sa_ob,
            ca_b[:, 0:E] * scale, ca_b[:, E:2 * E], ca_b[:, 2 * E:3 * E], ca_ob,
            l2b, n1w, n1b, n2w, n2b, n3w, n3b, gb,
        ], axis=0))                                  # (16, E)

    params = {}
    for k in ("wqkv_sa", "wo_sa", "wq_ca", "wkv_ca", "wo_ca", "w1", "w2"):
        params[k] = jnp.stack(stk[k]).astype(BF16)
    params["vecs"] = jnp.stack(stk["vecs"]).astype(jnp.float32)
    params["l1b"] = jnp.stack(stk["l1b"]).astype(jnp.float32)
    params["gate_w"] = gw.T.astype(BF16)             # (2E, E), shared across layers
    return params


# ---------------------------------------------------------------------------
# Pure-JAX reference (per-batch, per-branch, exact softmax) for correctness.
# ---------------------------------------------------------------------------
def _ref_mha(q_in, kv_in, wq, wk, wv, wo, bq, bk, bv, bo, mask, H):
    E = q_in.shape[-1]
    Dh = E // H
    q = _mm(q_in, wq) + bq          # 1/sqrt(Dh) already folded into wq / bq
    k = _mm(kv_in, wk) + bk
    v = _mm(kv_in, wv) + bv
    ctxs = []
    for h in range(H):
        sl = slice(h * Dh, (h + 1) * Dh)
        s = _mm_nt(q[:, sl], k[:, sl])
        if mask is not None:
            s = s + mask
        p = jax.nn.softmax(s, axis=-1)
        ctxs.append(_mm(p, v[:, sl]))
    return _mm(jnp.concatenate(ctxs, axis=-1), wo) + bo


def reference_forward(x, text_enc_out, control_enc_out, src_mask, tgt_mask,
                      params, H):
    B, _, E = x.shape
    L = params["wqkv_sa"].shape[0]
    gate_w = params["gate_w"]
    out = x
    for li in range(L):
        wqkv = params["wqkv_sa"][li]
        wq_s, wk_s, wv_s = wqkv[:, 0:E], wqkv[:, E:2 * E], wqkv[:, 2 * E:3 * E]
        wo_s = params["wo_sa"][li]
        wq_c = params["wq_ca"][li]
        wkv = params["wkv_ca"][li]
        wk_c, wv_c = wkv[:, 0:E], wkv[:, E:2 * E]
        wo_c = params["wo_ca"][li]
        w1 = params["w1"][li]
        w2 = params["w2"][li]
        l1b = params["l1b"][li]
        (sa_bq, sa_bk, sa_bv, sa_bo,
         ca_bq, ca_bk, ca_bv, ca_bo,
         l2b, n1w, n1b, n2w, n2b, n3w, n3b, gb) = _rows(params["vecs"][li])

        res = []
        for b in range(B):
            xb = out[b]

            def dec_layer(mem, mem_mask):
                sa = _ref_mha(xb, xb, wq_s, wk_s, wv_s, wo_s,
                              sa_bq, sa_bk, sa_bv, sa_bo, tgt_mask, H)
                h = _layer_norm(xb + sa, n1w, n1b)
                ca = _ref_mha(h, mem, wq_c, wk_c, wv_c, wo_c,
                              ca_bq, ca_bk, ca_bv, ca_bo, mem_mask, H)
                h = _layer_norm(h + ca, n2w, n2b)
                ff = _mm(jnp.maximum(_mm(h, w1) + l1b, 0.0), w2) + l2b
                return _layer_norm(h + ff, n3w, n3b)

            ta = dec_layer(text_enc_out[b], src_mask)
            cta = dec_layer(control_enc_out[b], None)
            g = jax.nn.sigmoid(
                _mm(jnp.concatenate([ta, cta], axis=-1), gate_w) + gb)
            res.append(g * ta + (1.0 - g) * cta)
        out = jnp.stack(res, axis=0)
    return out


# ---------------------------------------------------------------------------
# Deterministic parameter init (synthetic, shapes match the torch module).
# ---------------------------------------------------------------------------
def init_decoder_params(key, embed_size, num_layers, ffn):
    E, F = embed_size, ffn

    def nrm(k, shape, scale=0.05):
        return scale * jax.random.normal(k, shape, jnp.float32)

    layers = []
    for _ in range(num_layers):
        key, *ks = jax.random.split(key, 13)
        layers.append((
            nrm(ks[0], (3 * E, E)), nrm(ks[1], (1, 3 * E)),   # self-attn in_proj
            nrm(ks[2], (E, E)), nrm(ks[3], (1, E)),           # self-attn out_proj
            nrm(ks[4], (3 * E, E)), nrm(ks[5], (1, 3 * E)),   # cross-attn in_proj
            nrm(ks[6], (E, E)), nrm(ks[7], (1, E)),           # cross-attn out_proj
            nrm(ks[8], (F, E)), nrm(ks[9], (1, F)),           # linear1
            nrm(ks[10], (E, F)), nrm(ks[11], (1, E)),         # linear2
            jnp.ones((1, E), jnp.float32), jnp.zeros((1, E), jnp.float32),  # norm1
            jnp.ones((1, E), jnp.float32), jnp.zeros((1, E), jnp.float32),  # norm2
            jnp.ones((1, E), jnp.float32), jnp.zeros((1, E), jnp.float32),  # norm3
        ))
    key, k1, k2 = jax.random.split(key, 3)
    gate = (nrm(k1, (E, 2 * E)), nrm(k2, (1, E)))             # gate Linear(2E -> E)
    return layers, gate, key


if __name__ == "__main__":
    embed_size, num_layers, heads = 32, 2, 4
    dim_feedforward = 2048          # nn.TransformerDecoderLayer default
    B, S_tgt, S_src = 2, 8, 8

    key = jax.random.PRNGKey(0)
    layer_params, gate_params, key = init_decoder_params(
        key, embed_size, num_layers, dim_feedforward)
    params = prep_decoder_params(layer_params, gate_params, heads)

    key, kx, kt, kc = jax.random.split(key, 4)
    x = jax.random.normal(kx, (B, S_tgt, embed_size), jnp.float32)
    text_enc_out = jax.random.normal(kt, (B, S_src, embed_size), jnp.float32)
    control_enc_out = jax.random.normal(kc, (B, S_src, embed_size), jnp.float32)

    # Additive float masks (PyTorch convention): causal tgt_mask, zero src_mask.
    causal = jnp.tril(jnp.ones((S_tgt, S_tgt), jnp.float32))
    tgt_mask = jnp.where(causal > 0, 0.0, NEG).astype(jnp.float32)
    src_mask = jnp.zeros((S_tgt, S_src), jnp.float32)

    out = decoder_forward(x, text_enc_out, control_enc_out, src_mask, tgt_mask,
                          params, heads)
    out = jax.block_until_ready(out)

    ref = reference_forward(x, text_enc_out, control_enc_out, src_mask,
                            tgt_mask, params, heads)
    # Tolerance covers the approx EUP reciprocal in the kernel's softmax and
    # bf16 operand rounding; both sides use identical bf16 weights + f32 accum.
    err = float(jnp.max(jnp.abs(out - ref)))
    assert err < 1e-2, f"Pallas vs reference mismatch: max abs err = {err}"

    print("KERNEL_OK")
</pallas_src>

<mosaic_0001>
module attributes {stable_mosaic.version = 11 : i64} {
  func.func @fused_decoder_kernel(%arg0: i32, %arg1: memref<16x32xf32, #tpu.memory_space<vmem>>, %arg2: memref<32x32xbf16, #tpu.memory_space<vmem>>, %arg3: memref<16x16xf32, #tpu.memory_space<vmem>>, %arg4: memref<32x32xf32, #tpu.memory_space<vmem>>, %arg5: memref<1x32x96xbf16, #tpu.memory_space<vmem>>, %arg6: memref<1x32x32xbf16, #tpu.memory_space<vmem>>, %arg7: memref<1x32x32xbf16, #tpu.memory_space<vmem>>, %arg8: memref<1x32x64xbf16, #tpu.memory_space<vmem>>, %arg9: memref<1x32x32xbf16, #tpu.memory_space<vmem>>, %arg10: memref<1x32x2048xbf16, #tpu.memory_space<vmem>>, %arg11: memref<1x2048x32xbf16, #tpu.memory_space<vmem>>, %arg12: memref<1x16x32xf32, #tpu.memory_space<vmem>>, %arg13: memref<1x1x2048xf32, #tpu.memory_space<vmem>>, %arg14: memref<64x32xbf16, #tpu.memory_space<vmem>>, %arg15: memref<16x32xf32, #tpu.memory_space<vmem>>, %arg16: memref<16x32xf32, #tpu.memory_space<vmem>>) attributes {dimension_semantics = [#tpu.dimension_semantics<arbitrary>], iteration_bounds = array<i64: 2>, scalar_prefetch = 0 : i64, scratch_operands = 1 : i64, tpu.core_type = #tpu.core_type<tc>, window_params = [{pipeline_mode = #tpu.pipeline_mode<synchronous>, transform_indices = @transform_0, window_bounds = array<i64: 16, 32>}, {pipeline_mode = #tpu.pipeline_mode<synchronous>, transform_indices = @transform_1, window_bounds = array<i64: 32, 32>}, {pipeline_mode = #tpu.pipeline_mode<synchronous>, transform_indices = @transform_2, window_bounds = array<i64: 16, 16>}, {pipeline_mode = #tpu.pipeline_mode<synchronous>, transform_indices = @transform_3, window_bounds = array<i64: 32, 32>}, {transform_indices = @transform_4, window_bounds = array<i64: 1, 32, 96>}, {transform_indices = @transform_5, window_bounds = array<i64: 1, 32, 32>}, {transform_indices = @transform_6, window_bounds = array<i64: 1, 32, 32>}, {transform_indices = @transform_7, window_bounds = array<i64: 1, 32, 64>}, {transform_indices = @transform_8, window_bounds = array<i64: 1, 32, 32>}, {transform_indices = @transform_9, window_bounds = array<i64: 1, 32, 2048>}, {transform_indices = @transform_10, window_bounds = array<i64: 1, 2048, 32>}, {transform_indices = @transform_11, window_bounds = array<i64: 1, 16, 32>}, {transform_indices = @transform_12, window_bounds = array<i64: 1, 1, 2048>}, {pipeline_mode = #tpu.pipeline_mode<synchronous>, transform_indices = @transform_13, window_bounds = array<i64: 64, 32>}, {pipeline_mode = #tpu.pipeline_mode<synchronous>, transform_indices = @transform_14, window_bounds = array<i64: 16, 32>}]} {
    %c0_i32 = arith.constant 0 : i32
    %0 = arith.cmpi eq, %arg0, %c0_i32 : i32
    %1 = arith.extui %0 : i1 to i32
    %c0_i32_0 = arith.constant 0 : i32
    %2 = arith.cmpi ne, %1, %c0_i32_0 : i32
    scf.if %2 {
      %c0_97 = arith.constant 0 : index
      %c0_98 = arith.constant 0 : index
      %336 = vector.load %arg1[%c0_97, %c0_98] : memref<16x32xf32, #tpu.memory_space<vmem>>, vector<16x32xf32>
      %c0_99 = arith.constant 0 : index
      %c0_100 = arith.constant 0 : index
      %337 = vector.load %arg16[%c0_99, %c0_100] : memref<16x32xf32, #tpu.memory_space<vmem>>, vector<16x32xf32>
      tpu.vector_store %arg16[%c0_99, %c0_100], %336 {strides = array<i32>} : memref<16x32xf32, #tpu.memory_space<vmem>>, vector<16x32xf32>,
    } else {
    }
    %c0 = arith.constant 0 : index
    %c0_1 = arith.constant 0 : index
    %3 = vector.load %arg16[%c0, %c0_1] : memref<16x32xf32, #tpu.memory_space<vmem>>, vector<16x32xf32>
    %c0_2 = arith.constant 0 : index
    %c0_3 = arith.constant 0 : index
    %4 = vector.load %arg2[%c0_2, %c0_3] : memref<32x32xbf16, #tpu.memory_space<vmem>>, vector<32x32xbf16>
    %c0_4 = arith.constant 0 : index
    %c0_5 = arith.constant 0 : index
    %5 = vector.load %arg3[%c0_4, %c0_5] : memref<16x16xf32, #tpu.memory_space<vmem>>, vector<16x16xf32>
    %c0_6 = arith.constant 0 : index
    %c0_7 = arith.constant 0 : index
    %6 = vector.load %arg4[%c0_6, %c0_7] : memref<32x32xf32, #tpu.memory_space<vmem>>, vector<32x32xf32>
    %c0_8 = arith.constant 0 : index
    %c0_9 = arith.constant 0 : index
    %c0_10 = arith.constant 0 : index
    %7 = vector.load %arg12[%c0_8, %c0_9, %c0_10] : memref<1x16x32xf32, #tpu.memory_space<vmem>>, vector<1x16x32xf32>
    %8 = vector.shape_cast %7 : vector<1x16x32xf32> to vector<16x32xf32>
    %c0_11 = arith.constant 0 : index
    %c0_12 = arith.constant 0 : index
    %c0_13 = arith.constant 0 : index
    %9 = vector.load %arg13[%c0_11, %c0_12, %c0_13] : memref<1x1x2048xf32, #tpu.memory_space<vmem>>, vector<1x1x2048xf32>
    %10 = vector.shape_cast %9 : vector<1x1x2048xf32> to vector<1x2048xf32>
    %11 = vector.extract_strided_slice %8 {offsets = [0, 0], sizes = [1, 32], strides = [1, 1]} : vector<16x32xf32> to vector<1x32xf32>
    %12 = vector.extract_strided_slice %8 {offsets = [1, 0], sizes = [1, 32], strides = [1, 1]} : vector<16x32xf32> to vector<1x32xf32>
    %13 = vector.extract_strided_slice %8 {offsets = [2, 0], sizes = [1, 32], strides = [1, 1]} : vector<16x32xf32> to vector<1x32xf32>
    %14 = vector.extract_strided_slice %8 {offsets = [3, 0], sizes = [1, 32], strides = [1, 1]} : vector<16x32xf32> to vector<1x32xf32>
    %15 = vector.extract_strided_slice %8 {offsets = [4, 0], sizes = [1, 32], strides = [1, 1]} : vector<16x32xf32> to vector<1x32xf32>
    %16 = vector.extract_strided_slice %8 {offsets = [5, 0], sizes = [1, 32], strides = [1, 1]} : vector<16x32xf32> to vector<1x32xf32>
    %17 = vector.extract_strided_slice %8 {offsets = [6, 0], sizes = [1, 32], strides = [1, 1]} : vector<16x32xf32> to vector<1x32xf32>
    %18 = vector.extract_strided_slice %8 {offsets = [7, 0], sizes = [1, 32], strides = [1, 1]} : vector<16x32xf32> to vector<1x32xf32>
    %19 = vector.extract_strided_slice %8 {offsets = [8, 0], sizes = [1, 32], strides = [1, 1]} : vector<16x32xf32> to vector<1x32xf32>
    %20 = vector.extract_strided_slice %8 {offsets = [9, 0], sizes = [1, 32], strides = [1, 1]} : vector<16x32xf32> to vector<1x32xf32>
    %21 = vector.extract_strided_slice %8 {offsets = [10, 0], sizes = [1, 32], strides = [1, 1]} : vector<16x32xf32> to vector<1x32xf32>
    %22 = vector.extract_strided_slice %8 {offsets = [11, 0], sizes = [1, 32], strides = [1, 1]} : vector<16x32xf32> to vector<1x32xf32>
    %23 = vector.extract_strided_slice %8 {offsets = [12, 0], sizes = [1, 32], strides = [1, 1]} : vector<16x32xf32> to vector<1x32xf32>
    %24 = vector.extract_strided_slice %8 {offsets = [13, 0], sizes = [1, 32], strides = [1, 1]} : vector<16x32xf32> to vector<1x32xf32>
    %25 = vector.extract_strided_slice %8 {offsets = [14, 0], sizes = [1, 32], strides = [1, 1]} : vector<16x32xf32> to vector<1x32xf32>
    %26 = vector.extract_strided_slice %8 {offsets = [15, 0], sizes = [1, 32], strides = [1, 1]} : vector<16x32xf32> to vector<1x32xf32>
    %c0_14 = arith.constant 0 : index
    %c0_15 = arith.constant 0 : index
    %c0_16 = arith.constant 0 : index
    %27 = vector.load %arg5[%c0_14, %c0_15, %c0_16] : memref<1x32x96xbf16, #tpu.memory_space<vmem>>, vector<1x32x96xbf16>
    %28 = vector.shape_cast %27 : vector<1x32x96xbf16> to vector<32x96xbf16>
    %29 = arith.truncf %3 : vector<16x32xf32> to vector<16x32xbf16>
    %cst = arith.constant dense<0.000000e+00> : vector<16x96xf32>
    %30 = tpu.matmul %29, %28, %cst {dimension_numbers = #tpu.dot_dimension_numbers<[1], [0], [0], [1], [0, 0, 1, 1], [], []>} : vector<16x32xbf16>, vector<32x96xbf16>, vector<16x96xf32> -> vector<16x96xf32>
    %31 = vector.extract_strided_slice %30 {offsets = [0, 0], sizes = [16, 32], strides = [1, 1]} : vector<16x96xf32> to vector<16x32xf32>
    %32 = vector.broadcast %11 : vector<1x32xf32> to vector<16x32xf32>
    %33 = arith.addf %31, %32 : vector<16x32xf32>
    %34 = vector.extract_strided_slice %30 {offsets = [0, 32], sizes = [16, 32], strides = [1, 1]} : vector<16x96xf32> to vector<16x32xf32>
    %35 = vector.broadcast %12 : vector<1x32xf32> to vector<16x32xf32>
    %36 = arith.addf %34, %35 : vector<16x32xf32>
    %37 = vector.extract_strided_slice %30 {offsets = [0, 64], sizes = [16, 32], strides = [1, 1]} : vector<16x96xf32> to vector<16x32xf32>
    %38 = vector.broadcast %13 : vector<1x32xf32> to vector<16x32xf32>
    %39 = arith.addf %37, %38 : vector<16x32xf32>
    %40 = vector.extract_strided_slice %33 {offsets = [0, 0], sizes = [16, 8], strides = [1, 1]} : vector<16x32xf32> to vector<16x8xf32>
    %41 = vector.extract_strided_slice %36 {offsets = [0, 0], sizes = [16, 8], strides = [1, 1]} : vector<16x32xf32> to vector<16x8xf32>
    %42 = arith.truncf %40 : vector<16x8xf32> to vector<16x8xbf16>
    %43 = arith.truncf %41 : vector<16x8xf32> to vector<16x8xbf16>
    %cst_17 = arith.constant dense<0.000000e+00> : vector<16x16xf32>
    %44 = tpu.matmul %42, %43, %cst_17 {dimension_numbers = #tpu.dot_dimension_numbers<[1], [1], [0], [0], [0, 0, 1, 0], [], []>} : vector<16x8xbf16>, vector<16x8xbf16>, vector<16x16xf32> -> vector<16x16xf32>
    %45 = arith.addf %44, %5 : vector<16x16xf32>
    %cst_18 = arith.constant dense<0xFF800000> : vector<16xf32>
    %46 = vector.multi_reduction <maximumf>, %45, %cst_18 [1] : vector<16x16xf32> to vector<16xf32>
    %47 = vector.shape_cast %46 : vector<16xf32> to vector<16x1xf32>
    %48 = vector.broadcast %47 : vector<16x1xf32> to vector<16x16xf32>
    %49 = arith.subf %45, %48 : vector<16x16xf32>
    %50 = math.exp %49 : vector<16x16xf32>
    %cst_19 = arith.constant dense<0.000000e+00> : vector<16xf32>
    %51 = vector.multi_reduction <add>, %50, %cst_19 [1] : vector<16x16xf32> to vector<16xf32>
    %52 = vector.shape_cast %51 : vector<16xf32> to vector<16x1xf32>
    %53 = tpu.reciprocal %52 {approx = true} : vector<16x1xf32> -> vector<16x1xf32>
    %54 = vector.broadcast %53 : vector<16x1xf32> to vector<16x16xf32>
    %55 = arith.mulf %50, %54 : vector<16x16xf32>
    %56 = vector.extract_strided_slice %39 {offsets = [0, 0], sizes = [16, 8], strides = [1, 1]} : vector<16x32xf32> to vector<16x8xf32>
    %57 = arith.truncf %55 : vector<16x16xf32> to vector<16x16xbf16>
    %58 = arith.truncf %56 : vector<16x8xf32> to vector<16x8xbf16>
    %cst_20 = arith.constant dense<0.000000e+00> : vector<16x8xf32>
    %59 = tpu.matmul %57, %58, %cst_20 {dimension_numbers = #tpu.dot_dimension_numbers<[1], [0], [0], [1], [0, 0, 1, 1], [], []>} : vector<16x16xbf16>, vector<16x8xbf16>, vector<16x8xf32> -> vector<16x8xf32>
    %60 = vector.extract_strided_slice %33 {offsets = [0, 8], sizes = [16, 8], strides = [1, 1]} : vector<16x32xf32> to vector<16x8xf32>
    %61 = vector.extract_strided_slice %36 {offsets = [0, 8], sizes = [16, 8], strides = [1, 1]} : vector<16x32xf32> to vector<16x8xf32>
    %62 = arith.truncf %60 : vector<16x8xf32> to vector<16x8xbf16>
    %63 = arith.truncf %61 : vector<16x8xf32> to vector<16x8xbf16>
    %cst_21 = arith.constant dense<0.000000e+00> : vector<16x16xf32>
    %64 = tpu.matmul %62, %63, %cst_21 {dimension_numbers = #tpu.dot_dimension_numbers<[1], [1], [0], [0], [0, 0, 1, 0], [], []>} : vector<16x8xbf16>, vector<16x8xbf16>, vector<16x16xf32> -> vector<16x16xf32>
    %65 = arith.addf %64, %5 : vector<16x16xf32>
    %cst_22 = arith.constant dense<0xFF800000> : vector<16xf32>
    %66 = vector.multi_reduction <maximumf>, %65, %cst_22 [1] : vector<16x16xf32> to vector<16xf32>
    %67 = vector.shape_cast %66 : vector<16xf32> to vector<16x1xf32>
    %68 = vector.broadcast %67 : vector<16x1xf32> to vector<16x16xf32>
    %69 = arith.subf %65, %68 : vector<16x16xf32>
    %70 = math.exp %69 : vector<16x16xf32>
    %cst_23 = arith.constant dense<0.000000e+00> : vector<16xf32>
    %71 = vector.multi_reduction <add>, %70, %cst_23 [1] : vector<16x16xf32> to vector<16xf32>
    %72 = vector.shape_cast %71 : vector<16xf32> to vector<16x1xf32>
    %73 = tpu.reciprocal %72 {approx = true} : vector<16x1xf32> -> vector<16x1xf32>
    %74 = vector.broadcast %73 : vector<16x1xf32> to vector<16x16xf32>
    %75 = arith.mulf %70, %74 : vector<16x16xf32>
    %76 = vector.extract_strided_slice %39 {offsets = [0, 8], sizes = [16, 8], strides = [1, 1]} : vector<16x32xf32> to vector<16x8xf32>
    %77 = arith.truncf %75 : vector<16x16xf32> to vector<16x16xbf16>
    %78 = arith.truncf %76 : vector<16x8xf32> to vector<16x8xbf16>
    %cst_24 = arith.constant dense<0.000000e+00> : vector<16x8xf32>
    %79 = tpu.matmul %77, %78, %cst_24 {dimension_numbers = #tpu.dot_dimension_numbers<[1], [0], [0], [1], [0, 0, 1, 1], [], []>} : vector<16x16xbf16>, vector<16x8xbf16>, vector<16x8xf32> -> vector<16x8xf32>
    %80 = vector.extract_strided_slice %33 {offsets = [0, 16], sizes = [16, 8], strides = [1, 1]} : vector<16x32xf32> to vector<16x8xf32>
    %81 = vector.extract_strided_slice %36 {offsets = [0, 16], sizes = [16, 8], strides = [1, 1]} : vector<16x32xf32> to vector<16x8xf32>
    %82 = arith.truncf %80 : vector<16x8xf32> to vector<16x8xbf16>
    %83 = arith.truncf %81 : vector<16x8xf32> to vector<16x8xbf16>
    %cst_25 = arith.constant dense<0.000000e+00> : vector<16x16xf32>
    %84 = tpu.matmul %82, %83, %cst_25 {dimension_numbers = #tpu.dot_dimension_numbers<[1], [1], [0], [0], [0, 0, 1, 0], [], []>} : vector<16x8xbf16>, vector<16x8xbf16>, vector<16x16xf32> -> vector<16x16xf32>
    %85 = arith.addf %84, %5 : vector<16x16xf32>
    %cst_26 = arith.constant dense<0xFF800000> : vector<16xf32>
    %86 = vector.multi_reduction <maximumf>, %85, %cst_26 [1] : vector<16x16xf32> to vector<16xf32>
    %87 = vector.shape_cast %86 : vector<16xf32> to vector<16x1xf32>
    %88 = vector.broadcast %87 : vector<16x1xf32> to vector<16x16xf32>
    %89 = arith.subf %85, %88 : vector<16x16xf32>
    %90 = math.exp %89 : vector<16x16xf32>
    %cst_27 = arith.constant dense<0.000000e+00> : vector<16xf32>
    %91 = vector.multi_reduction <add>, %90, %cst_27 [1] : vector<16x16xf32> to vector<16xf32>
    %92 = vector.shape_cast %91 : vector<16xf32> to vector<16x1xf32>
    %93 = tpu.reciprocal %92 {approx = true} : vector<16x1xf32> -> vector<16x1xf32>
    %94 = vector.broadcast %93 : vector<16x1xf32> to vector<16x16xf32>
    %95 = arith.mulf %90, %94 : vector<16x16xf32>
    %96 = vector.extract_strided_slice %39 {offsets = [0, 16], sizes = [16, 8], strides = [1, 1]} : vector<16x32xf32> to vector<16x8xf32>
    %97 = arith.truncf %95 : vector<16x16xf32> to vector<16x16xbf16>
    %98 = arith.truncf %96 : vector<16x8xf32> to vector<16x8xbf16>
    %cst_28 = arith.constant dense<0.000000e+00> : vector<16x8xf32>
    %99 = tpu.matmul %97, %98, %cst_28 {dimension_numbers = #tpu.dot_dimension_numbers<[1], [0], [0], [1], [0, 0, 1, 1], [], []>} : vector<16x16xbf16>, vector<16x8xbf16>, vector<16x8xf32> -> vector<16x8xf32>
    %100 = vector.extract_strided_slice %33 {offsets = [0, 24], sizes = [16, 8], strides = [1, 1]} : vector<16x32xf32> to vector<16x8xf32>
    %101 = vector.extract_strided_slice %36 {offsets = [0, 24], sizes = [16, 8], strides = [1, 1]} : vector<16x32xf32> to vector<16x8xf32>
    %102 = arith.truncf %100 : vector<16x8xf32> to vector<16x8xbf16>
    %103 = arith.truncf %101 : vector<16x8xf32> to vector<16x8xbf16>
    %cst_29 = arith.constant dense<0.000000e+00> : vector<16x16xf32>
    %104 = tpu.matmul %102, %103, %cst_29 {dimension_numbers = #tpu.dot_dimension_numbers<[1], [1], [0], [0], [0, 0, 1, 0], [], []>} : vector<16x8xbf16>, vector<16x8xbf16>, vector<16x16xf32> -> vector<16x16xf32>
    %105 = arith.addf %104, %5 : vector<16x16xf32>
    %cst_30 = arith.constant dense<0xFF800000> : vector<16xf32>
    %106 = vector.multi_reduction <maximumf>, %105, %cst_30 [1] : vector<16x16xf32> to vector<16xf32>
    %107 = vector.shape_cast %106 : vector<16xf32> to vector<16x1xf32>
    %108 = vector.broadcast %107 : vector<16x1xf32> to vector<16x16xf32>
    %109 = arith.subf %105, %108 : vector<16x16xf32>
    %110 = math.exp %109 : vector<16x16xf32>
    %cst_31 = arith.constant dense<0.000000e+00> : vector<16xf32>
    %111 = vector.multi_reduction <add>, %110, %cst_31 [1] : vector<16x16xf32> to vector<16xf32>
    %112 = vector.shape_cast %111 : vector<16xf32> to vector<16x1xf32>
    %113 = tpu.reciprocal %112 {approx = true} : vector<16x1xf32> -> vector<16x1xf32>
    %114 = vector.broadcast %113 : vector<16x1xf32> to vector<16x16xf32>
    %115 = arith.mulf %110, %114 : vector<16x16xf32>
    %116 = vector.extract_strided_slice %39 {offsets = [0, 24], sizes = [16, 8], strides = [1, 1]} : vector<16x32xf32> to vector<16x8xf32>
    %117 = arith.truncf %115 : vector<16x16xf32> to vector<16x16xbf16>
    %118 = arith.truncf %116 : vector<16x8xf32> to vector<16x8xbf16>
    %cst_32 = arith.constant dense<0.000000e+00> : vector<16x8xf32>
    %119 = tpu.matmul %117, %118, %cst_32 {dimension_numbers = #tpu.dot_dimension_numbers<[1], [0], [0], [1], [0, 0, 1, 1], [], []>} : vector<16x16xbf16>, vector<16x8xbf16>, vector<16x8xf32> -> vector<16x8xf32>
    %120 = tpu.concatenate %59, %79, %99, %119 in 1 : vector<16x8xf32>, vector<16x8xf32>, vector<16x8xf32>, vector<16x8xf32> -> vector<16x32xf32>
    %c0_33 = arith.constant 0 : index
    %c0_34 = arith.constant 0 : index
    %c0_35 = arith.constant 0 : index
    %121 = vector.load %arg6[%c0_33, %c0_34, %c0_35] : memref<1x32x32xbf16, #tpu.memory_space<vmem>>, vector<1x32x32xbf16>
    %122 = vector.shape_cast %121 : vector<1x32x32xbf16> to vector<32x32xbf16>
    %123 = arith.truncf %120 : vector<16x32xf32> to vector<16x32xbf16>
    %cst_36 = arith.constant dense<0.000000e+00> : vector<16x32xf32>
    %124 = tpu.matmul %123, %122, %cst_36 {dimension_numbers = #tpu.dot_dimension_numbers<[1], [0], [0], [1], [0, 0, 1, 1], [], []>} : vector<16x32xbf16>, vector<32x32xbf16>, vector<16x32xf32> -> vector<16x32xf32>
    %125 = vector.broadcast %14 : vector<1x32xf32> to vector<16x32xf32>
    %126 = arith.addf %124, %125 : vector<16x32xf32>
    %127 = arith.addf %3, %126 : vector<16x32xf32>
    %cst_37 = arith.constant dense<0.000000e+00> : vector<16xf32>
    %128 = vector.multi_reduction <add>, %127, %cst_37 [1] : vector<16x32xf32> to vector<16xf32>
    %129 = vector.shape_cast %128 : vector<16xf32> to vector<16x1xf32>
    %cst_38 = arith.constant 3.200000e+01 : f32
    %130 = vector.broadcast %cst_38 : f32 to vector<16x1xf32>
    %131 = arith.divf %129, %130 : vector<16x1xf32>
    %132 = vector.broadcast %131 : vector<16x1xf32> to vector<16x32xf32>
    %133 = arith.subf %127, %132 : vector<16x32xf32>
    %134 = arith.mulf %133, %133 : vector<16x32xf32>
    %cst_39 = arith.constant dense<0.000000e+00> : vector<16xf32>
    %135 = vector.multi_reduction <add>, %134, %cst_39 [1] : vector<16x32xf32> to vector<16xf32>
    %136 = vector.shape_cast %135 : vector<16xf32> to vector<16x1xf32>
    %cst_40 = arith.constant 3.200000e+01 : f32
    %137 = vector.broadcast %cst_40 : f32 to vector<16x1xf32>
    %138 = arith.divf %136, %137 : vector<16x1xf32>
    %139 = vector.broadcast %131 : vector<16x1xf32> to vector<16x32xf32>
    %140 = arith.subf %127, %139 : vector<16x32xf32>
    %cst_41 = arith.constant 9.99999974E-6 : f32
    %141 = vector.broadcast %cst_41 : f32 to vector<16x1xf32>
    %142 = arith.addf %138, %141 : vector<16x1xf32>
    %143 = math.rsqrt %142 : vector<16x1xf32>
    %144 = vector.broadcast %143 : vector<16x1xf32> to vector<16x32xf32>
    %145 = arith.mulf %140, %144 : vector<16x32xf32>
    %146 = vector.broadcast %20 : vector<1x32xf32> to vector<16x32xf32>
    %147 = arith.mulf %145, %146 : vector<16x32xf32>
    %148 = vector.broadcast %21 : vector<1x32xf32> to vector<16x32xf32>
    %149 = arith.addf %147, %148 : vector<16x32xf32>
    %c0_42 = arith.constant 0 : index
    %c0_43 = arith.constant 0 : index
    %c0_44 = arith.constant 0 : index
    %150 = vector.load %arg7[%c0_42, %c0_43, %c0_44] : memref<1x32x32xbf16, #tpu.memory_space<vmem>>, vector<1x32x32xbf16>
    %151 = vector.shape_cast %150 : vector<1x32x32xbf16> to vector<32x32xbf16>
    %152 = arith.truncf %149 : vector<16x32xf32> to vector<16x32xbf16>
    %cst_45 = arith.constant dense<0.000000e+00> : vector<16x32xf32>
    %153 = tpu.matmul %152, %151, %cst_45 {dimension_numbers = #tpu.dot_dimension_numbers<[1], [0], [0], [1], [0, 0, 1, 1], [], []>} : vector<16x32xbf16>, vector<32x32xbf16>, vector<16x32xf32> -> vector<16x32xf32>
    %154 = vector.broadcast %15 : vector<1x32xf32> to vector<16x32xf32>
    %155 = arith.addf %153, %154 : vector<16x32xf32>
    %156 = tpu.concatenate %155, %155 in 0 : vector<16x32xf32>, vector<16x32xf32> -> vector<32x32xf32>
    %c0_46 = arith.constant 0 : index
    %c0_47 = arith.constant 0 : index
    %c0_48 = arith.constant 0 : index
    %157 = vector.load %arg8[%c0_46, %c0_47, %c0_48] : memref<1x32x64xbf16, #tpu.memory_space<vmem>>, vector<1x32x64xbf16>
    %158 = vector.shape_cast %157 : vector<1x32x64xbf16> to vector<32x64xbf16>
    %cst_49 = arith.constant dense<0.000000e+00> : vector<32x64xf32>
    %159 = tpu.matmul %4, %158, %cst_49 {dimension_numbers = #tpu.dot_dimension_numbers<[1], [0], [0], [1], [0, 0, 1, 1], [], []>} : vector<32x32xbf16>, vector<32x64xbf16>, vector<32x64xf32> -> vector<32x64xf32>
    %160 = vector.extract_strided_slice %159 {offsets = [0, 0], sizes = [32, 32], strides = [1, 1]} : vector<32x64xf32> to vector<32x32xf32>
    %161 = vector.broadcast %16 : vector<1x32xf32> to vector<32x32xf32>
    %162 = arith.addf %160, %161 : vector<32x32xf32>
    %163 = vector.extract_strided_slice %159 {offsets = [0, 32], sizes = [32, 32], strides = [1, 1]} : vector<32x64xf32> to vector<32x32xf32>
    %164 = vector.broadcast %17 : vector<1x32xf32> to vector<32x32xf32>
    %165 = arith.addf %163, %164 : vector<32x32xf32>
    %166 = vector.extract_strided_slice %156 {offsets = [0, 0], sizes = [32, 8], strides = [1, 1]} : vector<32x32xf32> to vector<32x8xf32>
    %167 = vector.extract_strided_slice %162 {offsets = [0, 0], sizes = [32, 8], strides = [1, 1]} : vector<32x32xf32> to vector<32x8xf32>
    %168 = arith.truncf %166 : vector<32x8xf32> to vector<32x8xbf16>
    %169 = arith.truncf %167 : vector<32x8xf32> to vector<32x8xbf16>
    %cst_50 = arith.constant dense<0.000000e+00> : vector<32x32xf32>
    %170 = tpu.matmul %168, %169, %cst_50 {dimension_numbers = #tpu.dot_dimension_numbers<[1], [1], [0], [0], [0, 0, 1, 0], [], []>} : vector<32x8xbf16>, vector<32x8xbf16>, vector<32x32xf32> -> vector<32x32xf32>
    %171 = arith.addf %170, %6 : vector<32x32xf32>
    %cst_51 = arith.constant dense<0xFF800000> : vector<32xf32>
    %172 = vector.multi_reduction <maximumf>, %171, %cst_51 [1] : vector<32x32xf32> to vector<32xf32>
    %173 = vector.shape_cast %172 : vector<32xf32> to vector<32x1xf32>
    %174 = vector.broadcast %173 : vector<32x1xf32> to vector<32x32xf32>
    %175 = arith.subf %171, %174 : vector<32x32xf32>
    %176 = math.exp %175 : vector<32x32xf32>
    %cst_52 = arith.constant dense<0.000000e+00> : vector<32xf32>
    %177 = vector.multi_reduction <add>, %176, %cst_52 [1] : vector<32x32xf32> to vector<32xf32>
    %178 = vector.shape_cast %177 : vector<32xf32> to vector<32x1xf32>
    %179 = tpu.reciprocal %178 {approx = true} : vector<32x1xf32> -> vector<32x1xf32>
    %180 = vector.broadcast %179 : vector<32x1xf32> to vector<32x32xf32>
    %181 = arith.mulf %176, %180 : vector<32x32xf32>
    %182 = vector.extract_strided_slice %165 {offsets = [0, 0], sizes = [32, 8], strides = [1, 1]} : vector<32x32xf32> to vector<32x8xf32>
    %183 = arith.truncf %181 : vector<32x32xf32> to vector<32x32xbf16>
    %184 = arith.truncf %182 : vector<32x8xf32> to vector<32x8xbf16>
    %cst_53 = arith.constant dense<0.000000e+00> : vector<32x8xf32>
    %185 = tpu.matmul %183, %184, %cst_53 {dimension_numbers = #tpu.dot_dimension_numbers<[1], [0], [0], [1], [0, 0, 1, 1], [], []>} : vector<32x32xbf16>, vector<32x8xbf16>, vector<32x8xf32> -> vector<32x8xf32>
    %186 = vector.extract_strided_slice %156 {offsets = [0, 8], sizes = [32, 8], strides = [1, 1]} : vector<32x32xf32> to vector<32x8xf32>
    %187 = vector.extract_strided_slice %162 {offsets = [0, 8], sizes = [32, 8], strides = [1, 1]} : vector<32x32xf32> to vector<32x8xf32>
    %188 = arith.truncf %186 : vector<32x8xf32> to vector<32x8xbf16>
    %189 = arith.truncf %187 : vector<32x8xf32> to vector<32x8xbf16>
    %cst_54 = arith.constant dense<0.000000e+00> : vector<32x32xf32>
    %190 = tpu.matmul %188, %189, %cst_54 {dimension_numbers = #tpu.dot_dimension_numbers<[1], [1], [0], [0], [0, 0, 1, 0], [], []>} : vector<32x8xbf16>, vector<32x8xbf16>, vector<32x32xf32> -> vector<32x32xf32>
    %191 = arith.addf %190, %6 : vector<32x32xf32>
    %cst_55 = arith.constant dense<0xFF800000> : vector<32xf32>
    %192 = vector.multi_reduction <maximumf>, %191, %cst_55 [1] : vector<32x32xf32> to vector<32xf32>
    %193 = vector.shape_cast %192 : vector<32xf32> to vector<32x1xf32>
    %194 = vector.broadcast %193 : vector<32x1xf32> to vector<32x32xf32>
    %195 = arith.subf %191, %194 : vector<32x32xf32>
    %196 = math.exp %195 : vector<32x32xf32>
    %cst_56 = arith.constant dense<0.000000e+00> : vector<32xf32>
    %197 = vector.multi_reduction <add>, %196, %cst_56 [1] : vector<32x32xf32> to vector<32xf32>
    %198 = vector.shape_cast %197 : vector<32xf32> to vector<32x1xf32>
    %199 = tpu.reciprocal %198 {approx = true} : vector<32x1xf32> -> vector<32x1xf32>
    %200 = vector.broadcast %199 : vector<32x1xf32> to vector<32x32xf32>
    %201 = arith.mulf %196, %200 : vector<32x32xf32>
    %202 = vector.extract_strided_slice %165 {offsets = [0, 8], sizes = [32, 8], strides = [1, 1]} : vector<32x32xf32> to vector<32x8xf32>
    %203 = arith.truncf %201 : vector<32x32xf32> to vector<32x32xbf16>
    %204 = arith.truncf %202 : vector<32x8xf32> to vector<32x8xbf16>
    %cst_57 = arith.constant dense<0.000000e+00> : vector<32x8xf32>
    %205 = tpu.matmul %203, %204, %cst_57 {dimension_numbers = #tpu.dot_dimension_numbers<[1], [0], [0], [1], [0, 0, 1, 1], [], []>} : vector<32x32xbf16>, vector<32x8xbf16>, vector<32x8xf32> -> vector<32x8xf32>
    %206 = vector.extract_strided_slice %156 {offsets = [0, 16], sizes = [32, 8], strides = [1, 1]} : vector<32x32xf32> to vector<32x8xf32>
    %207 = vector.extract_strided_slice %162 {offsets = [0, 16], sizes = [32, 8], strides = [1, 1]} : vector<32x32xf32> to vector<32x8xf32>
    %208 = arith.truncf %206 : vector<32x8xf32> to vector<32x8xbf16>
    %209 = arith.truncf %207 : vector<32x8xf32> to vector<32x8xbf16>
    %cst_58 = arith.constant dense<0.000000e+00> : vector<32x32xf32>
    %210 = tpu.matmul %208, %209, %cst_58 {dimension_numbers = #tpu.dot_dimension_numbers<[1], [1], [0], [0], [0, 0, 1, 0], [], []>} : vector<32x8xbf16>, vector<32x8xbf16>, vector<32x32xf32> -> vector<32x32xf32>
    %211 = arith.addf %210, %6 : vector<32x32xf32>
    %cst_59 = arith.constant dense<0xFF800000> : vector<32xf32>
    %212 = vector.multi_reduction <maximumf>, %211, %cst_59 [1] : vector<32x32xf32> to vector<32xf32>
    %213 = vector.shape_cast %212 : vector<32xf32> to vector<32x1xf32>
    %214 = vector.broadcast %213 : vector<32x1xf32> to vector<32x32xf32>
    %215 = arith.subf %211, %214 : vector<32x32xf32>
    %216 = math.exp %215 : vector<32x32xf32>
    %cst_60 = arith.constant dense<0.000000e+00> : vector<32xf32>
    %217 = vector.multi_reduction <add>, %216, %cst_60 [1] : vector<32x32xf32> to vector<32xf32>
    %218 = vector.shape_cast %217 : vector<32xf32> to vector<32x1xf32>
    %219 = tpu.reciprocal %218 {approx = true} : vector<32x1xf32> -> vector<32x1xf32>
    %220 = vector.broadcast %219 : vector<32x1xf32> to vector<32x32xf32>
    %221 = arith.mulf %216, %220 : vector<32x32xf32>
    %222 = vector.extract_strided_slice %165 {offsets = [0, 16], sizes = [32, 8], strides = [1, 1]} : vector<32x32xf32> to vector<32x8xf32>
    %223 = arith.truncf %221 : vector<32x32xf32> to vector<32x32xbf16>
    %224 = arith.truncf %222 : vector<32x8xf32> to vector<32x8xbf16>
    %cst_61 = arith.constant dense<0.000000e+00> : vector<32x8xf32>
    %225 = tpu.matmul %223, %224, %cst_61 {dimension_numbers = #tpu.dot_dimension_numbers<[1], [0], [0], [1], [0, 0, 1, 1], [], []>} : vector<32x32xbf16>, vector<32x8xbf16>, vector<32x8xf32> -> vector<32x8xf32>
    %226 = vector.extract_strided_slice %156 {offsets = [0, 24], sizes = [32, 8], strides = [1, 1]} : vector<32x32xf32> to vector<32x8xf32>
    %227 = vector.extract_strided_slice %162 {offsets = [0, 24], sizes = [32, 8], strides = [1, 1]} : vector<32x32xf32> to vector<32x8xf32>
    %228 = arith.truncf %226 : vector<32x8xf32> to vector<32x8xbf16>
    %229 = arith.truncf %227 : vector<32x8xf32> to vector<32x8xbf16>
    %cst_62 = arith.constant dense<0.000000e+00> : vector<32x32xf32>
    %230 = tpu.matmul %228, %229, %cst_62 {dimension_numbers = #tpu.dot_dimension_numbers<[1], [1], [0], [0], [0, 0, 1, 0], [], []>} : vector<32x8xbf16>, vector<32x8xbf16>, vector<32x32xf32> -> vector<32x32xf32>
    %231 = arith.addf %230, %6 : vector<32x32xf32>
    %cst_63 = arith.constant dense<0xFF800000> : vector<32xf32>
    %232 = vector.multi_reduction <maximumf>, %231, %cst_63 [1] : vector<32x32xf32> to vector<32xf32>
    %233 = vector.shape_cast %232 : vector<32xf32> to vector<32x1xf32>
    %234 = vector.broadcast %233 : vector<32x1xf32> to vector<32x32xf32>
    %235 = arith.subf %231, %234 : vector<32x32xf32>
    %236 = math.exp %235 : vector<32x32xf32>
    %cst_64 = arith.constant dense<0.000000e+00> : vector<32xf32>
    %237 = vector.multi_reduction <add>, %236, %cst_64 [1] : vector<32x32xf32> to vector<32xf32>
    %238 = vector.shape_cast %237 : vector<32xf32> to vector<32x1xf32>
    %239 = tpu.reciprocal %238 {approx = true} : vector<32x1xf32> -> vector<32x1xf32>
    %240 = vector.broadcast %239 : vector<32x1xf32> to vector<32x32xf32>
    %241 = arith.mulf %236, %240 : vector<32x32xf32>
    %242 = vector.extract_strided_slice %165 {offsets = [0, 24], sizes = [32, 8], strides = [1, 1]} : vector<32x32xf32> to vector<32x8xf32>
    %243 = arith.truncf %241 : vector<32x32xf32> to vector<32x32xbf16>
    %244 = arith.truncf %242 : vector<32x8xf32> to vector<32x8xbf16>
    %cst_65 = arith.constant dense<0.000000e+00> : vector<32x8xf32>
    %245 = tpu.matmul %243, %244, %cst_65 {dimension_numbers = #tpu.dot_dimension_numbers<[1], [0], [0], [1], [0, 0, 1, 1], [], []>} : vector<32x32xbf16>, vector<32x8xbf16>, vector<32x8xf32> -> vector<32x8xf32>
    %246 = tpu.concatenate %185, %205, %225, %245 in 1 : vector<32x8xf32>, vector<32x8xf32>, vector<32x8xf32>, vector<32x8xf32> -> vector<32x32xf32>
    %c0_66 = arith.constant 0 : index
    %c0_67 = arith.constant 0 : index
    %c0_68 = arith.constant 0 : index
    %247 = vector.load %arg9[%c0_66, %c0_67, %c0_68] : memref<1x32x32xbf16, #tpu.memory_space<vmem>>, vector<1x32x32xbf16>
    %248 = vector.shape_cast %247 : vector<1x32x32xbf16> to vector<32x32xbf16>
    %249 = arith.truncf %246 : vector<32x32xf32> to vector<32x32xbf16>
    %cst_69 = arith.constant dense<0.000000e+00> : vector<32x32xf32>
    %250 = tpu.matmul %249, %248, %cst_69 {dimension_numbers = #tpu.dot_dimension_numbers<[1], [0], [0], [1], [0, 0, 1, 1], [], []>} : vector<32x32xbf16>, vector<32x32xbf16>, vector<32x32xf32> -> vector<32x32xf32>
    %251 = vector.broadcast %18 : vector<1x32xf32> to vector<32x32xf32>
    %252 = arith.addf %250, %251 : vector<32x32xf32>
    %253 = tpu.concatenate %149, %149 in 0 : vector<16x32xf32>, vector<16x32xf32> -> vector<32x32xf32>
    %254 = arith.addf %253, %252 : vector<32x32xf32>
    %cst_70 = arith.constant dense<0.000000e+00> : vector<32xf32>
    %255 = vector.multi_reduction <add>, %254, %cst_70 [1] : vector<32x32xf32> to vector<32xf32>
    %256 = vector.shape_cast %255 : vector<32xf32> to vector<32x1xf32>
    %cst_71 = arith.constant 3.200000e+01 : f32
    %257 = vector.broadcast %cst_71 : f32 to vector<32x1xf32>
    %258 = arith.divf %256, %257 : vector<32x1xf32>
    %259 = vector.broadcast %258 : vector<32x1xf32> to vector<32x32xf32>
    %260 = arith.subf %254, %259 : vector<32x32xf32>
    %261 = arith.mulf %260, %260 : vector<32x32xf32>
    %cst_72 = arith.constant dense<0.000000e+00> : vector<32xf32>
    %262 = vector.multi_reduction <add>, %261, %cst_72 [1] : vector<32x32xf32> to vector<32xf32>
    %263 = vector.shape_cast %262 : vector<32xf32> to vector<32x1xf32>
    %cst_73 = arith.constant 3.200000e+01 : f32
    %264 = vector.broadcast %cst_73 : f32 to vector<32x1xf32>
    %265 = arith.divf %263, %264 : vector<32x1xf32>
    %266 = vector.broadcast %258 : vector<32x1xf32> to vector<32x32xf32>
    %267 = arith.subf %254, %266 : vector<32x32xf32>
    %cst_74 = arith.constant 9.99999974E-6 : f32
    %268 = vector.broadcast %cst_74 : f32 to vector<32x1xf32>
    %269 = arith.addf %265, %268 : vector<32x1xf32>
    %270 = math.rsqrt %269 : vector<32x1xf32>
    %271 = vector.broadcast %270 : vector<32x1xf32> to vector<32x32xf32>
    %272 = arith.mulf %267, %271 : vector<32x32xf32>
    %273 = vector.broadcast %22 : vector<1x32xf32> to vector<32x32xf32>
    %274 = arith.mulf %272, %273 : vector<32x32xf32>
    %275 = vector.broadcast %23 : vector<1x32xf32> to vector<32x32xf32>
    %276 = arith.addf %274, %275 : vector<32x32xf32>
    %c0_75 = arith.constant 0 : index
    %c0_76 = arith.constant 0 : index
    %c0_77 = arith.constant 0 : index
    %277 = vector.load %arg10[%c0_75, %c0_76, %c0_77] : memref<1x32x2048xbf16, #tpu.memory_space<vmem>>, vector<1x32x2048xbf16>
    %278 = vector.shape_cast %277 : vector<1x32x2048xbf16> to vector<32x2048xbf16>
    %279 = arith.truncf %276 : vector<32x32xf32> to vector<32x32xbf16>
    %cst_78 = arith.constant dense<0.000000e+00> : vector<32x2048xf32>
    %280 = tpu.matmul %279, %278, %cst_78 {dimension_numbers = #tpu.dot_dimension_numbers<[1], [0], [0], [1], [0, 0, 1, 1], [], []>} : vector<32x32xbf16>, vector<32x2048xbf16>, vector<32x2048xf32> -> vector<32x2048xf32>
    %281 = vector.broadcast %10 : vector<1x2048xf32> to vector<32x2048xf32>
    %282 = arith.addf %280, %281 : vector<32x2048xf32>
    %cst_79 = arith.constant 0.000000e+00 : f32
    %283 = vector.broadcast %cst_79 : f32 to vector<32x2048xf32>
    %284 = arith.maximumf %282, %283 : vector<32x2048xf32>
    %c0_80 = arith.constant 0 : index
    %c0_81 = arith.constant 0 : index
    %c0_82 = arith.constant 0 : index
    %285 = vector.load %arg11[%c0_80, %c0_81, %c0_82] : memref<1x2048x32xbf16, #tpu.memory_space<vmem>>, vector<1x2048x32xbf16>
    %286 = vector.shape_cast %285 : vector<1x2048x32xbf16> to vector<2048x32xbf16>
    %287 = arith.truncf %284 : vector<32x2048xf32> to vector<32x2048xbf16>
    %cst_83 = arith.constant dense<0.000000e+00> : vector<32x32xf32>
    %288 = tpu.matmul %287, %286, %cst_83 {dimension_numbers = #tpu.dot_dimension_numbers<[1], [0], [0], [1], [0, 0, 1, 1], [], []>} : vector<32x2048xbf16>, vector<2048x32xbf16>, vector<32x32xf32> -> vector<32x32xf32>
    %289 = vector.broadcast %19 : vector<1x32xf32> to vector<32x32xf32>
    %290 = arith.addf %288, %289 : vector<32x32xf32>
    %291 = arith.addf %276, %290 : vector<32x32xf32>
    %cst_84 = arith.constant dense<0.000000e+00> : vector<32xf32>
    %292 = vector.multi_reduction <add>, %291, %cst_84 [1] : vector<32x32xf32> to vector<32xf32>
    %293 = vector.shape_cast %292 : vector<32xf32> to vector<32x1xf32>
    %cst_85 = arith.constant 3.200000e+01 : f32
    %294 = vector.broadcast %cst_85 : f32 to vector<32x1xf32>
    %295 = arith.divf %293, %294 : vector<32x1xf32>
    %296 = vector.broadcast %295 : vector<32x1xf32> to vector<32x32xf32>
    %297 = arith.subf %291, %296 : vector<32x32xf32>
    %298 = arith.mulf %297, %297 : vector<32x32xf32>
    %cst_86 = arith.constant dense<0.000000e+00> : vector<32xf32>
    %299 = vector.multi_reduction <add>, %298, %cst_86 [1] : vector<32x32xf32> to vector<32xf32>
    %300 = vector.shape_cast %299 : vector<32xf32> to vector<32x1xf32>
    %cst_87 = arith.constant 3.200000e+01 : f32
    %301 = vector.broadcast %cst_87 : f32 to vector<32x1xf32>
    %302 = arith.divf %300, %301 : vector<32x1xf32>
    %303 = vector.broadcast %295 : vector<32x1xf32> to vector<32x32xf32>
    %304 = arith.subf %291, %303 : vector<32x32xf32>
    %cst_88 = arith.constant 9.99999974E-6 : f32
    %305 = vector.broadcast %cst_88 : f32 to vector<32x1xf32>
    %306 = arith.addf %302, %305 : vector<32x1xf32>
    %307 = math.rsqrt %306 : vector<32x1xf32>
    %308 = vector.broadcast %307 : vector<32x1xf32> to vector<32x32xf32>
    %309 = arith.mulf %304, %308 : vector<32x32xf32>
    %310 = vector.broadcast %24 : vector<1x32xf32> to vector<32x32xf32>
    %311 = arith.mulf %309, %310 : vector<32x32xf32>
    %312 = vector.broadcast %25 : vector<1x32xf32> to vector<32x32xf32>
    %313 = arith.addf %311, %312 : vector<32x32xf32>
    %314 = vector.extract_strided_slice %313 {offsets = [0, 0], sizes = [16, 32], strides = [1, 1]} : vector<32x32xf32> to vector<16x32xf32>
    %315 = vector.extract_strided_slice %313 {offsets = [16, 0], sizes = [16, 32], strides = [1, 1]} : vector<32x32xf32> to vector<16x32xf32>
    %316 = tpu.concatenate %314, %315 in 1 : vector<16x32xf32>, vector<16x32xf32> -> vector<16x64xf32>
    %c0_89 = arith.constant 0 : index
    %c0_90 = arith.constant 0 : index
    %317 = vector.load %arg14[%c0_89, %c0_90] : memref<64x32xbf16, #tpu.memory_space<vmem>>, vector<64x32xbf16>
    %318 = arith.truncf %316 : vector<16x64xf32> to vector<16x64xbf16>
    %cst_91 = arith.constant dense<0.000000e+00> : vector<16x32xf32>
    %319 = tpu.matmul %318, %317, %cst_91 {dimension_numbers = #tpu.dot_dimension_numbers<[1], [0], [0], [1], [0, 0, 1, 1], [], []>} : vector<16x64xbf16>, vector<64x32xbf16>, vector<16x32xf32> -> vector<16x32xf32>
    %320 = vector.broadcast %26 : vector<1x32xf32> to vector<16x32xf32>
    %321 = arith.addf %319, %320 : vector<16x32xf32>
    %322 = arith.negf %321 : vector<16x32xf32>
    %323 = math.exp %322 : vector<16x32xf32>
    %cst_92 = arith.constant 1.000000e+00 : f32
    %324 = vector.broadcast %cst_92 : f32 to vector<16x32xf32>
    %325 = arith.addf %324, %323 : vector<16x32xf32>
    %326 = arith.divf %324, %325 : vector<16x32xf32>
    %327 = arith.mulf %326, %314 : vector<16x32xf32>
    %cst_93 = arith.constant 1.000000e+00 : f32
    %328 = vector.broadcast %cst_93 : f32 to vector<16x32xf32>
    %329 = arith.subf %328, %326 : vector<16x32xf32>
    %330 = arith.mulf %329, %315 : vector<16x32xf32>
    %331 = arith.addf %327, %330 : vector<16x32xf32>
    %c0_94 = arith.constant 0 : index
    %c0_95 = arith.constant 0 : index
    %332 = vector.load %arg16[%c0_94, %c0_95] : memref<16x32xf32, #tpu.memory_space<vmem>>, vector<16x32xf32>
    tpu.vector_store %arg16[%c0_94, %c0_95], %331 {strides = array<i32>} : memref<16x32xf32, #tpu.memory_space<vmem>>, vector<16x32xf32>,
    %c1_i32 = arith.constant 1 : i32
    %333 = arith.cmpi eq, %arg0, %c1_i32 : i32
    %334 = arith.extui %333 : i1 to i32
    %c0_i32_96 = arith.constant 0 : i32
    %335 = arith.cmpi ne, %334, %c0_i32_96 : i32
    scf.if %335 {
      %c0_97 = arith.constant 0 : index
      %c0_98 = arith.constant 0 : index
      %336 = vector.load %arg15[%c0_97, %c0_98] : memref<16x32xf32, #tpu.memory_space<vmem>>, vector<16x32xf32>
      tpu.vector_store %arg15[%c0_97, %c0_98], %331 {strides = array<i32>} : memref<16x32xf32, #tpu.memory_space<vmem>>, vector<16x32xf32>,
    } else {
    }
    return
  }
  func.func @transform_0(%arg0: i32) -> (i32, i32) {
    %c0_i32 = arith.constant 0 : i32
    %c0_i32_0 = arith.constant 0 : i32
    %c0_i32_1 = arith.constant 0 : i32
    return %c0_i32, %c0_i32_0 : i32, i32
  }
  func.func @transform_1(%arg0: i32) -> (i32, i32) {
    %c0_i32 = arith.constant 0 : i32
    %c0_i32_0 = arith.constant 0 : i32
    %c0_i32_1 = arith.constant 0 : i32
    return %c0_i32, %c0_i32_0 : i32, i32
  }
  func.func @transform_2(%arg0: i32) -> (i32, i32) {
    %c0_i32 = arith.constant 0 : i32
    %c0_i32_0 = arith.constant 0 : i32
    %c0_i32_1 = arith.constant 0 : i32
    return %c0_i32, %c0_i32_0 : i32, i32
  }
  func.func @transform_3(%arg0: i32) -> (i32, i32) {
    %c0_i32 = arith.constant 0 : i32
    %c0_i32_0 = arith.constant 0 : i32
    %c0_i32_1 = arith.constant 0 : i32
    return %c0_i32, %c0_i32_0 : i32, i32
  }
  func.func @transform_4(%arg0: i32) -> (i32, i32, i32) {
    %c0_i32 = arith.constant 0 : i32
    %c0_i32_0 = arith.constant 0 : i32
    %c0_i32_1 = arith.constant 0 : i32
    return %arg0, %c0_i32, %c0_i32_0 : i32, i32, i32
  }
  func.func @transform_5(%arg0: i32) -> (i32, i32, i32) {
    %c0_i32 = arith.constant 0 : i32
    %c0_i32_0 = arith.constant 0 : i32
    %c0_i32_1 = arith.constant 0 : i32
    return %arg0, %c0_i32, %c0_i32_0 : i32, i32, i32
  }
  func.func @transform_6(%arg0: i32) -> (i32, i32, i32) {
    %c0_i32 = arith.constant 0 : i32
    %c0_i32_0 = arith.constant 0 : i32
    %c0_i32_1 = arith.constant 0 : i32
    return %arg0, %c0_i32, %c0_i32_0 : i32, i32, i32
  }
  func.func @transform_7(%arg0: i32) -> (i32, i32, i32) {
    %c0_i32 = arith.constant 0 : i32
    %c0_i32_0 = arith.constant 0 : i32
    %c0_i32_1 = arith.constant 0 : i32
    return %arg0, %c0_i32, %c0_i32_0 : i32, i32, i32
  }
  func.func @transform_8(%arg0: i32) -> (i32, i32, i32) {
    %c0_i32 = arith.constant 0 : i32
    %c0_i32_0 = arith.constant 0 : i32
    %c0_i32_1 = arith.constant 0 : i32
    return %arg0, %c0_i32, %c0_i32_0 : i32, i32, i32
  }
  func.func @transform_9(%arg0: i32) -> (i32, i32, i32) {
    %c0_i32 = arith.constant 0 : i32
    %c0_i32_0 = arith.constant 0 : i32
    %c0_i32_1 = arith.constant 0 : i32
    return %arg0, %c0_i32, %c0_i32_0 : i32, i32, i32
  }
  func.func @transform_10(%arg0: i32) -> (i32, i32, i32) {
    %c0_i32 = arith.constant 0 : i32
    %c0_i32_0 = arith.constant 0 : i32
    %c0_i32_1 = arith.constant 0 : i32
    return %arg0, %c0_i32, %c0_i32_0 : i32, i32, i32
  }
  func.func @transform_11(%arg0: i32) -> (i32, i32, i32) {
    %c0_i32 = arith.constant 0 : i32
    %c0_i32_0 = arith.constant 0 : i32
    %c0_i32_1 = arith.constant 0 : i32
    return %arg0, %c0_i32, %c0_i32_0 : i32, i32, i32
  }
  func.func @transform_12(%arg0: i32) -> (i32, i32, i32) {
    %c0_i32 = arith.constant 0 : i32
    %c0_i32_0 = arith.constant 0 : i32
    %c0_i32_1 = arith.constant 0 : i32
    return %arg0, %c0_i32, %c0_i32_0 : i32, i32, i32
  }
  func.func @transform_13(%arg0: i32) -> (i32, i32) {
    %c0_i32 = arith.constant 0 : i32
    %c0_i32_0 = arith.constant 0 : i32
    %c0_i32_1 = arith.constant 0 : i32
    return %c0_i32, %c0_i32_0 : i32, i32
  }
  func.func @transform_14(%arg0: i32) -> (i32, i32) {
    %c0_i32 = arith.constant 0 : i32
    %c0_i32_0 = arith.constant 0 : i32
    %c0_i32_1 = arith.constant 0 : i32
    return %c0_i32, %c0_i32_0 : i32, i32
  }
}

</mosaic_0001>

<llo_original>
// kernel: tpu_custom_call.1
$region0: #{tpu_custom_call.1}
  #allocation0 [shape = 'u32[]', space=smem, size = 0x4, offset = 0x4, fixed_abs, tag = 'smem constant byte address 0x4 - core index']
  #allocation1 [shape = 'u32[144,128]{1,0:T(1,128)}', space=vmem, size = 0x12000, scoped, tag = 'internal scratch']
  #allocation2 [shape = 'f32[16,32]{1,0:T(8,128)}', space=vmem, size = 0x2000, scoped, tag = 'scratch operand']
  %s0 = inlined_call_operand.vmem [shape: f32[16,32], index: 0, kind: input, shape index: {}]
  %s1 = inlined_call_operand.vmem [shape: bf16[32,32], index: 1, kind: input, shape index: {}]
  %s2 = inlined_call_operand.vmem [shape: f32[16,16], index: 2, kind: input, shape index: {}]
  %s3 = inlined_call_operand.vmem [shape: f32[32,32], index: 3, kind: input, shape index: {}]
  %s4 = inlined_call_operand.vmem [shape: bf16[2,32,96], index: 4, kind: input, shape index: {}]
  %s5 = inlined_call_operand.vmem [shape: bf16[2,32,32], index: 5, kind: input, shape index: {}]
  %s6 = inlined_call_operand.vmem [shape: bf16[2,32,32], index: 6, kind: input, shape index: {}]
  %s7 = inlined_call_operand.vmem [shape: bf16[2,32,64], index: 7, kind: input, shape index: {}]
  %s8 = inlined_call_operand.vmem [shape: bf16[2,32,32], index: 8, kind: input, shape index: {}]
  %s9 = inlined_call_operand.vmem [shape: bf16[2,32,2048], index: 9, kind: input, shape index: {}]
  %s10 = inlined_call_operand.vmem [shape: bf16[2,2048,32], index: 10, kind: input, shape index: {}]
  %s11 = inlined_call_operand.vmem [shape: f32[2,16,32], index: 11, kind: input, shape index: {}]
  %s12 = inlined_call_operand.vmem [shape: f32[2,1,2048], index: 12, kind: input, shape index: {}]
  %s13 = inlined_call_operand.vmem [shape: bf16[64,32], index: 13, kind: input, shape index: {}]
  %s14 = inlined_call_operand.hbm [shape: f32[16,32], index: 14, kind: output, shape index: {}]
  %s15 = sld [smem:[#allocation0]]
  $region97: #{tpu_custom_call.1} parent=0
    _
  %s17 = ssub.s32 1, %s15
  %s18 = scalar_select 0, %s17, %s15
  $region1: #{tpu_custom_call.1} parent=0
    #allocation3 [shape = 'u8[8192]{0}', space=vmem, size = 0x2000, scoped, tag = 'output window, operand 0, single buffered']
    #allocation4 [shape = 's32[2]{0}', space=sflag, size = 0x8, scoped, tag = 'scoped memory for tpu_custom_call.1']
    %19 = vsyncpa [#allocation4], 0
    loop: start=0, step=1, limit=4
    $region2: #{tpu_custom_call.1} parent=1 // loop_pre_header
      _
    $region3: #{tpu_custom_call.1} parent=1 // loop_header
      %s21 = sphi 0, %s25
      %p22 = scmp.ge.s32.totalorder %s21, 4
      %s29 = sphi 0, %s29
      %s31 = sphi 0, %s29
      %s32 = sphi 0, %s31
      %s46 = sphi 0, %s32
      %s50 = sphi 0, %s50
      %s52 = sphi 0, %s50
      %s53 = sphi 0, %s52
      %s67 = sphi 0, %s53
      %s71 = sphi 0, %s71
      %s73 = sphi 0, %s71
      %s74 = sphi 0, %s73
      %s88 = sphi 0, %s74
      %s92 = sphi 0, %s92
      %s94 = sphi 0, %s92
      %s95 = sphi 0, %s94
      %s109 = sphi 0, %s95
      %s115 = sphi 0, %s117
      %s118 = sphi 0, %s115
      %s119 = sphi 0, %s118
      %s135 = sphi 0, %s119
      %s141 = sphi 0, %s143
      %s144 = sphi 0, %s141
      %s145 = sphi 0, %s144
      %s161 = sphi 0, %s145
      %s167 = sphi 0, %s169
      %s170 = sphi 0, %s167
      %s171 = sphi 0, %s170
      %s187 = sphi 0, %s171
      %s193 = sphi 0, %s195
      %s196 = sphi 0, %s193
      %s197 = sphi 0, %s196
      %s213 = sphi 0, %s197
      %s219 = sphi 0, %s221
      %s222 = sphi 0, %s219
      %s223 = sphi 0, %s222
      %s239 = sphi 0, %s223
      %s245 = sphi 0, %s247
      %s248 = sphi 0, %s245
      %s249 = sphi 0, %s248
      %s265 = sphi 0, %s249
      %s271 = sphi 0, %s273
      %s274 = sphi 0, %s271
      %s275 = sphi 0, %s274
      %s291 = sphi 0, %s275
      %s297 = sphi 0, %s299
      %s300 = sphi 0, %s297
      %s301 = sphi 0, %s300
      %s317 = sphi 0, %s301
      %s323 = sphi 0, %s325
      %s326 = sphi 0, %s323
      %s327 = sphi 0, %s326
      %s343 = sphi 0, %s327
      %s347 = sphi 0, %s347
      %s349 = sphi 0, %s347
      %s350 = sphi 0, %s349
      %s364 = sphi 0, %s350
      %s368 = sphi 0, %s368
      %s370 = sphi 0, %s368
      %s371 = sphi 0, %s370
      %s385 = sphi 0, %s371
    $region4: #{tpu_custom_call.1} parent=1 // loop_header_branch
      %24 = sbr.rel (%p22) target = $region8
    $region5: #{tpu_custom_call.1} parent=1 // loop_body
      %s26 = ssub.s32 %s21, 1
      %s27 = ssub.s32 %s21, 2
      %s28 = sadd.s32 %s21, 1
      %s30 = sadd.s32 %s29, 1
      %p33 = scmp.eq.s32.totalorder %s21, 1
      %p34 = scmp.ne.s32.totalorder %s29, %s31
      %p35 = scmp.eq.s32.totalorder %s21, 0
      %p36 = por %p34, %p35
      %p37 = scmp.ne.s32.totalorder %s29, %s31
      %p38 = scmp.eq.s32.totalorder %s26, 1
      %p39 = por %p37, %p38
      %p40 = scmp.ne.s32.totalorder %s31, %s32
      %p41 = scmp.eq.s32.totalorder %s26, 0
      %p42 = por %p40, %p41
      %p43 = scmp.ne.s32.totalorder %s31, %s32
      %p44 = scmp.eq.s32.totalorder %s27, 1
      %p45 = por %p43, %p44
      %p47 = scmp.ne.s32.totalorder %s32, %s46
      %p48 = scmp.eq.s32.totalorder %s27, 0
      %p49 = por %p47, %p48
      %s51 = sadd.s32 %s50, 1
      %p54 = scmp.eq.s32.totalorder %s21, 1
      %p55 = scmp.ne.s32.totalorder %s50, %s52
      %p56 = scmp.eq.s32.totalorder %s21, 0
      %p57 = por %p55, %p56
      %p58 = scmp.ne.s32.totalorder %s50, %s52
      %p59 = scmp.eq.s32.totalorder %s26, 1
      %p60 = por %p58, %p59
      %p61 = scmp.ne.s32.totalorder %s52, %s53
      %p62 = scmp.eq.s32.totalorder %s26, 0
      %p63 = por %p61, %p62
      %p64 = scmp.ne.s32.totalorder %s52, %s53
      %p65 = scmp.eq.s32.totalorder %s27, 1
      %p66 = por %p64, %p65
      %p68 = scmp.ne.s32.totalorder %s53, %s67
      %p69 = scmp.eq.s32.totalorder %s27, 0
      %p70 = por %p68, %p69
      %s72 = sadd.s32 %s71, 1
      %p75 = scmp.eq.s32.totalorder %s21, 1
      %p76 = scmp.ne.s32.totalorder %s71, %s73
      %p77 = scmp.eq.s32.totalorder %s21, 0
      %p78 = por %p76, %p77
      %p79 = scmp.ne.s32.totalorder %s71, %s73
      %p80 = scmp.eq.s32.totalorder %s26, 1
      %p81 = por %p79, %p80
      %p82 = scmp.ne.s32.totalorder %s73, %s74
      %p83 = scmp.eq.s32.totalorder %s26, 0
      %p84 = por %p82, %p83
      %p85 = scmp.ne.s32.totalorder %s73, %s74
      %p86 = scmp.eq.s32.totalorder %s27, 1
      %p87 = por %p85, %p86
      %p89 = scmp.ne.s32.totalorder %s74, %s88
      %p90 = scmp.eq.s32.totalorder %s27, 0
      %p91 = por %p89, %p90
      %s93 = sadd.s32 %s92, 1
      %p96 = scmp.eq.s32.totalorder %s21, 1
      %p97 = scmp.ne.s32.totalorder %s92, %s94
      %p98 = scmp.eq.s32.totalorder %s21, 0
      %p99 = por %p97, %p98
      %p100 = scmp.ne.s32.totalorder %s92, %s94
      %p101 = scmp.eq.s32.totalorder %s26, 1
      %p102 = por %p100, %p101
      %p103 = scmp.ne.s32.totalorder %s94, %s95
      %p104 = scmp.eq.s32.totalorder %s26, 0
      %p105 = por %p103, %p104
      %p106 = scmp.ne.s32.totalorder %s94, %s95
      %p107 = scmp.eq.s32.totalorder %s27, 1
      %p108 = por %p106, %p107
      %p110 = scmp.ne.s32.totalorder %s95, %s109
      %p111 = scmp.eq.s32.totalorder %s27, 0
      %p112 = por %p110, %p111
      %s113 = ssub.s32 %s21, %s28
      %p114 = scmp.eq.s32.totalorder %s113, 0
      %s116 = sadd.s32 %s115, 1
      %s117 = scalar_select %p114, %s115, %s116
      %p120 = pneg %p114
      %p121 = scmp.eq.s32.totalorder %s21, 1
      %p122 = por %p120, %p121
      %p123 = scmp.ne.s32.totalorder %s115, %s118
      %p124 = scmp.eq.s32.totalorder %s21, 0
      %p125 = por %p123, %p124
      %p126 = scmp.ne.s32.totalorder %s115, %s118
      %p127 = scmp.eq.s32.totalorder %s26, 1
      %p128 = por %p126, %p127
      %p129 = scmp.ne.s32.totalorder %s118, %s119
      %p130 = scmp.eq.s32.totalorder %s26, 0
      %p131 = por %p129, %p130
      %p132 = scmp.ne.s32.totalorder %s118, %s119
      %p133 = scmp.eq.s32.totalorder %s27, 1
      %p134 = por %p132, %p133
      %p136 = scmp.ne.s32.totalorder %s119, %s135
      %p137 = scmp.eq.s32.totalorder %s27, 0
      %p138 = por %p136, %p137
      %s139 = ssub.s32 %s21, %s28
      %p140 = scmp.eq.s32.totalorder %s139, 0
      %s142 = sadd.s32 %s141, 1
      %s143 = scalar_select %p140, %s141, %s142
      %p146 = pneg %p140
      %p147 = scmp.eq.s32.totalorder %s21, 1
      %p148 = por %p146, %p147
      %p149 = scmp.ne.s32.totalorder %s141, %s144
      %p150 = scmp.eq.s32.totalorder %s21, 0
      %p151 = por %p149, %p150
      %p152 = scmp.ne.s32.totalorder %s141, %s144
      %p153 = scmp.eq.s32.totalorder %s26, 1
      %p154 = por %p152, %p153
      %p155 = scmp.ne.s32.totalorder %s144, %s145
      %p156 = scmp.eq.s32.totalorder %s26, 0
      %p157 = por %p155, %p156
      %p158 = scmp.ne.s32.totalorder %s144, %s145
      %p159 = scmp.eq.s32.totalorder %s27, 1
      %p160 = por %p158, %p159
      %p162 = scmp.ne.s32.totalorder %s145, %s161
      %p163 = scmp.eq.s32.totalorder %s27, 0
      %p164 = por %p162, %p163
      %s165 = ssub.s32 %s21, %s28
      %p166 = scmp.eq.s32.totalorder %s165, 0
      %s168 = sadd.s32 %s167, 1
      %s169 = scalar_select %p166, %s167, %s168
      %p172 = pneg %p166
      %p173 = scmp.eq.s32.totalorder %s21, 1
      %p174 = por %p172, %p173
      %p175 = scmp.ne.s32.totalorder %s167, %s170
      %p176 = scmp.eq.s32.totalorder %s21, 0
      %p177 = por %p175, %p176
      %p178 = scmp.ne.s32.totalorder %s167, %s170
      %p179 = scmp.eq.s32.totalorder %s26, 1
      %p180 = por %p178, %p179
      %p181 = scmp.ne.s32.totalorder %s170, %s171
      %p182 = scmp.eq.s32.totalorder %s26, 0
      %p183 = por %p181, %p182
      %p184 = scmp.ne.s32.totalorder %s170, %s171
      %p185 = scmp.eq.s32.totalorder %s27, 1
      %p186 = por %p184, %p185
      %p188 = scmp.ne.s32.totalorder %s171, %s187
      %p189 = scmp.eq.s32.totalorder %s27, 0
      %p190 = por %p188, %p189
      %s191 = ssub.s32 %s21, %s28
      %p192 = scmp.eq.s32.totalorder %s191, 0
      %s194 = sadd.s32 %s193, 1
      %s195 = scalar_select %p192, %s193, %s194
      %p198 = pneg %p192
      %p199 = scmp.eq.s32.totalorder %s21, 1
      %p200 = por %p198, %p199
      %p201 = scmp.ne.s32.totalorder %s193, %s196
      %p202 = scmp.eq.s32.totalorder %s21, 0
      %p203 = por %p201, %p202
      %p204 = scmp.ne.s32.totalorder %s193, %s196
      %p205 = scmp.eq.s32.totalorder %s26, 1
      %p206 = por %p204, %p205
      %p207 = scmp.ne.s32.totalorder %s196, %s197
      %p208 = scmp.eq.s32.totalorder %s26, 0
      %p209 = por %p207, %p208
      %p210 = scmp.ne.s32.totalorder %s196, %s197
      %p211 = scmp.eq.s32.totalorder %s27, 1
      %p212 = por %p210, %p211
      %p214 = scmp.ne.s32.totalorder %s197, %s213
      %p215 = scmp.eq.s32.totalorder %s27, 0
      %p216 = por %p214, %p215
      %s217 = ssub.s32 %s21, %s28
      %p218 = scmp.eq.s32.totalorder %s217, 0
      %s220 = sadd.s32 %s219, 1
      %s221 = scalar_select %p218, %s219, %s220
      %p224 = pneg %p218
      %p225 = scmp.eq.s32.totalorder %s21, 1
      %p226 = por %p224, %p225
      %p227 = scmp.ne.s32.totalorder %s219, %s222
      %p228 = scmp.eq.s32.totalorder %s21, 0
      %p229 = por %p227, %p228
      %p230 = scmp.ne.s32.totalorder %s219, %s222
      %p231 = scmp.eq.s32.totalorder %s26, 1
      %p232 = por %p230, %p231
      %p233 = scmp.ne.s32.totalorder %s222, %s223
      %p234 = scmp.eq.s32.totalorder %s26, 0
      %p235 = por %p233, %p234
      %p236 = scmp.ne.s32.totalorder %s222, %s223
      %p237 = scmp.eq.s32.totalorder %s27, 1
      %p238 = por %p236, %p237
      %p240 = scmp.ne.s32.totalorder %s223, %s239
      %p241 = scmp.eq.s32.totalorder %s27, 0
      %p242 = por %p240, %p241
      %s243 = ssub.s32 %s21, %s28
      %p244 = scmp.eq.s32.totalorder %s243, 0
      %s246 = sadd.s32 %s245, 1
      %s247 = scalar_select %p244, %s245, %s246
      %p250 = pneg %p244
      %p251 = scmp.eq.s32.totalorder %s21, 1
      %p252 = por %p250, %p251
      %p253 = scmp.ne.s32.totalorder %s245, %s248
      %p254 = scmp.eq.s32.totalorder %s21, 0
      %p255 = por %p253, %p254
      %p256 = scmp.ne.s32.totalorder %s245, %s248
      %p257 = scmp.eq.s32.totalorder %s26, 1
      %p258 = por %p256, %p257
      %p259 = scmp.ne.s32.totalorder %s248, %s249
      %p260 = scmp.eq.s32.totalorder %s26, 0
      %p261 = por %p259, %p260
      %p262 = scmp.ne.s32.totalorder %s248, %s249
      %p263 = scmp.eq.s32.totalorder %s27, 1
      %p264 = por %p262, %p263
      %p266 = scmp.ne.s32.totalorder %s249, %s265
      %p267 = scmp.eq.s32.totalorder %s27, 0
      %p268 = por %p266, %p267
      %s269 = ssub.s32 %s21, %s28
      %p270 = scmp.eq.s32.totalorder %s269, 0
      %s272 = sadd.s32 %s271, 1
      %s273 = scalar_select %p270, %s271, %s272
      %p276 = pneg %p270
      %p277 = scmp.eq.s32.totalorder %s21, 1
      %p278 = por %p276, %p277
      %p279 = scmp.ne.s32.totalorder %s271, %s274
      %p280 = scmp.eq.s32.totalorder %s21, 0
      %p281 = por %p279, %p280
      %p282 = scmp.ne.s32.totalorder %s271, %s274
      %p283 = scmp.eq.s32.totalorder %s26, 1
      %p284 = por %p282, %p283
      %p285 = scmp.ne.s32.totalorder %s274, %s275
      %p286 = scmp.eq.s32.totalorder %s26, 0
      %p287 = por %p285, %p286
      %p288 = scmp.ne.s32.totalorder %s274, %s275
      %p289 = scmp.eq.s32.totalorder %s27, 1
      %p290 = por %p288, %p289
      %p292 = scmp.ne.s32.totalorder %s275, %s291
      %p293 = scmp.eq.s32.totalorder %s27, 0
      %p294 = por %p292, %p293
      %s295 = ssub.s32 %s21, %s28
      %p296 = scmp.eq.s32.totalorder %s295, 0
      %s298 = sadd.s32 %s297, 1
      %s299 = scalar_select %p296, %s297, %s298
      %p302 = pneg %p296
      %p303 = scmp.eq.s32.totalorder %s21, 1
      %p304 = por %p302, %p303
      %p305 = scmp.ne.s32.totalorder %s297, %s300
      %p306 = scmp.eq.s32.totalorder %s21, 0
      %p307 = por %p305, %p306
      %p308 = scmp.ne.s32.totalorder %s297, %s300
      %p309 = scmp.eq.s32.totalorder %s26, 1
      %p310 = por %p308, %p309
      %p311 = scmp.ne.s32.totalorder %s300, %s301
      %p312 = scmp.eq.s32.totalorder %s26, 0
      %p313 = por %p311, %p312
      %p314 = scmp.ne.s32.totalorder %s300, %s301
      %p315 = scmp.eq.s32.totalorder %s27, 1
      %p316 = por %p314, %p315
      %p318 = scmp.ne.s32.totalorder %s301, %s317
      %p319 = scmp.eq.s32.totalorder %s27, 0
      %p320 = por %p318, %p319
      %s321 = ssub.s32 %s21, %s28
      %p322 = scmp.eq.s32.totalorder %s321, 0
      %s324 = sadd.s32 %s323, 1
      %s325 = scalar_select %p322, %s323, %s324
      %p328 = pneg %p322
      %p329 = scmp.eq.s32.totalorder %s21, 1
      %p330 = por %p328, %p329
      %p331 = scmp.ne.s32.totalorder %s323, %s326
      %p332 = scmp.eq.s32.totalorder %s21, 0
      %p333 = por %p331, %p332
      %p334 = scmp.ne.s32.totalorder %s323, %s326
      %p335 = scmp.eq.s32.totalorder %s26, 1
      %p336 = por %p334, %p335
      %p337 = scmp.ne.s32.totalorder %s326, %s327
      %p338 = scmp.eq.s32.totalorder %s26, 0
      %p339 = por %p337, %p338
      %p340 = scmp.ne.s32.totalorder %s326, %s327
      %p341 = scmp.eq.s32.totalorder %s27, 1
      %p342 = por %p340, %p341
      %p344 = scmp.ne.s32.totalorder %s327, %s343
      %p345 = scmp.eq.s32.totalorder %s27, 0
      %p346 = por %p344, %p345
      %s348 = sadd.s32 %s347, 1
      %p351 = scmp.eq.s32.totalorder %s21, 1
      %p352 = scmp.ne.s32.totalorder %s347, %s349
      %p353 = scmp.eq.s32.totalorder %s21, 0
      %p354 = por %p352, %p353
      %p355 = scmp.ne.s32.totalorder %s347, %s349
      %p356 = scmp.eq.s32.totalorder %s26, 1
      %p357 = por %p355, %p356
      %p358 = scmp.ne.s32.totalorder %s349, %s350
      %p359 = scmp.eq.s32.totalorder %s26, 0
      %p360 = por %p358, %p359
      %p361 = scmp.ne.s32.totalorder %s349, %s350
      %p362 = scmp.eq.s32.totalorder %s27, 1
      %p363 = por %p361, %p362
      %p365 = scmp.ne.s32.totalorder %s350, %s364
      %p366 = scmp.eq.s32.totalorder %s27, 0
      %p367 = por %p365, %p366
      %s369 = sadd.s32 %s368, 1
      %p372 = scmp.eq.s32.totalorder %s21, 1
      %p373 = scmp.ne.s32.totalorder %s368, %s370
      %p374 = scmp.eq.s32.totalorder %s21, 0
      %p375 = por %p373, %p374
      %p376 = scmp.ne.s32.totalorder %s368, %s370
      %p377 = scmp.eq.s32.totalorder %s26, 1
      %p378 = por %p376, %p377
      %p379 = scmp.ne.s32.totalorder %s370, %s371
      %p380 = scmp.eq.s32.totalorder %s26, 0
      %p381 = por %p379, %p380
      %p382 = scmp.ne.s32.totalorder %s370, %s371
      %p383 = scmp.eq.s32.totalorder %s27, 1
      %p384 = por %p382, %p383
      %p386 = scmp.ne.s32.totalorder %s371, %s385
      %p387 = scmp.eq.s32.totalorder %s27, 0
      %p388 = por %p386, %p387
      %p389 = scmp.le.s32.totalorder 1, %s21
      %p390 = scmp.lt.s32.totalorder %s21, 3
      %p391 = pnand %p389, %p390
      %p392 = pneg %p391
      // Predicated region
      $region9: #{tpu_custom_call.1} parent=5 // pred_check
        _
      $region10: #{tpu_custom_call.1} parent=5 // pred_check_branch
        %394 = sbr.rel (%p391) target = $region12
      $region11: #{tpu_custom_call.1} parent=5 // pred_region
        %s395 = ssub.s32 %s21, 1
        // Predicated region
        $region13: #{tpu_custom_call.1} parent=11 // pred_check
          %p396 = pneg %p42
        $region14: #{tpu_custom_call.1} parent=11 // pred_check_branch
          %398 = sbr.rel (%p396) target = $region16
        $region15: #{tpu_custom_call.1} parent=11 // pred_region
          _
        $region16: #{tpu_custom_call.1} parent=11 // pred_fallthru
          _
        // Predicated region
        $region17: #{tpu_custom_call.1} parent=11 // pred_check
          %p399 = pneg %p63
        $region18: #{tpu_custom_call.1} parent=11 // pred_check_branch
          %401 = sbr.rel (%p399) target = $region20
        $region19: #{tpu_custom_call.1} parent=11 // pred_region
          _
        $region20: #{tpu_custom_call.1} parent=11 // pred_fallthru
          _
        // Predicated region
        $region21: #{tpu_custom_call.1} parent=11 // pred_check
          %p402 = pneg %p84
        $region22: #{tpu_custom_call.1} parent=11 // pred_check_branch
          %404 = sbr.rel (%p402) target = $region24
        $region23: #{tpu_custom_call.1} parent=11 // pred_region
          _
        $region24: #{tpu_custom_call.1} parent=11 // pred_fallthru
          _
        // Predicated region
        $region25: #{tpu_custom_call.1} parent=11 // pred_check
          %p405 = pneg %p105
        $region26: #{tpu_custom_call.1} parent=11 // pred_check_branch
          %407 = sbr.rel (%p405) target = $region28
        $region27: #{tpu_custom_call.1} parent=11 // pred_region
          _
        $region28: #{tpu_custom_call.1} parent=11 // pred_fallthru
          _
        // Predicated region
        $region29: #{tpu_custom_call.1} parent=11 // pred_check
          %p408 = pneg %p360
        $region30: #{tpu_custom_call.1} parent=11 // pred_check_branch
          %410 = sbr.rel (%p408) target = $region32
        $region31: #{tpu_custom_call.1} parent=11 // pred_region
          _
        $region32: #{tpu_custom_call.1} parent=11 // pred_fallthru
          _
      $region12: #{tpu_custom_call.1} parent=5 // pred_fallthru
        _
      %p411 = scmp.lt.s32.totalorder %s21, 2
      // Predicated region
      $region33: #{tpu_custom_call.1} parent=5 // pred_check
        %p412 = pneg %p411
      $region34: #{tpu_custom_call.1} parent=5 // pred_check_branch
        %414 = sbr.rel (%p412) target = $region36
      $region35: #{tpu_custom_call.1} parent=5 // pred_region
        // Predicated region
        $region37: #{tpu_custom_call.1} parent=35 // pred_check
          %p415 = pneg %p125
        $region38: #{tpu_custom_call.1} parent=35 // pred_check_branch
          %417 = sbr.rel (%p415) target = $region40
        $region39: #{tpu_custom_call.1} parent=35 // pred_region
          %p418 = scmp.lt.s32.totalorder %s21, 1
          %s419 = scalar_select %p418, %s21, 1
          %s420 = smul.addr %s419, 4
          %s421 = smul.addr %s420, 4
          %s422 = scalar_lea.vmem %s4, %s421
        $region40: #{tpu_custom_call.1} parent=35 // pred_fallthru
          _
        // Predicated region
        $region41: #{tpu_custom_call.1} parent=35 // pred_check
          %p423 = pneg %p151
        $region42: #{tpu_custom_call.1} parent=35 // pred_check_branch
          %425 = sbr.rel (%p423) target = $region44
        $region43: #{tpu_custom_call.1} parent=35 // pred_region
          %p426 = scmp.lt.s32.totalorder %s21, 1
          %s427 = scalar_select %p426, %s21, 1
          %s428 = smul.addr %s427, 4
          %s429 = smul.addr %s428, 4
          %s430 = scalar_lea.vmem %s5, %s429
        $region44: #{tpu_custom_call.1} parent=35 // pred_fallthru
          _
        // Predicated region
        $region45: #{tpu_custom_call.1} parent=35 // pred_check
          %p431 = pneg %p177
        $region46: #{tpu_custom_call.1} parent=35 // pred_check_branch
          %433 = sbr.rel (%p431) target = $region48
        $region47: #{tpu_custom_call.1} parent=35 // pred_region
          %p434 = scmp.lt.s32.totalorder %s21, 1
          %s435 = scalar_select %p434, %s21, 1
          %s436 = smul.addr %s435, 4
          %s437 = smul.addr %s436, 4
          %s438 = scalar_lea.vmem %s6, %s437
        $region48: #{tpu_custom_call.1} parent=35 // pred_fallthru
          _
        // Predicated region
        $region49: #{tpu_custom_call.1} parent=35 // pred_check
          %p439 = pneg %p203
        $region50: #{tpu_custom_call.1} parent=35 // pred_check_branch
          %441 = sbr.rel (%p439) target = $region52
        $region51: #{tpu_custom_call.1} parent=35 // pred_region
          %p442 = scmp.lt.s32.totalorder %s21, 1
          %s443 = scalar_select %p442, %s21, 1
          %s444 = smul.addr %s443, 4
          %s445 = smul.addr %s444, 4
          %s446 = scalar_lea.vmem %s7, %s445
        $region52: #{tpu_custom_call.1} parent=35 // pred_fallthru
          _
        // Predicated region
        $region53: #{tpu_custom_call.1} parent=35 // pred_check
          %p447 = pneg %p229
        $region54: #{tpu_custom_call.1} parent=35 // pred_check_branch
          %449 = sbr.rel (%p447) target = $region56
        $region55: #{tpu_custom_call.1} parent=35 // pred_region
          %p450 = scmp.lt.s32.totalorder %s21, 1
          %s451 = scalar_select %p450, %s21, 1
          %s452 = smul.addr %s451, 4
          %s453 = smul.addr %s452, 4
          %s454 = scalar_lea.vmem %s8, %s453
        $region56: #{tpu_custom_call.1} parent=35 // pred_fallthru
          _
        // Predicated region
        $region57: #{tpu_custom_call.1} parent=35 // pred_check
          %p455 = pneg %p255
        $region58: #{tpu_custom_call.1} parent=35 // pred_check_branch
          %457 = sbr.rel (%p455) target = $region60
        $region59: #{tpu_custom_call.1} parent=35 // pred_region
          %p458 = scmp.lt.s32.totalorder %s21, 1
          %s459 = scalar_select %p458, %s21, 1
          %s460 = smul.addr %s459, 64
          %s461 = smul.addr %s460, 4
          %s462 = scalar_lea.vmem %s9, %s461
        $region60: #{tpu_custom_call.1} parent=35 // pred_fallthru
          _
        // Predicated region
        $region61: #{tpu_custom_call.1} parent=35 // pred_check
          %p463 = pneg %p281
        $region62: #{tpu_custom_call.1} parent=35 // pred_check_branch
          %465 = sbr.rel (%p463) target = $region64
        $region63: #{tpu_custom_call.1} parent=35 // pred_region
          %p466 = scmp.lt.s32.totalorder %s21, 1
          %s467 = scalar_select %p466, %s21, 1
          %s468 = smul.addr %s467, 256
          %s469 = smul.addr %s468, 4
          %s470 = scalar_lea.vmem %s10, %s469
        $region64: #{tpu_custom_call.1} parent=35 // pred_fallthru
          _
        // Predicated region
        $region65: #{tpu_custom_call.1} parent=35 // pred_check
          %p471 = pneg %p307
        $region66: #{tpu_custom_call.1} parent=35 // pred_check_branch
          %473 = sbr.rel (%p471) target = $region68
        $region67: #{tpu_custom_call.1} parent=35 // pred_region
          %p474 = scmp.lt.s32.totalorder %s21, 1
          %s475 = scalar_select %p474, %s21, 1
          %s476 = smul.addr %s475, 2
          %s477 = smul.addr %s476, 8
          %s478 = scalar_lea.vmem %s11, %s477
        $region68: #{tpu_custom_call.1} parent=35 // pred_fallthru
          _
        // Predicated region
        $region69: #{tpu_custom_call.1} parent=35 // pred_check
          %p479 = pneg %p333
        $region70: #{tpu_custom_call.1} parent=35 // pred_check_branch
          %481 = sbr.rel (%p479) target = $region72
        $region71: #{tpu_custom_call.1} parent=35 // pred_region
          %p482 = scmp.lt.s32.totalorder %s21, 1
          %s483 = scalar_select %p482, %s21, 1
          %s484 = smul.addr %s483, 16
          %s485 = scalar_lea.vmem %s12, %s484
        $region72: #{tpu_custom_call.1} parent=35 // pred_fallthru
          _
      $region36: #{tpu_custom_call.1} parent=5 // pred_fallthru
        _
      %p486 = scmp.le.s32.totalorder 1, %s21
      %p487 = scmp.lt.s32.totalorder %s21, 3
      %p488 = pnand %p486, %p487
      %p489 = pneg %p488
      // Predicated region
      $region73: #{tpu_custom_call.1} parent=5 // pred_check
        _
      $region74: #{tpu_custom_call.1} parent=5 // pred_check_branch
        %491 = sbr.rel (%p488) target = $region76
      $region75: #{tpu_custom_call.1} parent=5 // pred_region
        %s492 = ssub.s32 %s21, 1
        %p493 = pneg %p42
        %p494 = pneg %p39
        %p495 = pneg %p63
        %p496 = pneg %p60
        %p497 = pneg %p84
        %p498 = pneg %p81
        %p499 = pneg %p105
        %p500 = pneg %p102
        %p501 = scmp.lt.s32.totalorder %s26, 1
        %s502 = scalar_select %p501, %s26, 1
        %s503 = smul.addr %s502, 4
        %s504 = smul.addr %s503, 4
        %s505 = scalar_lea.vmem %s4, %s504
        %p506 = pneg %p131
        %p507 = pneg %p128
        %p508 = scmp.lt.s32.totalorder %s26, 1
        %s509 = scalar_select %p508, %s26, 1
        %s510 = smul.addr %s509, 4
        %s511 = smul.addr %s510, 4
        %s512 = scalar_lea.vmem %s5, %s511
        %p513 = pneg %p157
        %p514 = pneg %p154
        %p515 = scmp.lt.s32.totalorder %s26, 1
        %s516 = scalar_select %p515, %s26, 1
        %s517 = smul.addr %s516, 4
        %s518 = smul.addr %s517, 4
        %s519 = scalar_lea.vmem %s6, %s518
        %p520 = pneg %p183
        %p521 = pneg %p180
        %p522 = scmp.lt.s32.totalorder %s26, 1
        %s523 = scalar_select %p522, %s26, 1
        %s524 = smul.addr %s523, 4
        %s525 = smul.addr %s524, 4
        %s526 = scalar_lea.vmem %s7, %s525
        %p527 = pneg %p209
        %p528 = pneg %p206
        %p529 = scmp.lt.s32.totalorder %s26, 1
        %s530 = scalar_select %p529, %s26, 1
        %s531 = smul.addr %s530, 4
        %s532 = smul.addr %s531, 4
        %s533 = scalar_lea.vmem %s8, %s532
        %p534 = pneg %p235
        %p535 = pneg %p232
        %p536 = scmp.lt.s32.totalorder %s26, 1
        %s537 = scalar_select %p536, %s26, 1
        %s538 = smul.addr %s537, 64
        %s539 = smul.addr %s538, 4
        %s540 = scalar_lea.vmem %s9, %s539
        %p541 = pneg %p261
        %p542 = pneg %p258
        %p543 = scmp.lt.s32.totalorder %s26, 1
        %s544 = scalar_select %p543, %s26, 1
        %s545 = smul.addr %s544, 256
        %s546 = smul.addr %s545, 4
        %s547 = scalar_lea.vmem %s10, %s546
        %p548 = pneg %p287
        %p549 = pneg %p284
        %p550 = scmp.lt.s32.totalorder %s26, 1
        %s551 = scalar_select %p550, %s26, 1
        %s552 = smul.addr %s551, 2
        %s553 = smul.addr %s552, 8
        %s554 = scalar_lea.vmem %s11, %s553
        %p555 = pneg %p313
        %p556 = pneg %p310
        %p557 = scmp.lt.s32.totalorder %s26, 1
        %s558 = scalar_select %p557, %s26, 1
        %s559 = smul.addr %s558, 16
        %s560 = scalar_lea.vmem %s12, %s559
        %p561 = pneg %p339
        %p562 = pneg %p336
        %p563 = pneg %p360
        %p564 = pneg %p357
        %p565 = pneg %p381
        %p566 = pneg %p378
        %p567 = scmp.lt.s32.totalorder %s26, 1
        %s568 = scalar_select %p567, %s26, 1
        %s569 = smul.addr %s568, 4
        %s570 = smul.addr %s569, 4
        %s571 = scalar_lea.vmem %s4, %s570
        %p572 = scmp.lt.s32.totalorder %s26, 1
        %s573 = scalar_select %p572, %s26, 1
        %s574 = smul.addr %s573, 4
        %s575 = smul.addr %s574, 4
        %s576 = scalar_lea.vmem %s5, %s575
        %p577 = scmp.lt.s32.totalorder %s26, 1
        %s578 = scalar_select %p577, %s26, 1
        %s579 = smul.addr %s578, 4
        %s580 = smul.addr %s579, 4
        %s581 = scalar_lea.vmem %s6, %s580
        %p582 = scmp.lt.s32.totalorder %s26, 1
        %s583 = scalar_select %p582, %s26, 1
        %s584 = smul.addr %s583, 4
        %s585 = smul.addr %s584, 4
        %s586 = scalar_lea.vmem %s7, %s585
        %p587 = scmp.lt.s32.totalorder %s26, 1
        %s588 = scalar_select %p587, %s26, 1
        %s589 = smul.addr %s588, 4
        %s590 = smul.addr %s589, 4
        %s591 = scalar_lea.vmem %s8, %s590
        %p592 = scmp.lt.s32.totalorder %s26, 1
        %s593 = scalar_select %p592, %s26, 1
        %s594 = smul.addr %s593, 64
        %s595 = smul.addr %s594, 4
        %s596 = scalar_lea.vmem %s9, %s595
        %p597 = scmp.lt.s32.totalorder %s26, 1
        %s598 = scalar_select %p597, %s26, 1
        %s599 = smul.addr %s598, 256
        %s600 = smul.addr %s599, 4
        %s601 = scalar_lea.vmem %s10, %s600
        %p602 = scmp.lt.s32.totalorder %s26, 1
        %s603 = scalar_select %p602, %s26, 1
        %s604 = smul.addr %s603, 2
        %s605 = smul.addr %s604, 8
        %s606 = scalar_lea.vmem %s11, %s605
        %p607 = scmp.lt.s32.totalorder %s26, 1
        %s608 = scalar_select %p607, %s26, 1
        %s609 = smul.addr %s608, 16
        %s610 = scalar_lea.vmem %s12, %s609
        %p612 = scmp.eq.s32.totalorder %s26, 0
        // Predicated region
        $region77: #{tpu_custom_call.1} parent=75 // pred_check
          %p613 = pneg %p612
        $region78: #{tpu_custom_call.1} parent=75 // pred_check_branch
          %615 = sbr.rel (%p613) target = $region80
        $region79: #{tpu_custom_call.1} parent=75 // pred_region
          %v616 = vld [vmem:[%s0] sm:$0xff]
          %v617 = vld [vmem:[%s0 + $0x8] sm:$0xff]
          %vm618 = vcmask 261120
          %619 = vst.msk [vmem:[#allocation2] sm:$0xff] %vm618, %v616
          %620 = vst.msk [vmem:[#allocation2 + $0x8] sm:$0xff] %vm618, %v617
        $region80: #{tpu_custom_call.1} parent=75 // pred_fallthru
          _
        %v621 = vld [vmem:[#allocation2] sm:$0xff]
        %v622 = vld [vmem:[#allocation2 + $0x8] sm:$0xff]
        %v623 = vld [vmem:[%s1] sm:$0xf]
        %v624 = vld [vmem:[%s1 + $0x4] sm:$0xf]
        %v625 = vld [vmem:[%s1 + $0x8] sm:$0xf]
        %v626 = vld [vmem:[%s1 + $0xc] sm:$0xf]
        %v627 = vld [vmem:[%s2] sm:$0xff]
        %v628 = vld [vmem:[%s2 + $0x8] sm:$0xff]
        %v629 = vld [vmem:[%s3] sm:$0xff]
        %v630 = vld [vmem:[%s3 + $0x8] sm:$0xff]
        %v631 = vld [vmem:[%s3 + $0x10] sm:$0xff]
        %v632 = vld [vmem:[%s3 + $0x18] sm:$0xff]
        %v633 = vld [vmem:[%s606] sm:$0xff]
        %v634 = vld [vmem:[%s606 + $0x8] sm:$0xff]
        %v635 = vld [vmem:[%s610] sm:$0xff]
        %v636 = vld [vmem:[%s610 + $0x8] sm:$0xff]
        %v637 = vld [vmem:[%s571] sm:$0xf]
        %v638 = vld [vmem:[%s571 + $0x4] sm:$0xf]
        %v639 = vld [vmem:[%s571 + $0x8] sm:$0xf]
        %v640 = vld [vmem:[%s571 + $0xc] sm:$0xf]
        %v641 = vpack.c.bf16 %v622, %v621
        %v646 = vunpack.c.l.b16 %v637
        %v647 = vunpack.c.l.b16 %v638
        %v648 = vunpack.c.l.b16 %v639
        %v649 = vunpack.c.l.b16 %v640
        %v650 = vpack.c.b16 %v647, %v646
        %v651 = vpack.c.b16 %v649, %v648
        %vm654 = vcmask 261120
        %v656 = vsel %vm654, %v641, 0
        %658 = vmatprep.subr.bf16.mxu0 0
        %659 = vmatpush1.bf16.msra.mxu0 %v650
        %660 = vmatprep.subr.bf16.mxu0 0
        %661 = vmatpush1.bf16.msra.mxu0 %v651
        %662 = vmatprep.subr.bf16.mxu0 0
        %663 = vmatpush1.bf16.msra.mxu0 0
        %664 = vmatprep.subr.bf16.mxu0 0
        %665 = vmatpush1.bf16.msra.mxu0 0
        %666 = vmatprep.subr.bf16.mxu0 0
        %667 = vmatpush1.bf16.msra.mxu0 0
        %668 = vmatprep.subr.bf16.mxu0 0
        %669 = vmatpush1.bf16.msra.mxu0 0
        %670 = vmatprep.subr.bf16.mxu0 0
        %671 = vmatpush1.bf16.msra.mxu0 0
        %672 = vmatprep.subr.bf16.mxu0 0
        %673 = vmatpush1.bf16.msra.mxu0 0
        %674 = vmatprep.subr.bf16.mxu0 0
        %675 = vmatpush1.bf16.msra.mxu0 0
        %676 = vmatprep.subr.bf16.mxu0 0
        %677 = vmatpush1.bf16.msra.mxu0 0
        %678 = vmatprep.subr.bf16.mxu0 0
        %679 = vmatpush1.bf16.msra.mxu0 0
        %680 = vmatprep.subr.bf16.mxu0 0
        %681 = vmatpush1.bf16.msra.mxu0 0
        %682 = vmatprep.subr.bf16.mxu0 0
        %683 = vmatpush1.bf16.msra.mxu0 0
        %684 = vmatprep.subr.bf16.mxu0 0
        %685 = vmatpush1.bf16.msra.mxu0 0
        %686 = vmatprep.subr.bf16.mxu0 0
        %687 = vmatpush1.bf16.msra.mxu0 0
        %688 = vmatprep.subr.bf16.mxu0 0
        %689 = vmatpush1.bf16.msra.mxu0 0
        %690 = vmatprep.mubr.bf16.mxu0 0
        %691 = vmatmul.mubr.bf16.gmra.mrb[0].mxu0 %v656
        %v692 = vpop.f32.mrb[0].mxu0
        %v693 = vadd.f32 0.0, %v692
        %v694 = vpop.f32.mrb[0].mxu0
        %v695 = vpop.f32.mrb[0].mxu0
        %v696 = vadd.f32 0.0, %v695
        %v697 = vpop.f32.mrb[0].mxu0
        %698 = vdwg.mxu0
        %v699 = vlaneseq
        %v700 = vshrl.u32 %v699, 7
        %v701 = vsub.s32 0, %v700
        %v702 = vrot.slane %v633, %v701
        %v703 = vadd.f32 %v693, %v702
        %v704 = vadd.f32 %v696, %v702
        %v705 = vlaneseq
        %v706 = vshrl.u32 %v705, 7
        %v707 = vsub.s32 1, %v706
        %v708 = vrot.slane %v633, %v707
        %710 = vrot.lane.b32.xlu0 %v708, 32
        %v711 = vpop.permute.xlu0 %710
        %v713 = vadd.f32 %v693, %v711
        %v714 = vadd.f32 %v696, %v711
        %v715 = vlaneseq
        %v716 = vshrl.u32 %v715, 7
        %v717 = vsub.s32 2, %v716
        %v718 = vrot.slane %v633, %v717
        %720 = vrot.lane.b32.xlu0 %v718, 64
        %v721 = vpop.permute.xlu0 %720
        %v723 = vadd.f32 %v693, %v721
        %v724 = vadd.f32 %v696, %v721
        %v725 = vpack.c.bf16 %v704, %v703
        %v726 = vpack.c.bf16 %v714, %v713
        %728 = vrot.lane.b32.xlu0 %v726, 96
        %v729 = vpop.permute.xlu0 %728
        %vm730 = vcmask 64512
        %v732 = vsel %vm730, %v725, 0
        %v735 = vsel %vm730, %v729, 0
        %737 = vmatprep.subr.bf16.mxu0 0
        %738 = vmatpush1.bf16.xpose.msra.mxu0 %v735
        %739 = vmatprep.subr.bf16.mxu0 0
        %740 = vmatpush1.bf16.xpose.msra.mxu0 0
        %741 = vmatprep.subr.bf16.mxu0 0
        %742 = vmatpush1.bf16.xpose.msra.mxu0 0
        %743 = vmatprep.subr.bf16.mxu0 0
        %744 = vmatpush1.bf16.xpose.msra.mxu0 0
        %745 = vmatprep.subr.bf16.mxu0 0
        %746 = vmatpush1.bf16.xpose.msra.mxu0 0
        %747 = vmatprep.subr.bf16.mxu0 0
        %748 = vmatpush1.bf16.xpose.msra.mxu0 0
        %749 = vmatprep.subr.bf16.mxu0 0
        %750 = vmatpush1.bf16.xpose.msra.mxu0 0
        %751 = vmatprep.subr.bf16.mxu0 0
        %752 = vmatpush1.bf16.xpose.msra.mxu0 0
        %753 = vmatprep.subr.bf16.mxu0 0
        %754 = vmatpush1.bf16.xpose.msra.mxu0 0
        %755 = vmatprep.subr.bf16.mxu0 0
        %756 = vmatpush1.bf16.xpose.msra.mxu0 0
        %757 = vmatprep.subr.bf16.mxu0 0
        %758 = vmatpush1.bf16.xpose.msra.mxu0 0
        %759 = vmatprep.subr.bf16.mxu0 0
        %760 = vmatpush1.bf16.xpose.msra.mxu0 0
        %761 = vmatprep.subr.bf16.mxu0 0
        %762 = vmatpush1.bf16.xpose.msra.mxu0 0
        %763 = vmatprep.subr.bf16.mxu0 0
        %764 = vmatpush1.bf16.xpose.msra.mxu0 0
        %765 = vmatprep.subr.bf16.mxu0 0
        %766 = vmatpush1.bf16.xpose.msra.mxu0 0
        %767 = vmatprep.subr.bf16.mxu0 0
        %768 = vmatpush1.bf16.xpose.msra.mxu0 0
        %769 = vmatprep.mubr.bf16.mxu0 0
        %770 = vmatmul.mubr.bf16.gmra.mrb[0].mxu0 %v732
        %v771 = vpop.f32.mrb[0].mxu0
        %v772 = vadd.f32 %v627, %v771
        %v773 = vpop.f32.mrb[0].mxu0
        %v774 = vpop.f32.mrb[0].mxu0
        %v775 = vadd.f32 %v628, %v774
        %v776 = vpop.f32.mrb[0].mxu0
        %777 = vdwg.mxu0
        %vm778 = vcmask 130048
        %v779 = vsel %vm778, %v772, -inf
        %780 = vmax.xlane.f32.xlu0 %v779
        %v781 = vpop.xlane.xlu0 %780
        %v782 = vsel %vm778, %v775, -inf
        %783 = vmax.xlane.f32.xlu0 %v782
        %v784 = vpop.xlane.xlu0 %783
        %v785 = vsub.f32 %v772, %v781
        %v786 = vsub.f32 %v775, %v784
        %v787 = vmul.f32 %v785, 1.442695
        %v788 = vpow.pop %v787
        %v789 = vmul.f32 %v786, 1.442695
        %v790 = vpow.pop %v789
        %v791 = vsel %vm778, %v788, 0.0
        %792 = vadd.xlane.f32.xlu0 %v791
        %v793 = vpop.xlane.xlu0 %792
        %v794 = vsel %vm778, %v790, 0.0
        %795 = vadd.xlane.f32.xlu0 %v794
        %v796 = vpop.xlane.xlu0 %795
        %v797 = vrcp.pop %v793
        %v798 = vrcp.pop %v796
        %v799 = vmul.f32 %v788, %v797
        %v800 = vmul.f32 %v790, %v798
        %v801 = vpack.c.bf16 %v800, %v799
        %v802 = vpack.c.bf16 %v724, %v723
        %804 = vrot.lane.b32.xlu0 %v802, 64
        %v805 = vpop.permute.xlu0 %804
        %v808 = vsel %vm778, %v801, 0
        %810 = vmatprep.subr.bf16.mxu0 0
        %811 = vmatpush1.bf16.msra.mxu0 %v805
        %812 = vmatprep.subr.bf16.mxu0 0
        %813 = vmatpush1.bf16.msra.mxu0 0
        %814 = vmatprep.subr.bf16.mxu0 0
        %815 = vmatpush1.bf16.msra.mxu0 0
        %816 = vmatprep.subr.bf16.mxu0 0
        %817 = vmatpush1.bf16.msra.mxu0 0
        %818 = vmatprep.subr.bf16.mxu0 0
        %819 = vmatpush1.bf16.msra.mxu0 0
        %820 = vmatprep.subr.bf16.mxu0 0
        %821 = vmatpush1.bf16.msra.mxu0 0
        %822 = vmatprep.subr.bf16.mxu0 0
        %823 = vmatpush1.bf16.msra.mxu0 0
        %824 = vmatprep.subr.bf16.mxu0 0
        %825 = vmatpush1.bf16.msra.mxu0 0
        %826 = vmatprep.subr.bf16.mxu0 0
        %827 = vmatpush1.bf16.msra.mxu0 0
        %828 = vmatprep.subr.bf16.mxu0 0
        %829 = vmatpush1.bf16.msra.mxu0 0
        %830 = vmatprep.subr.bf16.mxu0 0
        %831 = vmatpush1.bf16.msra.mxu0 0
        %832 = vmatprep.subr.bf16.mxu0 0
        %833 = vmatpush1.bf16.msra.mxu0 0
        %834 = vmatprep.subr.bf16.mxu0 0
        %835 = vmatpush1.bf16.msra.mxu0 0
        %836 = vmatprep.subr.bf16.mxu0 0
        %837 = vmatpush1.bf16.msra.mxu0 0
        %838 = vmatprep.subr.bf16.mxu0 0
        %839 = vmatpush1.bf16.msra.mxu0 0
        %840 = vmatprep.subr.bf16.mxu0 0
        %841 = vmatpush1.bf16.msra.mxu0 0
        %842 = vmatprep.mubr.bf16.mxu0 0
        %843 = vmatmul.mubr.bf16.gmra.mrb[0].mxu0 %v808
        %v844 = vpop.f32.mrb[0].mxu0
        %v845 = vadd.f32 0.0, %v844
        %v846 = vpop.f32.mrb[0].mxu0
        %v847 = vpop.f32.mrb[0].mxu0
        %v848 = vadd.f32 0.0, %v847
        %v849 = vpop.f32.mrb[0].mxu0
        %850 = vdwg.mxu0
        %852 = vrot.lane.b32.xlu0 %v725, 120
        %v853 = vpop.permute.xlu0 %852
        %854 = vrot.lane.b32.xlu0 %v726, 88
        %v855 = vpop.permute.xlu0 %854
        %v857 = vsel %vm730, %v853, 0
        %v860 = vsel %vm730, %v855, 0
        %862 = vmatprep.subr.bf16.mxu0 0
        %863 = vmatpush1.bf16.xpose.msra.mxu0 %v860
        %864 = vmatprep.subr.bf16.mxu0 0
        %865 = vmatpush1.bf16.xpose.msra.mxu0 0
        %866 = vmatprep.subr.bf16.mxu0 0
        %867 = vmatpush1.bf16.xpose.msra.mxu0 0
        %868 = vmatprep.subr.bf16.mxu0 0
        %869 = vmatpush1.bf16.xpose.msra.mxu0 0
        %870 = vmatprep.subr.bf16.mxu0 0
        %871 = vmatpush1.bf16.xpose.msra.mxu0 0
        %872 = vmatprep.subr.bf16.mxu0 0
        %873 = vmatpush1.bf16.xpose.msra.mxu0 0
        %874 = vmatprep.subr.bf16.mxu0 0
        %875 = vmatpush1.bf16.xpose.msra.mxu0 0
        %876 = vmatprep.subr.bf16.mxu0 0
        %877 = vmatpush1.bf16.xpose.msra.mxu0 0
        %878 = vmatprep.subr.bf16.mxu0 0
        %879 = vmatpush1.bf16.xpose.msra.mxu0 0
        %880 = vmatprep.subr.bf16.mxu0 0
        %881 = vmatpush1.bf16.xpose.msra.mxu0 0
        %882 = vmatprep.subr.bf16.mxu0 0
        %883 = vmatpush1.bf16.xpose.msra.mxu0 0
        %884 = vmatprep.subr.bf16.mxu0 0
        %885 = vmatpush1.bf16.xpose.msra.mxu0 0
        %886 = vmatprep.subr.bf16.mxu0 0
        %887 = vmatpush1.bf16.xpose.msra.mxu0 0
        %888 = vmatprep.subr.bf16.mxu0 0
        %889 = vmatpush1.bf16.xpose.msra.mxu0 0
        %890 = vmatprep.subr.bf16.mxu0 0
        %891 = vmatpush1.bf16.xpose.msra.mxu0 0
        %892 = vmatprep.subr.bf16.mxu0 0
        %893 = vmatpush1.bf16.xpose.msra.mxu0 0
        %894 = vmatprep.mubr.bf16.mxu0 0
        %895 = vmatmul.mubr.bf16.gmra.mrb[0].mxu0 %v857
        %v896 = vpop.f32.mrb[0].mxu0
        %v897 = vadd.f32 %v627, %v896
        %v898 = vpop.f32.mrb[0].mxu0
        %v899 = vpop.f32.mrb[0].mxu0
        %v900 = vadd.f32 %v628, %v899
        %v901 = vpop.f32.mrb[0].mxu0
        %902 = vdwg.mxu0
        %v903 = vsel %vm778, %v897, -inf
        %904 = vmax.xlane.f32.xlu0 %v903
        %v905 = vpop.xlane.xlu0 %904
        %v906 = vsel %vm778, %v900, -inf
        %907 = vmax.xlane.f32.xlu0 %v906
        %v908 = vpop.xlane.xlu0 %907
        %v909 = vsub.f32 %v897, %v905
        %v910 = vsub.f32 %v900, %v908
        %v911 = vmul.f32 %v909, 1.442695
        %v912 = vpow.pop %v911
        %v913 = vmul.f32 %v910, 1.442695
        %v914 = vpow.pop %v913
        %v915 = vsel %vm778, %v912, 0.0
        %916 = vadd.xlane.f32.xlu0 %v915
        %v917 = vpop.xlane.xlu0 %916
        %v918 = vsel %vm778, %v914, 0.0
        %919 = vadd.xlane.f32.xlu0 %v918
        %v920 = vpop.xlane.xlu0 %919
        %v921 = vrcp.pop %v917
        %v922 = vrcp.pop %v920
        %v923 = vmul.f32 %v912, %v921
        %v924 = vmul.f32 %v914, %v922
        %v925 = vpack.c.bf16 %v924, %v923
        %926 = vrot.lane.b32.xlu0 %v802, 56
        %v927 = vpop.permute.xlu0 %926
        %v930 = vsel %vm778, %v925, 0
        %932 = vmatprep.subr.bf16.mxu0 0
        %933 = vmatpush1.bf16.msra.mxu0 %v927
        %934 = vmatprep.subr.bf16.mxu0 0
        %935 = vmatpush1.bf16.msra.mxu0 0
        %936 = vmatprep.subr.bf16.mxu0 0
        %937 = vmatpush1.bf16.msra.mxu0 0
        %938 = vmatprep.subr.bf16.mxu0 0
        %939 = vmatpush1.bf16.msra.mxu0 0
        %940 = vmatprep.subr.bf16.mxu0 0
        %941 = vmatpush1.bf16.msra.mxu0 0
        %942 = vmatprep.subr.bf16.mxu0 0
        %943 = vmatpush1.bf16.msra.mxu0 0
        %944 = vmatprep.subr.bf16.mxu0 0
        %945 = vmatpush1.bf16.msra.mxu0 0
        %946 = vmatprep.subr.bf16.mxu0 0
        %947 = vmatpush1.bf16.msra.mxu0 0
        %948 = vmatprep.subr.bf16.mxu0 0
        %949 = vmatpush1.bf16.msra.mxu0 0
        %950 = vmatprep.subr.bf16.mxu0 0
        %951 = vmatpush1.bf16.msra.mxu0 0
        %952 = vmatprep.subr.bf16.mxu0 0
        %953 = vmatpush1.bf16.msra.mxu0 0
        %954 = vmatprep.subr.bf16.mxu0 0
        %955 = vmatpush1.bf16.msra.mxu0 0
        %956 = vmatprep.subr.bf16.mxu0 0
        %957 = vmatpush1.bf16.msra.mxu0 0
        %958 = vmatprep.subr.bf16.mxu0 0
        %959 = vmatpush1.bf16.msra.mxu0 0
        %960 = vmatprep.subr.bf16.mxu0 0
        %961 = vmatpush1.bf16.msra.mxu0 0
        %962 = vmatprep.subr.bf16.mxu0 0
        %963 = vmatpush1.bf16.msra.mxu0 0
        %964 = vmatprep.mubr.bf16.mxu0 0
        %965 = vmatmul.mubr.bf16.gmra.mrb[0].mxu0 %v930
        %v966 = vpop.f32.mrb[0].mxu0
        %v967 = vadd.f32 0.0, %v966
        %v968 = vpop.f32.mrb[0].mxu0
        %v969 = vpop.f32.mrb[0].mxu0
        %v970 = vadd.f32 0.0, %v969
        %v971 = vpop.f32.mrb[0].mxu0
        %972 = vdwg.mxu0
        %973 = vrot.lane.b32.xlu0 %v725, 112
        %v974 = vpop.permute.xlu0 %973
        %975 = vrot.lane.b32.xlu0 %v726, 80
        %v976 = vpop.permute.xlu0 %975
        %v978 = vsel %vm730, %v974, 0
        %v981 = vsel %vm730, %v976, 0
        %983 = vmatprep.subr.bf16.mxu0 0
        %984 = vmatpush1.bf16.xpose.msra.mxu0 %v981
        %985 = vmatprep.subr.bf16.mxu0 0
        %986 = vmatpush1.bf16.xpose.msra.mxu0 0
        %987 = vmatprep.subr.bf16.mxu0 0
        %988 = vmatpush1.bf16.xpose.msra.mxu0 0
        %989 = vmatprep.subr.bf16.mxu0 0
        %990 = vmatpush1.bf16.xpose.msra.mxu0 0
        %991 = vmatprep.subr.bf16.mxu0 0
        %992 = vmatpush1.bf16.xpose.msra.mxu0 0
        %993 = vmatprep.subr.bf16.mxu0 0
        %994 = vmatpush1.bf16.xpose.msra.mxu0 0
        %995 = vmatprep.subr.bf16.mxu0 0
        %996 = vmatpush1.bf16.xpose.msra.mxu0 0
        %997 = vmatprep.subr.bf16.mxu0 0
        %998 = vmatpush1.bf16.xpose.msra.mxu0 0
        %999 = vmatprep.subr.bf16.mxu0 0
        %1000 = vmatpush1.bf16.xpose.msra.mxu0 0
        %1001 = vmatprep.subr.bf16.mxu0 0
        %1002 = vmatpush1.bf16.xpose.msra.mxu0 0
        %1003 = vmatprep.subr.bf16.mxu0 0
        %1004 = vmatpush1.bf16.xpose.msra.mxu0 0
        %1005 = vmatprep.subr.bf16.mxu0 0
        %1006 = vmatpush1.bf16.xpose.msra.mxu0 0
        %1007 = vmatprep.subr.bf16.mxu0 0
        %1008 = vmatpush1.bf16.xpose.msra.mxu0 0
        %1009 = vmatprep.subr.bf16.mxu0 0
        %1010 = vmatpush1.bf16.xpose.msra.mxu0 0
        %1011 = vmatprep.subr.bf16.mxu0 0
        %1012 = vmatpush1.bf16.xpose.msra.mxu0 0
        %1013 = vmatprep.subr.bf16.mxu0 0
        %1014 = vmatpush1.bf16.xpose.msra.mxu0 0
        %1015 = vmatprep.mubr.bf16.mxu0 0
        %1016 = vmatmul.mubr.bf16.gmra.mrb[0].mxu0 %v978
        %v1017 = vpop.f32.mrb[0].mxu0
        %v1018 = vadd.f32 %v627, %v1017
        %v1019 = vpop.f32.mrb[0].mxu0
        %v1020 = vpop.f32.mrb[0].mxu0
        %v1021 = vadd.f32 %v628, %v1020
        %v1022 = vpop.f32.mrb[0].mxu0
        %1023 = vdwg.mxu0
        %v1024 = vsel %vm778, %v1018, -inf
        %1025 = vmax.xlane.f32.xlu0 %v1024
        %v1026 = vpop.xlane.xlu0 %1025
        %v1027 = vsel %vm778, %v1021, -inf
        %1028 = vmax.xlane.f32.xlu0 %v1027
        %v1029 = vpop.xlane.xlu0 %1028
        %v1030 = vsub.f32 %v1018, %v1026
        %v1031 = vsub.f32 %v1021, %v1029
        %v1032 = vmul.f32 %v1030, 1.442695
        %v1033 = vpow.pop %v1032
        %v1034 = vmul.f32 %v1031, 1.442695
        %v1035 = vpow.pop %v1034
        %v1036 = vsel %vm778, %v1033, 0.0
        %1037 = vadd.xlane.f32.xlu0 %v1036
        %v1038 = vpop.xlane.xlu0 %1037
        %v1039 = vsel %vm778, %v1035, 0.0
        %1040 = vadd.xlane.f32.xlu0 %v1039
        %v1041 = vpop.xlane.xlu0 %1040
        %v1042 = vrcp.pop %v1038
        %v1043 = vrcp.pop %v1041
        %v1044 = vmul.f32 %v1033, %v1042
        %v1045 = vmul.f32 %v1035, %v1043
        %v1046 = vpack.c.bf16 %v1045, %v1044
        %1047 = vrot.lane.b32.xlu0 %v802, 48
        %v1048 = vpop.permute.xlu0 %1047
        %v1051 = vsel %vm778, %v1046, 0
        %1053 = vmatprep.subr.bf16.mxu0 0
        %1054 = vmatpush1.bf16.msra.mxu0 %v1048
        %1055 = vmatprep.subr.bf16.mxu0 0
        %1056 = vmatpush1.bf16.msra.mxu0 0
        %1057 = vmatprep.subr.bf16.mxu0 0
        %1058 = vmatpush1.bf16.msra.mxu0 0
        %1059 = vmatprep.subr.bf16.mxu0 0
        %1060 = vmatpush1.bf16.msra.mxu0 0
        %1061 = vmatprep.subr.bf16.mxu0 0
        %1062 = vmatpush1.bf16.msra.mxu0 0
        %1063 = vmatprep.subr.bf16.mxu0 0
        %1064 = vmatpush1.bf16.msra.mxu0 0
        %1065 = vmatprep.subr.bf16.mxu0 0
        %1066 = vmatpush1.bf16.msra.mxu0 0
        %1067 = vmatprep.subr.bf16.mxu0 0
        %1068 = vmatpush1.bf16.msra.mxu0 0
        %1069 = vmatprep.subr.bf16.mxu0 0
        %1070 = vmatpush1.bf16.msra.mxu0 0
        %1071 = vmatprep.subr.bf16.mxu0 0
        %1072 = vmatpush1.bf16.msra.mxu0 0
        %1073 = vmatprep.subr.bf16.mxu0 0
        %1074 = vmatpush1.bf16.msra.mxu0 0
        %1075 = vmatprep.subr.bf16.mxu0 0
        %1076 = vmatpush1.bf16.msra.mxu0 0
        %1077 = vmatprep.subr.bf16.mxu0 0
        %1078 = vmatpush1.bf16.msra.mxu0 0
        %1079 = vmatprep.subr.bf16.mxu0 0
        %1080 = vmatpush1.bf16.msra.mxu0 0
        %1081 = vmatprep.subr.bf16.mxu0 0
        %1082 = vmatpush1.bf16.msra.mxu0 0
        %1083 = vmatprep.subr.bf16.mxu0 0
        %1084 = vmatpush1.bf16.msra.mxu0 0
        %1085 = vmatprep.mubr.bf16.mxu0 0
        %1086 = vmatmul.mubr.bf16.gmra.mrb[0].mxu0 %v1051
        %v1087 = vpop.f32.mrb[0].mxu0
        %v1088 = vadd.f32 0.0, %v1087
        %v1089 = vpop.f32.mrb[0].mxu0
        %v1090 = vpop.f32.mrb[0].mxu0
        %v1091 = vadd.f32 0.0, %v1090
        %v1092 = vpop.f32.mrb[0].mxu0
        %1093 = vdwg.mxu0
        %1094 = vrot.lane.b32.xlu0 %v725, 104
        %v1095 = vpop.permute.xlu0 %1094
        %1096 = vrot.lane.b32.xlu0 %v726, 72
        %v1097 = vpop.permute.xlu0 %1096
        %v1099 = vsel %vm730, %v1095, 0
        %v1102 = vsel %vm730, %v1097, 0
        %1104 = vmatprep.subr.bf16.mxu0 0
        %1105 = vmatpush1.bf16.xpose.msra.mxu0 %v1102
        %1106 = vmatprep.subr.bf16.mxu0 0
        %1107 = vmatpush1.bf16.xpose.msra.mxu0 0
        %1108 = vmatprep.subr.bf16.mxu0 0
        %1109 = vmatpush1.bf16.xpose.msra.mxu0 0
        %1110 = vmatprep.subr.bf16.mxu0 0
        %1111 = vmatpush1.bf16.xpose.msra.mxu0 0
        %1112 = vmatprep.subr.bf16.mxu0 0
        %1113 = vmatpush1.bf16.xpose.msra.mxu0 0
        %1114 = vmatprep.subr.bf16.mxu0 0
        %1115 = vmatpush1.bf16.xpose.msra.mxu0 0
        %1116 = vmatprep.subr.bf16.mxu0 0
        %1117 = vmatpush1.bf16.xpose.msra.mxu0 0
        %1118 = vmatprep.subr.bf16.mxu0 0
        %1119 = vmatpush1.bf16.xpose.msra.mxu0 0
        %1120 = vmatprep.subr.bf16.mxu0 0
        %1121 = vmatpush1.bf16.xpose.msra.mxu0 0
        %1122 = vmatprep.subr.bf16.mxu0 0
        %1123 = vmatpush1.bf16.xpose.msra.mxu0 0
        %1124 = vmatprep.subr.bf16.mxu0 0
        %1125 = vmatpush1.bf16.xpose.msra.mxu0 0
        %1126 = vmatprep.subr.bf16.mxu0 0
        %1127 = vmatpush1.bf16.xpose.msra.mxu0 0
        %1128 = vmatprep.subr.bf16.mxu0 0
        %1129 = vmatpush1.bf16.xpose.msra.mxu0 0
        %1130 = vmatprep.subr.bf16.mxu0 0
        %1131 = vmatpush1.bf16.xpose.msra.mxu0 0
        %1132 = vmatprep.subr.bf16.mxu0 0
        %1133 = vmatpush1.bf16.xpose.msra.mxu0 0
        %1134 = vmatprep.subr.bf16.mxu0 0
        %1135 = vmatpush1.bf16.xpose.msra.mxu0 0
        %1136 = vmatprep.mubr.bf16.mxu0 0
        %1137 = vmatmul.mubr.bf16.gmra.mrb[0].mxu0 %v1099
        %v1138 = vpop.f32.mrb[0].mxu0
        %v1139 = vadd.f32 %v627, %v1138
        %v1140 = vpop.f32.mrb[0].mxu0
        %v1141 = vpop.f32.mrb[0].mxu0
        %v1142 = vadd.f32 %v628, %v1141
        %v1143 = vpop.f32.mrb[0].mxu0
        %1144 = vdwg.mxu0
        %v1145 = vsel %vm778, %v1139, -inf
        %1146 = vmax.xlane.f32.xlu0 %v1145
        %v1147 = vpop.xlane.xlu0 %1146
        %v1148 = vsel %vm778, %v1142, -inf
        %1149 = vmax.xlane.f32.xlu0 %v1148
        %v1150 = vpop.xlane.xlu0 %1149
        %v1151 = vsub.f32 %v1139, %v1147
        %v1152 = vsub.f32 %v1142, %v1150
        %v1153 = vmul.f32 %v1151, 1.442695
        %v1154 = vpow.pop %v1153
        %v1155 = vmul.f32 %v1152, 1.442695
        %v1156 = vpow.pop %v1155
        %v1157 = vsel %vm778, %v1154, 0.0
        %1158 = vadd.xlane.f32.xlu0 %v1157
        %v1159 = vpop.xlane.xlu0 %1158
        %v1160 = vsel %vm778, %v1156, 0.0
        %1161 = vadd.xlane.f32.xlu0 %v1160
        %v1162 = vpop.xlane.xlu0 %1161
        %v1163 = vrcp.pop %v1159
        %v1164 = vrcp.pop %v1162
        %v1165 = vmul.f32 %v1154, %v1163
        %v1166 = vmul.f32 %v1156, %v1164
        %v1167 = vpack.c.bf16 %v1166, %v1165
        %1168 = vrot.lane.b32.xlu0 %v802, 40
        %v1169 = vpop.permute.xlu0 %1168
        %v1172 = vsel %vm778, %v1167, 0
        %1174 = vmatprep.subr.bf16.mxu0 0
        %1175 = vmatpush1.bf16.msra.mxu0 %v1169
        %1176 = vmatprep.subr.bf16.mxu0 0
        %1177 = vmatpush1.bf16.msra.mxu0 0
        %1178 = vmatprep.subr.bf16.mxu0 0
        %1179 = vmatpush1.bf16.msra.mxu0 0
        %1180 = vmatprep.subr.bf16.mxu0 0
        %1181 = vmatpush1.bf16.msra.mxu0 0
        %1182 = vmatprep.subr.bf16.mxu0 0
        %1183 = vmatpush1.bf16.msra.mxu0 0
        %1184 = vmatprep.subr.bf16.mxu0 0
        %1185 = vmatpush1.bf16.msra.mxu0 0
        %1186 = vmatprep.subr.bf16.mxu0 0
        %1187 = vmatpush1.bf16.msra.mxu0 0
        %1188 = vmatprep.subr.bf16.mxu0 0
        %1189 = vmatpush1.bf16.msra.mxu0 0
        %1190 = vmatprep.subr.bf16.mxu0 0
        %1191 = vmatpush1.bf16.msra.mxu0 0
        %1192 = vmatprep.subr.bf16.mxu0 0
        %1193 = vmatpush1.bf16.msra.mxu0 0
        %1194 = vmatprep.subr.bf16.mxu0 0
        %1195 = vmatpush1.bf16.msra.mxu0 0
        %1196 = vmatprep.subr.bf16.mxu0 0
        %1197 = vmatpush1.bf16.msra.mxu0 0
        %1198 = vmatprep.subr.bf16.mxu0 0
        %1199 = vmatpush1.bf16.msra.mxu0 0
        %1200 = vmatprep.subr.bf16.mxu0 0
        %1201 = vmatpush1.bf16.msra.mxu0 0
        %1202 = vmatprep.subr.bf16.mxu0 0
        %1203 = vmatpush1.bf16.msra.mxu0 0
        %1204 = vmatprep.subr.bf16.mxu0 0
        %1205 = vmatpush1.bf16.msra.mxu0 0
        %1206 = vmatprep.mubr.bf16.mxu0 0
        %1207 = vmatmul.mubr.bf16.gmra.mrb[0].mxu0 %v1172
        %v1208 = vpop.f32.mrb[0].mxu0
        %v1209 = vadd.f32 0.0, %v1208
        %v1210 = vpop.f32.mrb[0].mxu0
        %v1211 = vpop.f32.mrb[0].mxu0
        %v1212 = vadd.f32 0.0, %v1211
        %v1213 = vpop.f32.mrb[0].mxu0
        %1214 = vdwg.mxu0
        %1217 = vrot.lane.b32.xlu0 %v967, 8
        %v1218 = vpop.permute.xlu0 %1217
        %1219 = vrot.lane.b32.xlu0 %v970, 8
        %v1220 = vpop.permute.xlu0 %1219
        %1225 = vrot.lane.b32.xlu0 %v1088, 16
        %v1226 = vpop.permute.xlu0 %1225
        %1227 = vrot.lane.b32.xlu0 %v1091, 16
        %v1228 = vpop.permute.xlu0 %1227
        %1233 = vrot.lane.b32.xlu0 %v1209, 24
        %v1234 = vpop.permute.xlu0 %1233
        %1235 = vrot.lane.b32.xlu0 %v1212, 24
        %v1236 = vpop.permute.xlu0 %1235
        %v1239 = vsel %vm730, %v845, %v1218
        %v1240 = vsel %vm730, %v848, %v1220
        %v1241 = vsel %vm778, %v1239, %v1226
        %v1242 = vsel %vm778, %v1240, %v1228
        %vm1243 = vcmask 195584
        %v1244 = vsel %vm1243, %v1241, %v1234
        %v1245 = vsel %vm1243, %v1242, %v1236
        %v1246 = vld [vmem:[%s576] sm:$0xf]
        %v1247 = vld [vmem:[%s576 + $0x4] sm:$0xf]
        %v1248 = vld [vmem:[%s576 + $0x8] sm:$0xf]
        %v1249 = vld [vmem:[%s576 + $0xc] sm:$0xf]
        %v1250 = vpack.c.bf16 %v1245, %v1244
        %v1251 = vlaneseq
        %v1252 = vshrl.u32 %v1251, 7
        %v1253 = vsub.s32 3, %v1252
        %v1254 = vrot.slane %v633, %v1253
        %v1259 = vunpack.c.l.b16 %v1246
        %v1260 = vunpack.c.l.b16 %v1247
        %v1261 = vunpack.c.l.b16 %v1248
        %v1262 = vunpack.c.l.b16 %v1249
        %v1263 = vpack.c.b16 %v1260, %v1259
        %v1264 = vpack.c.b16 %v1262, %v1261
        %v1268 = vsel %vm654, %v1250, 0
        %1270 = vmatprep.subr.bf16.mxu0 0
        %1271 = vmatpush1.bf16.msra.mxu0 %v1263
        %1272 = vmatprep.subr.bf16.mxu0 0
        %1273 = vmatpush1.bf16.msra.mxu0 %v1264
        %1274 = vmatprep.subr.bf16.mxu0 0
        %1275 = vmatpush1.bf16.msra.mxu0 0
        %1276 = vmatprep.subr.bf16.mxu0 0
        %1277 = vmatpush1.bf16.msra.mxu0 0
        %1278 = vmatprep.subr.bf16.mxu0 0
        %1279 = vmatpush1.bf16.msra.mxu0 0
        %1280 = vmatprep.subr.bf16.mxu0 0
        %1281 = vmatpush1.bf16.msra.mxu0 0
        %1282 = vmatprep.subr.bf16.mxu0 0
        %1283 = vmatpush1.bf16.msra.mxu0 0
        %1284 = vmatprep.subr.bf16.mxu0 0
        %1285 = vmatpush1.bf16.msra.mxu0 0
        %1286 = vmatprep.subr.bf16.mxu0 0
        %1287 = vmatpush1.bf16.msra.mxu0 0
        %1288 = vmatprep.subr.bf16.mxu0 0
        %1289 = vmatpush1.bf16.msra.mxu0 0
        %1290 = vmatprep.subr.bf16.mxu0 0
        %1291 = vmatpush1.bf16.msra.mxu0 0
        %1292 = vmatprep.subr.bf16.mxu0 0
        %1293 = vmatpush1.bf16.msra.mxu0 0
        %1294 = vmatprep.subr.bf16.mxu0 0
        %1295 = vmatpush1.bf16.msra.mxu0 0
        %1296 = vmatprep.subr.bf16.mxu0 0
        %1297 = vmatpush1.bf16.msra.mxu0 0
        %1298 = vmatprep.subr.bf16.mxu0 0
        %1299 = vmatpush1.bf16.msra.mxu0 0
        %1300 = vmatprep.subr.bf16.mxu0 0
        %1301 = vmatpush1.bf16.msra.mxu0 0
        %1302 = vmatprep.mubr.bf16.mxu0 0
        %1303 = vmatmul.mubr.bf16.gmra.mrb[0].mxu0 %v1268
        %v1304 = vpop.f32.mrb[0].mxu0
        %v1305 = vadd.f32 %v1254, %v1304
        %v1306 = vpop.f32.mrb[0].mxu0
        %v1307 = vpop.f32.mrb[0].mxu0
        %v1308 = vadd.f32 %v1254, %v1307
        %v1309 = vpop.f32.mrb[0].mxu0
        %1310 = vdwg.mxu0
        %v1311 = vadd.f32 %v621, %v1305
        %v1312 = vadd.f32 %v622, %v1308
        %v1313 = vsel %vm654, %v1311, 0.0
        %1314 = vadd.xlane.f32.xlu0 %v1313
        %v1315 = vpop.xlane.xlu0 %1314
        %v1316 = vsel %vm654, %v1312, 0.0
        %1317 = vadd.xlane.f32.xlu0 %v1316
        %v1318 = vpop.xlane.xlu0 %1317
        %v1319 = vrcp.pop 32.0
        %v1320 = vmul.f32 %v1315, %v1319
        %v1321 = vmul.f32 %v1318, %v1319
        %v1322 = vsub.f32 %v1311, %v1320
        %v1323 = vsub.f32 %v1312, %v1321
        %v1324 = vmul.f32 %v1322, %v1322
        %v1325 = vmul.f32 %v1323, %v1323
        %v1326 = vsel %vm654, %v1324, 0.0
        %1327 = vadd.xlane.f32.xlu0 %v1326
        %v1328 = vpop.xlane.xlu0 %1327
        %v1329 = vsel %vm654, %v1325, 0.0
        %1330 = vadd.xlane.f32.xlu0 %v1329
        %v1331 = vpop.xlane.xlu0 %1330
        %v1332 = vmul.f32 %v1328, %v1319
        %v1333 = vmul.f32 %v1331, %v1319
        %v1334 = vadd.f32 %v1332, 1e-05
        %v1335 = vadd.f32 %v1333, 1e-05
        %v1336 = vrsqrt.pop %v1334
        %v1337 = vrsqrt.pop %v1335
        %v1338 = vmul.f32 %v1322, %v1336
        %v1339 = vmul.f32 %v1323, %v1337
        %v1340 = vlaneseq
        %v1341 = vshrl.u32 %v1340, 7
        %v1342 = vsub.s32 1, %v1341
        %v1343 = vrot.slane %v634, %v1342
        %v1344 = vmul.f32 %v1338, %v1343
        %v1345 = vmul.f32 %v1339, %v1343
        %v1346 = vlaneseq
        %v1347 = vshrl.u32 %v1346, 7
        %v1348 = vsub.s32 2, %v1347
        %v1349 = vrot.slane %v634, %v1348
        %v1350 = vadd.f32 %v1344, %v1349
        %v1351 = vadd.f32 %v1345, %v1349
        %v1352 = vld [vmem:[%s581] sm:$0xf]
        %v1353 = vld [vmem:[%s581 + $0x4] sm:$0xf]
        %v1354 = vld [vmem:[%s581 + $0x8] sm:$0xf]
        %v1355 = vld [vmem:[%s581 + $0xc] sm:$0xf]
        %v1356 = vpack.c.bf16 %v1351, %v1350
        %v1357 = vlaneseq
        %v1358 = vshrl.u32 %v1357, 7
        %v1359 = vsub.s32 4, %v1358
        %v1360 = vrot.slane %v633, %v1359
        %v1365 = vunpack.c.l.b16 %v1352
        %v1366 = vunpack.c.l.b16 %v1353
        %v1367 = vunpack.c.l.b16 %v1354
        %v1368 = vunpack.c.l.b16 %v1355
        %v1369 = vpack.c.b16 %v1366, %v1365
        %v1370 = vpack.c.b16 %v1368, %v1367
        %v1374 = vsel %vm654, %v1356, 0
        %1376 = vmatprep.subr.bf16.mxu0 0
        %1377 = vmatpush1.bf16.msra.mxu0 %v1369
        %1378 = vmatprep.subr.bf16.mxu0 0
        %1379 = vmatpush1.bf16.msra.mxu0 %v1370
        %1380 = vmatprep.subr.bf16.mxu0 0
        %1381 = vmatpush1.bf16.msra.mxu0 0
        %1382 = vmatprep.subr.bf16.mxu0 0
        %1383 = vmatpush1.bf16.msra.mxu0 0
        %1384 = vmatprep.subr.bf16.mxu0 0
        %1385 = vmatpush1.bf16.msra.mxu0 0
        %1386 = vmatprep.subr.bf16.mxu0 0
        %1387 = vmatpush1.bf16.msra.mxu0 0
        %1388 = vmatprep.subr.bf16.mxu0 0
        %1389 = vmatpush1.bf16.msra.mxu0 0
        %1390 = vmatprep.subr.bf16.mxu0 0
        %1391 = vmatpush1.bf16.msra.mxu0 0
        %1392 = vmatprep.subr.bf16.mxu0 0
        %1393 = vmatpush1.bf16.msra.mxu0 0
        %1394 = vmatprep.subr.bf16.mxu0 0
        %1395 = vmatpush1.bf16.msra.mxu0 0
        %1396 = vmatprep.subr.bf16.mxu0 0
        %1397 = vmatpush1.bf16.msra.mxu0 0
        %1398 = vmatprep.subr.bf16.mxu0 0
        %1399 = vmatpush1.bf16.msra.mxu0 0
        %1400 = vmatprep.subr.bf16.mxu0 0
        %1401 = vmatpush1.bf16.msra.mxu0 0
        %1402 = vmatprep.subr.bf16.mxu0 0
        %1403 = vmatpush1.bf16.msra.mxu0 0
        %1404 = vmatprep.subr.bf16.mxu0 0
        %1405 = vmatpush1.bf16.msra.mxu0 0
        %1406 = vmatprep.subr.bf16.mxu0 0
        %1407 = vmatpush1.bf16.msra.mxu0 0
        %1408 = vmatprep.mubr.bf16.mxu0 0
        %1409 = vmatmul.mubr.bf16.gmra.mrb[0].mxu0 %v1374
        %v1410 = vpop.f32.mrb[0].mxu0
        %v1411 = vadd.f32 %v1360, %v1410
        %v1412 = vpop.f32.mrb[0].mxu0
        %v1413 = vpop.f32.mrb[0].mxu0
        %v1414 = vadd.f32 %v1360, %v1413
        %v1415 = vpop.f32.mrb[0].mxu0
        %1416 = vdwg.mxu0
        %v1417 = vld [vmem:[%s586] sm:$0xf]
        %v1418 = vld [vmem:[%s586 + $0x4] sm:$0xf]
        %v1419 = vld [vmem:[%s586 + $0x8] sm:$0xf]
        %v1420 = vld [vmem:[%s586 + $0xc] sm:$0xf]
        %v1425 = vunpack.c.l.b16 %v623
        %v1426 = vunpack.c.l.b16 %v624
        %v1427 = vunpack.c.l.b16 %v625
        %v1428 = vunpack.c.l.b16 %v626
        %v1429 = vpack.c.b16 %v1426, %v1425
        %v1430 = vpack.c.b16 %v1428, %v1427
        %v1435 = vunpack.c.l.b16 %v1417
        %v1436 = vunpack.c.l.b16 %v1418
        %v1437 = vunpack.c.l.b16 %v1419
        %v1438 = vunpack.c.l.b16 %v1420
        %v1439 = vpack.c.b16 %v1436, %v1435
        %v1440 = vpack.c.b16 %v1438, %v1437
        %v1444 = vsel %vm654, %v1429, 0
        %v1447 = vsel %vm654, %v1430, 0
        %1449 = vmatprep.subr.bf16.mxu0 0
        %1450 = vmatpush1.bf16.msra.mxu0 %v1439
        %1451 = vmatprep.subr.bf16.mxu0 0
        %1452 = vmatpush1.bf16.msra.mxu0 %v1440
        %1453 = vmatprep.subr.bf16.mxu0 0
        %1454 = vmatpush1.bf16.msra.mxu0 0
        %1455 = vmatprep.subr.bf16.mxu0 0
        %1456 = vmatpush1.bf16.msra.mxu0 0
        %1457 = vmatprep.subr.bf16.mxu0 0
        %1458 = vmatpush1.bf16.msra.mxu0 0
        %1459 = vmatprep.subr.bf16.mxu0 0
        %1460 = vmatpush1.bf16.msra.mxu0 0
        %1461 = vmatprep.subr.bf16.mxu0 0
        %1462 = vmatpush1.bf16.msra.mxu0 0
        %1463 = vmatprep.subr.bf16.mxu0 0
        %1464 = vmatpush1.bf16.msra.mxu0 0
        %1465 = vmatprep.subr.bf16.mxu0 0
        %1466 = vmatpush1.bf16.msra.mxu0 0
        %1467 = vmatprep.subr.bf16.mxu0 0
        %1468 = vmatpush1.bf16.msra.mxu0 0
        %1469 = vmatprep.subr.bf16.mxu0 0
        %1470 = vmatpush1.bf16.msra.mxu0 0
        %1471 = vmatprep.subr.bf16.mxu0 0
        %1472 = vmatpush1.bf16.msra.mxu0 0
        %1473 = vmatprep.subr.bf16.mxu0 0
        %1474 = vmatpush1.bf16.msra.mxu0 0
        %1475 = vmatprep.subr.bf16.mxu0 0
        %1476 = vmatpush1.bf16.msra.mxu0 0
        %1477 = vmatprep.subr.bf16.mxu0 0
        %1478 = vmatpush1.bf16.msra.mxu0 0
        %1479 = vmatprep.subr.bf16.mxu0 0
        %1480 = vmatpush1.bf16.msra.mxu0 0
        %1481 = vmatprep.mubr.bf16.mxu0 0
        %1482 = vmatmul.mubr.bf16.gmra.mrb[0].mxu0 %v1444
        %v1483 = vpop.f32.mrb[0].mxu0
        %v1484 = vadd.f32 0.0, %v1483
        %v1485 = vpop.f32.mrb[0].mxu0
        %v1486 = vpop.f32.mrb[0].mxu0
        %v1487 = vadd.f32 0.0, %v1486
        %v1488 = vpop.f32.mrb[0].mxu0
        %1489 = vmatprep.mubr.bf16.mxu0 0
        %1490 = vmatmul.mubr.bf16.gmra.mrb[0].mxu0 %v1447
        %v1491 = vpop.f32.mrb[0].mxu0
        %v1492 = vadd.f32 0.0, %v1491
        %v1493 = vpop.f32.mrb[0].mxu0
        %v1494 = vpop.f32.mrb[0].mxu0
        %v1495 = vadd.f32 0.0, %v1494
        %v1496 = vpop.f32.mrb[0].mxu0
        %1497 = vdwg.mxu0
        %v1498 = vlaneseq
        %v1499 = vshrl.u32 %v1498, 7
        %v1500 = vsub.s32 5, %v1499
        %v1501 = vrot.slane %v633, %v1500
        %v1502 = vadd.f32 %v1484, %v1501
        %v1503 = vadd.f32 %v1487, %v1501
        %v1504 = vadd.f32 %v1492, %v1501
        %v1505 = vadd.f32 %v1495, %v1501
        %v1506 = vlaneseq
        %v1507 = vshrl.u32 %v1506, 7
        %v1508 = vsub.s32 6, %v1507
        %v1509 = vrot.slane %v633, %v1508
        %1511 = vrot.lane.b32.xlu0 %v1509, 32
        %v1512 = vpop.permute.xlu0 %1511
        %v1514 = vadd.f32 %v1484, %v1512
        %v1515 = vadd.f32 %v1487, %v1512
        %v1516 = vadd.f32 %v1492, %v1512
        %v1517 = vadd.f32 %v1495, %v1512
        %v1518 = vpack.c.bf16 %v1414, %v1411
        %v1519 = vpack.c.bf16 %v1503, %v1502
        %v1520 = vpack.c.bf16 %v1505, %v1504
        %v1522 = vsel %vm730, %v1518, 0
        %v1525 = vsel %vm730, %v1519, 0
        %v1528 = vsel %vm730, %v1520, 0
        %1530 = vmatprep.subr.bf16.mxu0 0
        %1531 = vmatpush1.bf16.xpose.msra.mxu0 %v1525
        %1532 = vmatprep.subr.bf16.mxu0 0
        %1533 = vmatpush1.bf16.xpose.msra.mxu0 %v1528
        %1534 = vmatprep.subr.bf16.mxu0 0
        %1535 = vmatpush1.bf16.xpose.msra.mxu0 0
        %1536 = vmatprep.subr.bf16.mxu0 0
        %1537 = vmatpush1.bf16.xpose.msra.mxu0 0
        %1538 = vmatprep.subr.bf16.mxu0 0
        %1539 = vmatpush1.bf16.xpose.msra.mxu0 0
        %1540 = vmatprep.subr.bf16.mxu0 0
        %1541 = vmatpush1.bf16.xpose.msra.mxu0 0
        %1542 = vmatprep.subr.bf16.mxu0 0
        %1543 = vmatpush1.bf16.xpose.msra.mxu0 0
        %1544 = vmatprep.subr.bf16.mxu0 0
        %1545 = vmatpush1.bf16.xpose.msra.mxu0 0
        %1546 = vmatprep.subr.bf16.mxu0 0
        %1547 = vmatpush1.bf16.xpose.msra.mxu0 0
        %1548 = vmatprep.subr.bf16.mxu0 0
        %1549 = vmatpush1.bf16.xpose.msra.mxu0 0
        %1550 = vmatprep.subr.bf16.mxu0 0
        %1551 = vmatpush1.bf16.xpose.msra.mxu0 0
        %1552 = vmatprep.subr.bf16.mxu0 0
        %1553 = vmatpush1.bf16.xpose.msra.mxu0 0
        %1554 = vmatprep.subr.bf16.mxu0 0
        %1555 = vmatpush1.bf16.xpose.msra.mxu0 0
        %1556 = vmatprep.subr.bf16.mxu0 0
        %1557 = vmatpush1.bf16.xpose.msra.mxu0 0
        %1558 = vmatprep.subr.bf16.mxu0 0
        %1559 = vmatpush1.bf16.xpose.msra.mxu0 0
        %1560 = vmatprep.subr.bf16.mxu0 0
        %1561 = vmatpush1.bf16.xpose.msra.mxu0 0
        %1562 = vmatprep.mubr.bf16.mxu0 0
        %1563 = vmatmul.mubr.bf16.gmra.mrb[0].mxu0 %v1522
        %v1564 = vpop.f32.mrb[0].mxu0
        %v1565 = vadd.f32 %v629, %v1564
        %v1566 = vpop.f32.mrb[0].mxu0
        %v1567 = vpop.f32.mrb[0].mxu0
        %v1568 = vadd.f32 %v630, %v1567
        %v1569 = vpop.f32.mrb[0].mxu0
        %1570 = vmatprep.mubr.bf16.mxu0 0
        %1571 = vmatmul.mubr.bf16.gmra.mrb[0].mxu0 %v1522
        %v1572 = vpop.f32.mrb[0].mxu0
        %v1573 = vadd.f32 %v631, %v1572
        %v1574 = vpop.f32.mrb[0].mxu0
        %v1575 = vpop.f32.mrb[0].mxu0
        %v1576 = vadd.f32 %v632, %v1575
        %v1577 = vpop.f32.mrb[0].mxu0
        %1578 = vdwg.mxu0
        %v1579 = vsel %vm654, %v1565, -inf
        %1580 = vmax.xlane.f32.xlu0 %v1579
        %v1581 = vpop.xlane.xlu0 %1580
        %v1582 = vsel %vm654, %v1568, -inf
        %1583 = vmax.xlane.f32.xlu0 %v1582
        %v1584 = vpop.xlane.xlu0 %1583
        %v1585 = vsel %vm654, %v1573, -inf
        %1586 = vmax.xlane.f32.xlu0 %v1585
        %v1587 = vpop.xlane.xlu0 %1586
        %v1588 = vsel %vm654, %v1576, -inf
        %1589 = vmax.xlane.f32.xlu0 %v1588
        %v1590 = vpop.xlane.xlu0 %1589
        %v1591 = vsub.f32 %v1565, %v1581
        %v1592 = vsub.f32 %v1568, %v1584
        %v1593 = vsub.f32 %v1573, %v1587
        %v1594 = vsub.f32 %v1576, %v1590
        %v1595 = vmul.f32 %v1591, 1.442695
        %v1596 = vpow.pop %v1595
        %v1597 = vmul.f32 %v1592, 1.442695
        %v1598 = vpow.pop %v1597
        %v1599 = vmul.f32 %v1593, 1.442695
        %v1600 = vpow.pop %v1599
        %v1601 = vmul.f32 %v1594, 1.442695
        %v1602 = vpow.pop %v1601
        %v1603 = vsel %vm654, %v1596, 0.0
        %1604 = vadd.xlane.f32.xlu0 %v1603
        %v1605 = vpop.xlane.xlu0 %1604
        %v1606 = vsel %vm654, %v1598, 0.0
        %1607 = vadd.xlane.f32.xlu0 %v1606
        %v1608 = vpop.xlane.xlu0 %1607
        %v1609 = vsel %vm654, %v1600, 0.0
        %1610 = vadd.xlane.f32.xlu0 %v1609
        %v1611 = vpop.xlane.xlu0 %1610
        %v1612 = vsel %vm654, %v1602, 0.0
        %1613 = vadd.xlane.f32.xlu0 %v1612
        %v1614 = vpop.xlane.xlu0 %1613
        %v1615 = vrcp.pop %v1605
        %v1616 = vrcp.pop %v1608
        %v1617 = vrcp.pop %v1611
        %v1618 = vrcp.pop %v1614
        %v1619 = vmul.f32 %v1596, %v1615
        %v1620 = vmul.f32 %v1598, %v1616
        %v1621 = vmul.f32 %v1600, %v1617
        %v1622 = vmul.f32 %v1602, %v1618
        %v1623 = vpack.c.bf16 %v1620, %v1619
        %v1624 = vpack.c.bf16 %v1622, %v1621
        %v1625 = vpack.c.bf16 %v1515, %v1514
        %v1626 = vpack.c.bf16 %v1517, %v1516
        %1629 = vrot.lane.b32.xlu0 %v1625, 96
        %v1630 = vpop.permute.xlu0 %1629
        %1631 = vrot.lane.b32.xlu0 %v1626, 96
        %v1632 = vpop.permute.xlu0 %1631
        %v1636 = vsel %vm654, %v1623, 0
        %v1639 = vsel %vm654, %v1624, 0
        %1641 = vmatprep.subr.bf16.mxu0 0
        %1642 = vmatpush1.bf16.msra.mxu0 %v1630
        %1643 = vmatprep.subr.bf16.mxu0 0
        %1644 = vmatpush1.bf16.msra.mxu0 %v1632
        %1645 = vmatprep.subr.bf16.mxu0 0
        %1646 = vmatpush1.bf16.msra.mxu0 0
        %1647 = vmatprep.subr.bf16.mxu0 0
        %1648 = vmatpush1.bf16.msra.mxu0 0
        %1649 = vmatprep.subr.bf16.mxu0 0
        %1650 = vmatpush1.bf16.msra.mxu0 0
        %1651 = vmatprep.subr.bf16.mxu0 0
        %1652 = vmatpush1.bf16.msra.mxu0 0
        %1653 = vmatprep.subr.bf16.mxu0 0
        %1654 = vmatpush1.bf16.msra.mxu0 0
        %1655 = vmatprep.subr.bf16.mxu0 0
        %1656 = vmatpush1.bf16.msra.mxu0 0
        %1657 = vmatprep.subr.bf16.mxu0 0
        %1658 = vmatpush1.bf16.msra.mxu0 0
        %1659 = vmatprep.subr.bf16.mxu0 0
        %1660 = vmatpush1.bf16.msra.mxu0 0
        %1661 = vmatprep.subr.bf16.mxu0 0
        %1662 = vmatpush1.bf16.msra.mxu0 0
        %1663 = vmatprep.subr.bf16.mxu0 0
        %1664 = vmatpush1.bf16.msra.mxu0 0
        %1665 = vmatprep.subr.bf16.mxu0 0
        %1666 = vmatpush1.bf16.msra.mxu0 0
        %1667 = vmatprep.subr.bf16.mxu0 0
        %1668 = vmatpush1.bf16.msra.mxu0 0
        %1669 = vmatprep.subr.bf16.mxu0 0
        %1670 = vmatpush1.bf16.msra.mxu0 0
        %1671 = vmatprep.subr.bf16.mxu0 0
        %1672 = vmatpush1.bf16.msra.mxu0 0
        %1673 = vmatprep.mubr.bf16.mxu0 0
        %1674 = vmatmul.mubr.bf16.gmra.mrb[0].mxu0 %v1636
        %v1675 = vpop.f32.mrb[0].mxu0
        %v1676 = vadd.f32 0.0, %v1675
        %v1677 = vpop.f32.mrb[0].mxu0
        %v1678 = vpop.f32.mrb[0].mxu0
        %v1679 = vadd.f32 0.0, %v1678
        %v1680 = vpop.f32.mrb[0].mxu0
        %1681 = vmatprep.mubr.bf16.mxu0 0
        %1682 = vmatmul.mubr.bf16.gmra.mrb[0].mxu0 %v1639
        %v1683 = vpop.f32.mrb[0].mxu0
        %v1684 = vadd.f32 0.0, %v1683
        %v1685 = vpop.f32.mrb[0].mxu0
        %v1686 = vpop.f32.mrb[0].mxu0
        %v1687 = vadd.f32 0.0, %v1686
        %v1688 = vpop.f32.mrb[0].mxu0
        %1689 = vdwg.mxu0
        %1691 = vrot.lane.b32.xlu0 %v1518, 120
        %v1692 = vpop.permute.xlu0 %1691
        %1695 = vrot.lane.b32.xlu0 %v1519, 120
        %v1696 = vpop.permute.xlu0 %1695
        %1697 = vrot.lane.b32.xlu0 %v1520, 120
        %v1698 = vpop.permute.xlu0 %1697
        %v1700 = vsel %vm730, %v1692, 0
        %v1703 = vsel %vm730, %v1696, 0
        %v1706 = vsel %vm730, %v1698, 0
        %1708 = vmatprep.subr.bf16.mxu0 0
        %1709 = vmatpush1.bf16.xpose.msra.mxu0 %v1703
        %1710 = vmatprep.subr.bf16.mxu0 0
        %1711 = vmatpush1.bf16.xpose.msra.mxu0 %v1706
        %1712 = vmatprep.subr.bf16.mxu0 0
        %1713 = vmatpush1.bf16.xpose.msra.mxu0 0
        %1714 = vmatprep.subr.bf16.mxu0 0
        %1715 = vmatpush1.bf16.xpose.msra.mxu0 0
        %1716 = vmatprep.subr.bf16.mxu0 0
        %1717 = vmatpush1.bf16.xpose.msra.mxu0 0
        %1718 = vmatprep.subr.bf16.mxu0 0
        %1719 = vmatpush1.bf16.xpose.msra.mxu0 0
        %1720 = vmatprep.subr.bf16.mxu0 0
        %1721 = vmatpush1.bf16.xpose.msra.mxu0 0
        %1722 = vmatprep.subr.bf16.mxu0 0
        %1723 = vmatpush1.bf16.xpose.msra.mxu0 0
        %1724 = vmatprep.subr.bf16.mxu0 0
        %1725 = vmatpush1.bf16.xpose.msra.mxu0 0
        %1726 = vmatprep.subr.bf16.mxu0 0
        %1727 = vmatpush1.bf16.xpose.msra.mxu0 0
        %1728 = vmatprep.subr.bf16.mxu0 0
        %1729 = vmatpush1.bf16.xpose.msra.mxu0 0
        %1730 = vmatprep.subr.bf16.mxu0 0
        %1731 = vmatpush1.bf16.xpose.msra.mxu0 0
        %1732 = vmatprep.subr.bf16.mxu0 0
        %1733 = vmatpush1.bf16.xpose.msra.mxu0 0
        %1734 = vmatprep.subr.bf16.mxu0 0
        %1735 = vmatpush1.bf16.xpose.msra.mxu0 0
        %1736 = vmatprep.subr.bf16.mxu0 0
        %1737 = vmatpush1.bf16.xpose.msra.mxu0 0
        %1738 = vmatprep.subr.bf16.mxu0 0
        %1739 = vmatpush1.bf16.xpose.msra.mxu0 0
        %1740 = vmatprep.mubr.bf16.mxu0 0
        %1741 = vmatmul.mubr.bf16.gmra.mrb[0].mxu0 %v1700
        %v1742 = vpop.f32.mrb[0].mxu0
        %v1743 = vadd.f32 %v629, %v1742
        %v1744 = vpop.f32.mrb[0].mxu0
        %v1745 = vpop.f32.mrb[0].mxu0
        %v1746 = vadd.f32 %v630, %v1745
        %v1747 = vpop.f32.mrb[0].mxu0
        %1748 = vmatprep.mubr.bf16.mxu0 0
        %1749 = vmatmul.mubr.bf16.gmra.mrb[0].mxu0 %v1700
        %v1750 = vpop.f32.mrb[0].mxu0
        %v1751 = vadd.f32 %v631, %v1750
        %v1752 = vpop.f32.mrb[0].mxu0
        %v1753 = vpop.f32.mrb[0].mxu0
        %v1754 = vadd.f32 %v632, %v1753
        %v1755 = vpop.f32.mrb[0].mxu0
        %1756 = vdwg.mxu0
        %v1757 = vsel %vm654, %v1743, -inf
        %1758 = vmax.xlane.f32.xlu0 %v1757
        %v1759 = vpop.xlane.xlu0 %1758
        %v1760 = vsel %vm654, %v1746, -inf
        %1761 = vmax.xlane.f32.xlu0 %v1760
        %v1762 = vpop.xlane.xlu0 %1761
        %v1763 = vsel %vm654, %v1751, -inf
        %1764 = vmax.xlane.f32.xlu0 %v1763
        %v1765 = vpop.xlane.xlu0 %1764
        %v1766 = vsel %vm654, %v1754, -inf
        %1767 = vmax.xlane.f32.xlu0 %v1766
        %v1768 = vpop.xlane.xlu0 %1767
        %v1769 = vsub.f32 %v1743, %v1759
        %v1770 = vsub.f32 %v1746, %v1762
        %v1771 = vsub.f32 %v1751, %v1765
        %v1772 = vsub.f32 %v1754, %v1768
        %v1773 = vmul.f32 %v1769, 1.442695
        %v1774 = vpow.pop %v1773
        %v1775 = vmul.f32 %v1770, 1.442695
        %v1776 = vpow.pop %v1775
        %v1777 = vmul.f32 %v1771, 1.442695
        %v1778 = vpow.pop %v1777
        %v1779 = vmul.f32 %v1772, 1.442695
        %v1780 = vpow.pop %v1779
        %v1781 = vsel %vm654, %v1774, 0.0
        %1782 = vadd.xlane.f32.xlu0 %v1781
        %v1783 = vpop.xlane.xlu0 %1782
        %v1784 = vsel %vm654, %v1776, 0.0
        %1785 = vadd.xlane.f32.xlu0 %v1784
        %v1786 = vpop.xlane.xlu0 %1785
        %v1787 = vsel %vm654, %v1778, 0.0
        %1788 = vadd.xlane.f32.xlu0 %v1787
        %v1789 = vpop.xlane.xlu0 %1788
        %v1790 = vsel %vm654, %v1780, 0.0
        %1791 = vadd.xlane.f32.xlu0 %v1790
        %v1792 = vpop.xlane.xlu0 %1791
        %v1793 = vrcp.pop %v1783
        %v1794 = vrcp.pop %v1786
        %v1795 = vrcp.pop %v1789
        %v1796 = vrcp.pop %v1792
        %v1797 = vmul.f32 %v1774, %v1793
        %v1798 = vmul.f32 %v1776, %v1794
        %v1799 = vmul.f32 %v1778, %v1795
        %v1800 = vmul.f32 %v1780, %v1796
        %v1801 = vpack.c.bf16 %v1798, %v1797
        %v1802 = vpack.c.bf16 %v1800, %v1799
        %1803 = vrot.lane.b32.xlu0 %v1625, 88
        %v1804 = vpop.permute.xlu0 %1803
        %1805 = vrot.lane.b32.xlu0 %v1626, 88
        %v1806 = vpop.permute.xlu0 %1805
        %v1810 = vsel %vm654, %v1801, 0
        %v1813 = vsel %vm654, %v1802, 0
        %1815 = vmatprep.subr.bf16.mxu0 0
        %1816 = vmatpush1.bf16.msra.mxu0 %v1804
        %1817 = vmatprep.subr.bf16.mxu0 0
        %1818 = vmatpush1.bf16.msra.mxu0 %v1806
        %1819 = vmatprep.subr.bf16.mxu0 0
        %1820 = vmatpush1.bf16.msra.mxu0 0
        %1821 = vmatprep.subr.bf16.mxu0 0
        %1822 = vmatpush1.bf16.msra.mxu0 0
        %1823 = vmatprep.subr.bf16.mxu0 0
        %1824 = vmatpush1.bf16.msra.mxu0 0
        %1825 = vmatprep.subr.bf16.mxu0 0
        %1826 = vmatpush1.bf16.msra.mxu0 0
        %1827 = vmatprep.subr.bf16.mxu0 0
        %1828 = vmatpush1.bf16.msra.mxu0 0
        %1829 = vmatprep.subr.bf16.mxu0 0
        %1830 = vmatpush1.bf16.msra.mxu0 0
        %1831 = vmatprep.subr.bf16.mxu0 0
        %1832 = vmatpush1.bf16.msra.mxu0 0
        %1833 = vmatprep.subr.bf16.mxu0 0
        %1834 = vmatpush1.bf16.msra.mxu0 0
        %1835 = vmatprep.subr.bf16.mxu0 0
        %1836 = vmatpush1.bf16.msra.mxu0 0
        %1837 = vmatprep.subr.bf16.mxu0 0
        %1838 = vmatpush1.bf16.msra.mxu0 0
        %1839 = vmatprep.subr.bf16.mxu0 0
        %1840 = vmatpush1.bf16.msra.mxu0 0
        %1841 = vmatprep.subr.bf16.mxu0 0
        %1842 = vmatpush1.bf16.msra.mxu0 0
        %1843 = vmatprep.subr.bf16.mxu0 0
        %1844 = vmatpush1.bf16.msra.mxu0 0
        %1845 = vmatprep.subr.bf16.mxu0 0
        %1846 = vmatpush1.bf16.msra.mxu0 0
        %1847 = vmatprep.mubr.bf16.mxu0 0
        %1848 = vmatmul.mubr.bf16.gmra.mrb[0].mxu0 %v1810
        %v1849 = vpop.f32.mrb[0].mxu0
        %v1850 = vadd.f32 0.0, %v1849
        %v1851 = vpop.f32.mrb[0].mxu0
        %v1852 = vpop.f32.mrb[0].mxu0
        %v1853 = vadd.f32 0.0, %v1852
        %v1854 = vpop.f32.mrb[0].mxu0
        %1855 = vmatprep.mubr.bf16.mxu0 0
        %1856 = vmatmul.mubr.bf16.gmra.mrb[0].mxu0 %v1813
        %v1857 = vpop.f32.mrb[0].mxu0
        %v1858 = vadd.f32 0.0, %v1857
        %v1859 = vpop.f32.mrb[0].mxu0
        %v1860 = vpop.f32.mrb[0].mxu0
        %v1861 = vadd.f32 0.0, %v1860
        %v1862 = vpop.f32.mrb[0].mxu0
        %1863 = vdwg.mxu0
        %1864 = vrot.lane.b32.xlu0 %v1518, 112
        %v1865 = vpop.permute.xlu0 %1864
        %1866 = vrot.lane.b32.xlu0 %v1519, 112
        %v1867 = vpop.permute.xlu0 %1866
        %1868 = vrot.lane.b32.xlu0 %v1520, 112
        %v1869 = vpop.permute.xlu0 %1868
        %v1871 = vsel %vm730, %v1865, 0
        %v1874 = vsel %vm730, %v1867, 0
        %v1877 = vsel %vm730, %v1869, 0
        %1879 = vmatprep.subr.bf16.mxu0 0
        %1880 = vmatpush1.bf16.xpose.msra.mxu0 %v1874
        %1881 = vmatprep.subr.bf16.mxu0 0
        %1882 = vmatpush1.bf16.xpose.msra.mxu0 %v1877
        %1883 = vmatprep.subr.bf16.mxu0 0
        %1884 = vmatpush1.bf16.xpose.msra.mxu0 0
        %1885 = vmatprep.subr.bf16.mxu0 0
        %1886 = vmatpush1.bf16.xpose.msra.mxu0 0
        %1887 = vmatprep.subr.bf16.mxu0 0
        %1888 = vmatpush1.bf16.xpose.msra.mxu0 0
        %1889 = vmatprep.subr.bf16.mxu0 0
        %1890 = vmatpush1.bf16.xpose.msra.mxu0 0
        %1891 = vmatprep.subr.bf16.mxu0 0
        %1892 = vmatpush1.bf16.xpose.msra.mxu0 0
        %1893 = vmatprep.subr.bf16.mxu0 0
        %1894 = vmatpush1.bf16.xpose.msra.mxu0 0
        %1895 = vmatprep.subr.bf16.mxu0 0
        %1896 = vmatpush1.bf16.xpose.msra.mxu0 0
        %1897 = vmatprep.subr.bf16.mxu0 0
        %1898 = vmatpush1.bf16.xpose.msra.mxu0 0
        %1899 = vmatprep.subr.bf16.mxu0 0
        %1900 = vmatpush1.bf16.xpose.msra.mxu0 0
        %1901 = vmatprep.subr.bf16.mxu0 0
        %1902 = vmatpush1.bf16.xpose.msra.mxu0 0
        %1903 = vmatprep.subr.bf16.mxu0 0
        %1904 = vmatpush1.bf16.xpose.msra.mxu0 0
        %1905 = vmatprep.subr.bf16.mxu0 0
        %1906 = vmatpush1.bf16.xpose.msra.mxu0 0
        %1907 = vmatprep.subr.bf16.mxu0 0
        %1908 = vmatpush1.bf16.xpose.msra.mxu0 0
        %1909 = vmatprep.subr.bf16.mxu0 0
        %1910 = vmatpush1.bf16.xpose.msra.mxu0 0
        %1911 = vmatprep.mubr.bf16.mxu0 0
        %1912 = vmatmul.mubr.bf16.gmra.mrb[0].mxu0 %v1871
        %v1913 = vpop.f32.mrb[0].mxu0
        %v1914 = vadd.f32 %v629, %v1913
        %v1915 = vpop.f32.mrb[0].mxu0
        %v1916 = vpop.f32.mrb[0].mxu0
        %v1917 = vadd.f32 %v630, %v1916
        %v1918 = vpop.f32.mrb[0].mxu0
        %1919 = vmatprep.mubr.bf16.mxu0 0
        %1920 = vmatmul.mubr.bf16.gmra.mrb[0].mxu0 %v1871
        %v1921 = vpop.f32.mrb[0].mxu0
        %v1922 = vadd.f32 %v631, %v1921
        %v1923 = vpop.f32.mrb[0].mxu0
        %v1924 = vpop.f32.mrb[0].mxu0
        %v1925 = vadd.f32 %v632, %v1924
        %v1926 = vpop.f32.mrb[0].mxu0
        %1927 = vdwg.mxu0
        %v1928 = vsel %vm654, %v1914, -inf
        %1929 = vmax.xlane.f32.xlu0 %v1928
        %v1930 = vpop.xlane.xlu0 %1929
        %v1931 = vsel %vm654, %v1917, -inf
        %1932 = vmax.xlane.f32.xlu0 %v1931
        %v1933 = vpop.xlane.xlu0 %1932
        %v1934 = vsel %vm654, %v1922, -inf
        %1935 = vmax.xlane.f32.xlu0 %v1934
        %v1936 = vpop.xlane.xlu0 %1935
        %v1937 = vsel %vm654, %v1925, -inf
        %1938 = vmax.xlane.f32.xlu0 %v1937
        %v1939 = vpop.xlane.xlu0 %1938
        %v1940 = vsub.f32 %v1914, %v1930
        %v1941 = vsub.f32 %v1917, %v1933
        %v1942 = vsub.f32 %v1922, %v1936
        %v1943 = vsub.f32 %v1925, %v1939
        %v1944 = vmul.f32 %v1940, 1.442695
        %v1945 = vpow.pop %v1944
        %v1946 = vmul.f32 %v1941, 1.442695
        %v1947 = vpow.pop %v1946
        %v1948 = vmul.f32 %v1942, 1.442695
        %v1949 = vpow.pop %v1948
        %v1950 = vmul.f32 %v1943, 1.442695
        %v1951 = vpow.pop %v1950
        %v1952 = vsel %vm654, %v1945, 0.0
        %1953 = vadd.xlane.f32.xlu0 %v1952
        %v1954 = vpop.xlane.xlu0 %1953
        %v1955 = vsel %vm654, %v1947, 0.0
        %1956 = vadd.xlane.f32.xlu0 %v1955
        %v1957 = vpop.xlane.xlu0 %1956
        %v1958 = vsel %vm654, %v1949, 0.0
        %1959 = vadd.xlane.f32.xlu0 %v1958
        %v1960 = vpop.xlane.xlu0 %1959
        %v1961 = vsel %vm654, %v1951, 0.0
        %1962 = vadd.xlane.f32.xlu0 %v1961
        %v1963 = vpop.xlane.xlu0 %1962
        %v1964 = vrcp.pop %v1954
        %v1965 = vrcp.pop %v1957
        %v1966 = vrcp.pop %v1960
        %v1967 = vrcp.pop %v1963
        %v1968 = vmul.f32 %v1945, %v1964
        %v1969 = vmul.f32 %v1947, %v1965
        %v1970 = vmul.f32 %v1949, %v1966
        %v1971 = vmul.f32 %v1951, %v1967
        %v1972 = vpack.c.bf16 %v1969, %v1968
        %v1973 = vpack.c.bf16 %v1971, %v1970
        %1974 = vrot.lane.b32.xlu0 %v1625, 80
        %v1975 = vpop.permute.xlu0 %1974
        %1976 = vrot.lane.b32.xlu0 %v1626, 80
        %v1977 = vpop.permute.xlu0 %1976
        %v1981 = vsel %vm654, %v1972, 0
        %v1984 = vsel %vm654, %v1973, 0
        %1986 = vmatprep.subr.bf16.mxu0 0
        %1987 = vmatpush1.bf16.msra.mxu0 %v1975
        %1988 = vmatprep.subr.bf16.mxu0 0
        %1989 = vmatpush1.bf16.msra.mxu0 %v1977
        %1990 = vmatprep.subr.bf16.mxu0 0
        %1991 = vmatpush1.bf16.msra.mxu0 0
        %1992 = vmatprep.subr.bf16.mxu0 0
        %1993 = vmatpush1.bf16.msra.mxu0 0
        %1994 = vmatprep.subr.bf16.mxu0 0
        %1995 = vmatpush1.bf16.msra.mxu0 0
        %1996 = vmatprep.subr.bf16.mxu0 0
        %1997 = vmatpush1.bf16.msra.mxu0 0
        %1998 = vmatprep.subr.bf16.mxu0 0
        %1999 = vmatpush1.bf16.msra.mxu0 0
        %2000 = vmatprep.subr.bf16.mxu0 0
        %2001 = vmatpush1.bf16.msra.mxu0 0
        %2002 = vmatprep.subr.bf16.mxu0 0
        %2003 = vmatpush1.bf16.msra.mxu0 0
        %2004 = vmatprep.subr.bf16.mxu0 0
        %2005 = vmatpush1.bf16.msra.mxu0 0
        %2006 = vmatprep.subr.bf16.mxu0 0
        %2007 = vmatpush1.bf16.msra.mxu0 0
        %2008 = vmatprep.subr.bf16.mxu0 0
        %2009 = vmatpush1.bf16.msra.mxu0 0
        %2010 = vmatprep.subr.bf16.mxu0 0
        %2011 = vmatpush1.bf16.msra.mxu0 0
        %2012 = vmatprep.subr.bf16.mxu0 0
        %2013 = vmatpush1.bf16.msra.mxu0 0
        %2014 = vmatprep.subr.bf16.mxu0 0
        %2015 = vmatpush1.bf16.msra.mxu0 0
        %2016 = vmatprep.subr.bf16.mxu0 0
        %2017 = vmatpush1.bf16.msra.mxu0 0
        %2018 = vmatprep.mubr.bf16.mxu0 0
        %2019 = vmatmul.mubr.bf16.gmra.mrb[0].mxu0 %v1981
        %v2020 = vpop.f32.mrb[0].mxu0
        %v2021 = vadd.f32 0.0, %v2020
        %v2022 = vpop.f32.mrb[0].mxu0
        %v2023 = vpop.f32.mrb[0].mxu0
        %v2024 = vadd.f32 0.0, %v2023
        %v2025 = vpop.f32.mrb[0].mxu0
        %2026 = vmatprep.mubr.bf16.mxu0 0
        %2027 = vmatmul.mubr.bf16.gmra.mrb[0].mxu0 %v1984
        %v2028 = vpop.f32.mrb[0].mxu0
        %v2029 = vadd.f32 0.0, %v2028
        %v2030 = vpop.f32.mrb[0].mxu0
        %v2031 = vpop.f32.mrb[0].mxu0
        %v2032 = vadd.f32 0.0, %v2031
        %v2033 = vpop.f32.mrb[0].mxu0
        %2034 = vdwg.mxu0
        %2035 = vrot.lane.b32.xlu0 %v1518, 104
        %v2036 = vpop.permute.xlu0 %2035
        %2037 = vrot.lane.b32.xlu0 %v1519, 104
        %v2038 = vpop.permute.xlu0 %2037
        %2039 = vrot.lane.b32.xlu0 %v1520, 104
        %v2040 = vpop.permute.xlu0 %2039
        %v2042 = vsel %vm730, %v2036, 0
        %v2045 = vsel %vm730, %v2038, 0
        %v2048 = vsel %vm730, %v2040, 0
        %2050 = vmatprep.subr.bf16.mxu0 0
        %2051 = vmatpush1.bf16.xpose.msra.mxu0 %v2045
        %2052 = vmatprep.subr.bf16.mxu0 0
        %2053 = vmatpush1.bf16.xpose.msra.mxu0 %v2048
        %2054 = vmatprep.subr.bf16.mxu0 0
        %2055 = vmatpush1.bf16.xpose.msra.mxu0 0
        %2056 = vmatprep.subr.bf16.mxu0 0
        %2057 = vmatpush1.bf16.xpose.msra.mxu0 0
        %2058 = vmatprep.subr.bf16.mxu0 0
        %2059 = vmatpush1.bf16.xpose.msra.mxu0 0
        %2060 = vmatprep.subr.bf16.mxu0 0
        %2061 = vmatpush1.bf16.xpose.msra.mxu0 0
        %2062 = vmatprep.subr.bf16.mxu0 0
        %2063 = vmatpush1.bf16.xpose.msra.mxu0 0
        %2064 = vmatprep.subr.bf16.mxu0 0
        %2065 = vmatpush1.bf16.xpose.msra.mxu0 0
        %2066 = vmatprep.subr.bf16.mxu0 0
        %2067 = vmatpush1.bf16.xpose.msra.mxu0 0
        %2068 = vmatprep.subr.bf16.mxu0 0
        %2069 = vmatpush1.bf16.xpose.msra.mxu0 0
        %2070 = vmatprep.subr.bf16.mxu0 0
        %2071 = vmatpush1.bf16.xpose.msra.mxu0 0
        %2072 = vmatprep.subr.bf16.mxu0 0
        %2073 = vmatpush1.bf16.xpose.msra.mxu0 0
        %2074 = vmatprep.subr.bf16.mxu0 0
        %2075 = vmatpush1.bf16.xpose.msra.mxu0 0
        %2076 = vmatprep.subr.bf16.mxu0 0
        %2077 = vmatpush1.bf16.xpose.msra.mxu0 0
        %2078 = vmatprep.subr.bf16.mxu0 0
        %2079 = vmatpush1.bf16.xpose.msra.mxu0 0
        %2080 = vmatprep.subr.bf16.mxu0 0
        %2081 = vmatpush1.bf16.xpose.msra.mxu0 0
        %2082 = vmatprep.mubr.bf16.mxu0 0
        %2083 = vmatmul.mubr.bf16.gmra.mrb[0].mxu0 %v2042
        %v2084 = vpop.f32.mrb[0].mxu0
        %v2085 = vadd.f32 %v629, %v2084
        %v2086 = vpop.f32.mrb[0].mxu0
        %v2087 = vpop.f32.mrb[0].mxu0
        %v2088 = vadd.f32 %v630, %v2087
        %v2089 = vpop.f32.mrb[0].mxu0
        %2090 = vmatprep.mubr.bf16.mxu0 0
        %2091 = vmatmul.mubr.bf16.gmra.mrb[0].mxu0 %v2042
        %v2092 = vpop.f32.mrb[0].mxu0
        %v2093 = vadd.f32 %v631, %v2092
        %v2094 = vpop.f32.mrb[0].mxu0
        %v2095 = vpop.f32.mrb[0].mxu0
        %v2096 = vadd.f32 %v632, %v2095
        %v2097 = vpop.f32.mrb[0].mxu0
        %2098 = vdwg.mxu0
        %v2099 = vsel %vm654, %v2085, -inf
        %2100 = vmax.xlane.f32.xlu0 %v2099
        %v2101 = vpop.xlane.xlu0 %2100
        %v2102 = vsel %vm654, %v2088, -inf
        %2103 = vmax.xlane.f32.xlu0 %v2102
        %v2104 = vpop.xlane.xlu0 %2103
        %v2105 = vsel %vm654, %v2093, -inf
        %2106 = vmax.xlane.f32.xlu0 %v2105
        %v2107 = vpop.xlane.xlu0 %2106
        %v2108 = vsel %vm654, %v2096, -inf
        %2109 = vmax.xlane.f32.xlu0 %v2108
        %v2110 = vpop.xlane.xlu0 %2109
        %v2111 = vsub.f32 %v2085, %v2101
        %v2112 = vsub.f32 %v2088, %v2104
        %v2113 = vsub.f32 %v2093, %v2107
        %v2114 = vsub.f32 %v2096, %v2110
        %v2115 = vmul.f32 %v2111, 1.442695
        %v2116 = vpow.pop %v2115
        %v2117 = vmul.f32 %v2112, 1.442695
        %v2118 = vpow.pop %v2117
        %v2119 = vmul.f32 %v2113, 1.442695
        %v2120 = vpow.pop %v2119
        %v2121 = vmul.f32 %v2114, 1.442695
        %v2122 = vpow.pop %v2121
        %v2123 = vsel %vm654, %v2116, 0.0
        %2124 = vadd.xlane.f32.xlu0 %v2123
        %v2125 = vpop.xlane.xlu0 %2124
        %v2126 = vsel %vm654, %v2118, 0.0
        %2127 = vadd.xlane.f32.xlu0 %v2126
        %v2128 = vpop.xlane.xlu0 %2127
        %v2129 = vsel %vm654, %v2120, 0.0
        %2130 = vadd.xlane.f32.xlu0 %v2129
        %v2131 = vpop.xlane.xlu0 %2130
        %v2132 = vsel %vm654, %v2122, 0.0
        %2133 = vadd.xlane.f32.xlu0 %v2132
        %v2134 = vpop.xlane.xlu0 %2133
        %v2135 = vrcp.pop %v2125
        %v2136 = vrcp.pop %v2128
        %v2137 = vrcp.pop %v2131
        %v2138 = vrcp.pop %v2134
        %v2139 = vmul.f32 %v2116, %v2135
        %v2140 = vmul.f32 %v2118, %v2136
        %v2141 = vmul.f32 %v2120, %v2137
        %v2142 = vmul.f32 %v2122, %v2138
        %v2143 = vpack.c.bf16 %v2140, %v2139
        %v2144 = vpack.c.bf16 %v2142, %v2141
        %2145 = vrot.lane.b32.xlu0 %v1625, 72
        %v2146 = vpop.permute.xlu0 %2145
        %2147 = vrot.lane.b32.xlu0 %v1626, 72
        %v2148 = vpop.permute.xlu0 %2147
        %v2152 = vsel %vm654, %v2143, 0
        %v2155 = vsel %vm654, %v2144, 0
        %2157 = vmatprep.subr.bf16.mxu0 0
        %2158 = vmatpush1.bf16.msra.mxu0 %v2146
        %2159 = vmatprep.subr.bf16.mxu0 0
        %2160 = vmatpush1.bf16.msra.mxu0 %v2148
        %2161 = vmatprep.subr.bf16.mxu0 0
        %2162 = vmatpush1.bf16.msra.mxu0 0
        %2163 = vmatprep.subr.bf16.mxu0 0
        %2164 = vmatpush1.bf16.msra.mxu0 0
        %2165 = vmatprep.subr.bf16.mxu0 0
        %2166 = vmatpush1.bf16.msra.mxu0 0
        %2167 = vmatprep.subr.bf16.mxu0 0
        %2168 = vmatpush1.bf16.msra.mxu0 0
        %2169 = vmatprep.subr.bf16.mxu0 0
        %2170 = vmatpush1.bf16.msra.mxu0 0
        %2171 = vmatprep.subr.bf16.mxu0 0
        %2172 = vmatpush1.bf16.msra.mxu0 0
        %2173 = vmatprep.subr.bf16.mxu0 0
        %2174 = vmatpush1.bf16.msra.mxu0 0
        %2175 = vmatprep.subr.bf16.mxu0 0
        %2176 = vmatpush1.bf16.msra.mxu0 0
        %2177 = vmatprep.subr.bf16.mxu0 0
        %2178 = vmatpush1.bf16.msra.mxu0 0
        %2179 = vmatprep.subr.bf16.mxu0 0
        %2180 = vmatpush1.bf16.msra.mxu0 0
        %2181 = vmatprep.subr.bf16.mxu0 0
        %2182 = vmatpush1.bf16.msra.mxu0 0
        %2183 = vmatprep.subr.bf16.mxu0 0
        %2184 = vmatpush1.bf16.msra.mxu0 0
        %2185 = vmatprep.subr.bf16.mxu0 0
        %2186 = vmatpush1.bf16.msra.mxu0 0
        %2187 = vmatprep.subr.bf16.mxu0 0
        %2188 = vmatpush1.bf16.msra.mxu0 0
        %2189 = vmatprep.mubr.bf16.mxu0 0
        %2190 = vmatmul.mubr.bf16.gmra.mrb[0].mxu0 %v2152
        %v2191 = vpop.f32.mrb[0].mxu0
        %v2192 = vadd.f32 0.0, %v2191
        %v2193 = vpop.f32.mrb[0].mxu0
        %v2194 = vpop.f32.mrb[0].mxu0
        %v2195 = vadd.f32 0.0, %v2194
        %v2196 = vpop.f32.mrb[0].mxu0
        %2197 = vmatprep.mubr.bf16.mxu0 0
        %2198 = vmatmul.mubr.bf16.gmra.mrb[0].mxu0 %v2155
        %v2199 = vpop.f32.mrb[0].mxu0
        %v2200 = vadd.f32 0.0, %v2199
        %v2201 = vpop.f32.mrb[0].mxu0
        %v2202 = vpop.f32.mrb[0].mxu0
        %v2203 = vadd.f32 0.0, %v2202
        %v2204 = vpop.f32.mrb[0].mxu0
        %2205 = vdwg.mxu0
        %2210 = vrot.lane.b32.xlu0 %v1850, 8
        %v2211 = vpop.permute.xlu0 %2210
        %2212 = vrot.lane.b32.xlu0 %v1853, 8
        %v2213 = vpop.permute.xlu0 %2212
        %2214 = vrot.lane.b32.xlu0 %v1858, 8
        %v2215 = vpop.permute.xlu0 %2214
        %2216 = vrot.lane.b32.xlu0 %v1861, 8
        %v2217 = vpop.permute.xlu0 %2216
        %2226 = vrot.lane.b32.xlu0 %v2021, 16
        %v2227 = vpop.permute.xlu0 %2226
        %2228 = vrot.lane.b32.xlu0 %v2024, 16
        %v2229 = vpop.permute.xlu0 %2228
        %2230 = vrot.lane.b32.xlu0 %v2029, 16
        %v2231 = vpop.permute.xlu0 %2230
        %2232 = vrot.lane.b32.xlu0 %v2032, 16
        %v2233 = vpop.permute.xlu0 %2232
        %2242 = vrot.lane.b32.xlu0 %v2192, 24
        %v2243 = vpop.permute.xlu0 %2242
        %2244 = vrot.lane.b32.xlu0 %v2195, 24
        %v2245 = vpop.permute.xlu0 %2244
        %2246 = vrot.lane.b32.xlu0 %v2200, 24
        %v2247 = vpop.permute.xlu0 %2246
        %2248 = vrot.lane.b32.xlu0 %v2203, 24
        %v2249 = vpop.permute.xlu0 %2248
        %v2254 = vsel %vm730, %v1676, %v2211
        %v2255 = vsel %vm730, %v1679, %v2213
        %v2256 = vsel %vm730, %v1684, %v2215
        %v2257 = vsel %vm730, %v1687, %v2217
        %v2258 = vsel %vm778, %v2254, %v2227
        %v2259 = vsel %vm778, %v2255, %v2229
        %v2260 = vsel %vm778, %v2256, %v2231
        %v2261 = vsel %vm778, %v2257, %v2233
        %v2262 = vsel %vm1243, %v2258, %v2243
        %v2263 = vsel %vm1243, %v2259, %v2245
        %v2264 = vsel %vm1243, %v2260, %v2247
        %v2265 = vsel %vm1243, %v2261, %v2249
        %v2266 = vld [vmem:[%s591] sm:$0xf]
        %v2267 = vld [vmem:[%s591 + $0x4] sm:$0xf]
        %v2268 = vld [vmem:[%s591 + $0x8] sm:$0xf]
        %v2269 = vld [vmem:[%s591 + $0xc] sm:$0xf]
        %v2270 = vpack.c.bf16 %v2263, %v2262
        %v2271 = vpack.c.bf16 %v2265, %v2264
        %v2272 = vlaneseq
        %v2273 = vshrl.u32 %v2272, 7
        %v2274 = vsub.s32 7, %v2273
        %v2275 = vrot.slane %v633, %v2274
        %v2280 = vunpack.c.l.b16 %v2266
        %v2281 = vunpack.c.l.b16 %v2267
        %v2282 = vunpack.c.l.b16 %v2268
        %v2283 = vunpack.c.l.b16 %v2269
        %v2284 = vpack.c.b16 %v2281, %v2280
        %v2285 = vpack.c.b16 %v2283, %v2282
        %v2289 = vsel %vm654, %v2270, 0
        %v2292 = vsel %vm654, %v2271, 0
        %2294 = vmatprep.subr.bf16.mxu0 0
        %2295 = vmatpush1.bf16.msra.mxu0 %v2284
        %2296 = vmatprep.subr.bf16.mxu0 0
        %2297 = vmatpush1.bf16.msra.mxu0 %v2285
        %2298 = vmatprep.subr.bf16.mxu0 0
        %2299 = vmatpush1.bf16.msra.mxu0 0
        %2300 = vmatprep.subr.bf16.mxu0 0
        %2301 = vmatpush1.bf16.msra.mxu0 0
        %2302 = vmatprep.subr.bf16.mxu0 0
        %2303 = vmatpush1.bf16.msra.mxu0 0
        %2304 = vmatprep.subr.bf16.mxu0 0
        %2305 = vmatpush1.bf16.msra.mxu0 0
        %2306 = vmatprep.subr.bf16.mxu0 0
        %2307 = vmatpush1.bf16.msra.mxu0 0
        %2308 = vmatprep.subr.bf16.mxu0 0
        %2309 = vmatpush1.bf16.msra.mxu0 0
        %2310 = vmatprep.subr.bf16.mxu0 0
        %2311 = vmatpush1.bf16.msra.mxu0 0
        %2312 = vmatprep.subr.bf16.mxu0 0
        %2313 = vmatpush1.bf16.msra.mxu0 0
        %2314 = vmatprep.subr.bf16.mxu0 0
        %2315 = vmatpush1.bf16.msra.mxu0 0
        %2316 = vmatprep.subr.bf16.mxu0 0
        %2317 = vmatpush1.bf16.msra.mxu0 0
        %2318 = vmatprep.subr.bf16.mxu0 0
        %2319 = vmatpush1.bf16.msra.mxu0 0
        %2320 = vmatprep.subr.bf16.mxu0 0
        %2321 = vmatpush1.bf16.msra.mxu0 0
        %2322 = vmatprep.subr.bf16.mxu0 0
        %2323 = vmatpush1.bf16.msra.mxu0 0
        %2324 = vmatprep.subr.bf16.mxu0 0
        %2325 = vmatpush1.bf16.msra.mxu0 0
        %2326 = vmatprep.mubr.bf16.mxu0 0
        %2327 = vmatmul.mubr.bf16.gmra.mrb[0].mxu0 %v2289
        %v2328 = vpop.f32.mrb[0].mxu0
        %v2329 = vadd.f32 %v2275, %v2328
        %v2330 = vpop.f32.mrb[0].mxu0
        %v2331 = vpop.f32.mrb[0].mxu0
        %v2332 = vadd.f32 %v2275, %v2331
        %v2333 = vpop.f32.mrb[0].mxu0
        %2334 = vmatprep.mubr.bf16.mxu0 0
        %2335 = vmatmul.mubr.bf16.gmra.mrb[0].mxu0 %v2292
        %v2336 = vpop.f32.mrb[0].mxu0
        %v2337 = vadd.f32 %v2275, %v2336
        %v2338 = vpop.f32.mrb[0].mxu0
        %v2339 = vpop.f32.mrb[0].mxu0
        %v2340 = vadd.f32 %v2275, %v2339
        %v2341 = vpop.f32.mrb[0].mxu0
        %2342 = vdwg.mxu0
        %v2343 = vadd.f32 %v1350, %v2329
        %v2344 = vadd.f32 %v1351, %v2332
        %v2345 = vadd.f32 %v1350, %v2337
        %v2346 = vadd.f32 %v1351, %v2340
        %v2347 = vsel %vm654, %v2343, 0.0
        %2348 = vadd.xlane.f32.xlu0 %v2347
        %v2349 = vpop.xlane.xlu0 %2348
        %v2350 = vsel %vm654, %v2344, 0.0
        %2351 = vadd.xlane.f32.xlu0 %v2350
        %v2352 = vpop.xlane.xlu0 %2351
        %v2353 = vsel %vm654, %v2345, 0.0
        %2354 = vadd.xlane.f32.xlu0 %v2353
        %v2355 = vpop.xlane.xlu0 %2354
        %v2356 = vsel %vm654, %v2346, 0.0
        %2357 = vadd.xlane.f32.xlu0 %v2356
        %v2358 = vpop.xlane.xlu0 %2357
        %v2359 = vmul.f32 %v2349, %v1319
        %v2360 = vmul.f32 %v2352, %v1319
        %v2361 = vmul.f32 %v2355, %v1319
        %v2362 = vmul.f32 %v2358, %v1319
        %v2363 = vsub.f32 %v2343, %v2359
        %v2364 = vsub.f32 %v2344, %v2360
        %v2365 = vsub.f32 %v2345, %v2361
        %v2366 = vsub.f32 %v2346, %v2362
        %v2367 = vmul.f32 %v2363, %v2363
        %v2368 = vmul.f32 %v2364, %v2364
        %v2369 = vmul.f32 %v2365, %v2365
        %v2370 = vmul.f32 %v2366, %v2366
        %v2371 = vsel %vm654, %v2367, 0.0
        %2372 = vadd.xlane.f32.xlu0 %v2371
        %v2373 = vpop.xlane.xlu0 %2372
        %v2374 = vsel %vm654, %v2368, 0.0
        %2375 = vadd.xlane.f32.xlu0 %v2374
        %v2376 = vpop.xlane.xlu0 %2375
        %v2377 = vsel %vm654, %v2369, 0.0
        %2378 = vadd.xlane.f32.xlu0 %v2377
        %v2379 = vpop.xlane.xlu0 %2378
        %v2380 = vsel %vm654, %v2370, 0.0
        %2381 = vadd.xlane.f32.xlu0 %v2380
        %v2382 = vpop.xlane.xlu0 %2381
        %v2383 = vmul.f32 %v2373, %v1319
        %v2384 = vmul.f32 %v2376, %v1319
        %v2385 = vmul.f32 %v2379, %v1319
        %v2386 = vmul.f32 %v2382, %v1319
        %v2387 = vadd.f32 %v2383, 1e-05
        %v2388 = vadd.f32 %v2384, 1e-05
        %v2389 = vadd.f32 %v2385, 1e-05
        %v2390 = vadd.f32 %v2386, 1e-05
        %v2391 = vrsqrt.pop %v2387
        %v2392 = vrsqrt.pop %v2388
        %v2393 = vrsqrt.pop %v2389
        %v2394 = vrsqrt.pop %v2390
        %v2395 = vmul.f32 %v2363, %v2391
        %v2396 = vmul.f32 %v2364, %v2392
        %v2397 = vmul.f32 %v2365, %v2393
        %v2398 = vmul.f32 %v2366, %v2394
        %v2399 = vlaneseq
        %v2400 = vshrl.u32 %v2399, 7
        %v2401 = vsub.s32 3, %v2400
        %v2402 = vrot.slane %v634, %v2401
        %v2403 = vmul.f32 %v2395, %v2402
        %v2404 = vmul.f32 %v2396, %v2402
        %v2405 = vmul.f32 %v2397, %v2402
        %v2406 = vmul.f32 %v2398, %v2402
        %v2407 = vlaneseq
        %v2408 = vshrl.u32 %v2407, 7
        %v2409 = vsub.s32 4, %v2408
        %v2410 = vrot.slane %v634, %v2409
        %v2411 = vadd.f32 %v2403, %v2410
        %v2412 = vadd.f32 %v2404, %v2410
        %v2413 = vadd.f32 %v2405, %v2410
        %v2414 = vadd.f32 %v2406, %v2410
        %v2415 = vld [vmem:[%s596] sm:$0xff]
        %v2416 = vld [vmem:[%s596 + $0x8] sm:$0xff]
        %v2417 = vld [vmem:[%s596 + $0x10] sm:$0xff]
        %v2418 = vld [vmem:[%s596 + $0x18] sm:$0xff]
        %v2419 = vld [vmem:[%s596 + $0x20] sm:$0xff]
        %v2420 = vld [vmem:[%s596 + $0x28] sm:$0xff]
        %v2421 = vld [vmem:[%s596 + $0x30] sm:$0xff]
        %v2422 = vld [vmem:[%s596 + $0x38] sm:$0xff]
        %v2423 = vld [vmem:[%s596 + $0x40] sm:$0xff]
        %v2424 = vld [vmem:[%s596 + $0x48] sm:$0xff]
        %v2425 = vld [vmem:[%s596 + $0x50] sm:$0xff]
        %v2426 = vld [vmem:[%s596 + $0x58] sm:$0xff]
        %v2427 = vld [vmem:[%s596 + $0x60] sm:$0xff]
        %v2428 = vld [vmem:[%s596 + $0x68] sm:$0xff]
        %v2429 = vld [vmem:[%s596 + $0x70] sm:$0xff]
        %v2430 = vld [vmem:[%s596 + $0x78] sm:$0xff]
        %v2431 = vld [vmem:[%s596 + $0x80] sm:$0xff]
        %v2432 = vld [vmem:[%s596 + $0x88] sm:$0xff]
        %v2433 = vld [vmem:[%s596 + $0x90] sm:$0xff]
        %v2434 = vld [vmem:[%s596 + $0x98] sm:$0xff]
        %v2435 = vld [vmem:[%s596 + $0xa0] sm:$0xff]
        %v2436 = vld [vmem:[%s596 + $0xa8] sm:$0xff]
        %v2437 = vld [vmem:[%s596 + $0xb0] sm:$0xff]
        %v2438 = vld [vmem:[%s596 + $0xb8] sm:$0xff]
        %v2439 = vld [vmem:[%s596 + $0xc0] sm:$0xff]
        %v2440 = vld [vmem:[%s596 + $0xc8] sm:$0xff]
        %v2441 = vld [vmem:[%s596 + $0xd0] sm:$0xff]
        %v2442 = vld [vmem:[%s596 + $0xd8] sm:$0xff]
        %v2443 = vld [vmem:[%s596 + $0xe0] sm:$0xff]
        %v2444 = vld [vmem:[%s596 + $0xe8] sm:$0xff]
        %v2445 = vld [vmem:[%s596 + $0xf0] sm:$0xff]
        %v2446 = vld [vmem:[%s596 + $0xf8] sm:$0xff]
        %v2447 = vpack.c.bf16 %v2412, %v2411
        %v2448 = vpack.c.bf16 %v2414, %v2413
        %v2451 = vlaneseq
        %v2452 = vshrl.u32 %v2451, 7
        %v2453 = vsub.s32 0, %v2452
        %v2454 = vrot.slane %v635, %v2453
        %v2455 = vlaneseq
        %v2456 = vshrl.u32 %v2455, 7
        %v2457 = vsub.s32 1, %v2456
        %v2458 = vrot.slane %v635, %v2457
        %v2459 = vlaneseq
        %v2460 = vshrl.u32 %v2459, 7
        %v2461 = vsub.s32 2, %v2460
        %v2462 = vrot.slane %v635, %v2461
        %v2463 = vlaneseq
        %v2464 = vshrl.u32 %v2463, 7
        %v2465 = vsub.s32 3, %v2464
        %v2466 = vrot.slane %v635, %v2465
        %v2467 = vlaneseq
        %v2468 = vshrl.u32 %v2467, 7
        %v2469 = vsub.s32 4, %v2468
        %v2470 = vrot.slane %v635, %v2469
        %v2471 = vlaneseq
        %v2472 = vshrl.u32 %v2471, 7
        %v2473 = vsub.s32 5, %v2472
        %v2474 = vrot.slane %v635, %v2473
        %v2475 = vlaneseq
        %v2476 = vshrl.u32 %v2475, 7
        %v2477 = vsub.s32 6, %v2476
        %v2478 = vrot.slane %v635, %v2477
        %v2479 = vlaneseq
        %v2480 = vshrl.u32 %v2479, 7
        %v2481 = vsub.s32 7, %v2480
        %v2482 = vrot.slane %v635, %v2481
        %v2483 = vlaneseq
        %v2484 = vshrl.u32 %v2483, 7
        %v2485 = vsub.s32 0, %v2484
        %v2486 = vrot.slane %v636, %v2485
        %v2487 = vlaneseq
        %v2488 = vshrl.u32 %v2487, 7
        %v2489 = vsub.s32 1, %v2488
        %v2490 = vrot.slane %v636, %v2489
        %v2491 = vlaneseq
        %v2492 = vshrl.u32 %v2491, 7
        %v2493 = vsub.s32 2, %v2492
        %v2494 = vrot.slane %v636, %v2493
        %v2495 = vlaneseq
        %v2496 = vshrl.u32 %v2495, 7
        %v2497 = vsub.s32 3, %v2496
        %v2498 = vrot.slane %v636, %v2497
        %v2499 = vlaneseq
        %v2500 = vshrl.u32 %v2499, 7
        %v2501 = vsub.s32 4, %v2500
        %v2502 = vrot.slane %v636, %v2501
        %v2503 = vlaneseq
        %v2504 = vshrl.u32 %v2503, 7
        %v2505 = vsub.s32 5, %v2504
        %v2506 = vrot.slane %v636, %v2505
        %v2507 = vlaneseq
        %v2508 = vshrl.u32 %v2507, 7
        %v2509 = vsub.s32 6, %v2508
        %v2510 = vrot.slane %v636, %v2509
        %v2511 = vlaneseq
        %v2512 = vshrl.u32 %v2511, 7
        %v2513 = vsub.s32 7, %v2512
        %v2514 = vrot.slane %v636, %v2513
        %v2563 = vunpack.c.l.b16 %v2415
        %v2564 = vunpack.c.h.b16 %v2415
        %v2565 = vunpack.c.l.b16 %v2416
        %v2566 = vunpack.c.h.b16 %v2416
        %v2567 = vunpack.c.l.b16 %v2417
        %v2568 = vunpack.c.h.b16 %v2417
        %v2569 = vunpack.c.l.b16 %v2418
        %v2570 = vunpack.c.h.b16 %v2418
        %v2571 = vunpack.c.l.b16 %v2419
        %v2572 = vunpack.c.h.b16 %v2419
        %v2573 = vunpack.c.l.b16 %v2420
        %v2574 = vunpack.c.h.b16 %v2420
        %v2575 = vunpack.c.l.b16 %v2421
        %v2576 = vunpack.c.h.b16 %v2421
        %v2577 = vunpack.c.l.b16 %v2422
        %v2578 = vunpack.c.h.b16 %v2422
        %v2579 = vunpack.c.l.b16 %v2423
        %v2580 = vunpack.c.h.b16 %v2423
        %v2581 = vunpack.c.l.b16 %v2424
        %v2582 = vunpack.c.h.b16 %v2424
        %v2583 = vunpack.c.l.b16 %v2425
        %v2584 = vunpack.c.h.b16 %v2425
        %v2585 = vunpack.c.l.b16 %v2426
        %v2586 = vunpack.c.h.b16 %v2426
        %v2587 = vunpack.c.l.b16 %v2427
        %v2588 = vunpack.c.h.b16 %v2427
        %v2589 = vunpack.c.l.b16 %v2428
        %v2590 = vunpack.c.h.b16 %v2428
        %v2591 = vunpack.c.l.b16 %v2429
        %v2592 = vunpack.c.h.b16 %v2429
        %v2593 = vunpack.c.l.b16 %v2430
        %v2594 = vunpack.c.h.b16 %v2430
        %v2595 = vunpack.c.l.b16 %v2431
        %v2596 = vunpack.c.h.b16 %v2431
        %v2597 = vunpack.c.l.b16 %v2432
        %v2598 = vunpack.c.h.b16 %v2432
        %v2599 = vunpack.c.l.b16 %v2433
        %v2600 = vunpack.c.h.b16 %v2433
        %v2601 = vunpack.c.l.b16 %v2434
        %v2602 = vunpack.c.h.b16 %v2434
        %v2603 = vunpack.c.l.b16 %v2435
        %v2604 = vunpack.c.h.b16 %v2435
        %v2605 = vunpack.c.l.b16 %v2436
        %v2606 = vunpack.c.h.b16 %v2436
        %v2607 = vunpack.c.l.b16 %v2437
        %v2608 = vunpack.c.h.b16 %v2437
        %v2609 = vunpack.c.l.b16 %v2438
        %v2610 = vunpack.c.h.b16 %v2438
        %v2611 = vunpack.c.l.b16 %v2439
        %v2612 = vunpack.c.h.b16 %v2439
        %v2613 = vunpack.c.l.b16 %v2440
        %v2614 = vunpack.c.h.b16 %v2440
        %v2615 = vunpack.c.l.b16 %v2441
        %v2616 = vunpack.c.h.b16 %v2441
        %v2617 = vunpack.c.l.b16 %v2442
        %v2618 = vunpack.c.h.b16 %v2442
        %v2619 = vunpack.c.l.b16 %v2443
        %v2620 = vunpack.c.h.b16 %v2443
        %v2621 = vunpack.c.l.b16 %v2444
        %v2622 = vunpack.c.h.b16 %v2444
        %v2623 = vunpack.c.l.b16 %v2445
        %v2624 = vunpack.c.h.b16 %v2445
        %v2625 = vunpack.c.l.b16 %v2446
        %v2626 = vunpack.c.h.b16 %v2446
        %v2627 = vpack.c.b16 %v2579, %v2563
        %v2628 = vpack.c.b16 %v2580, %v2564
        %v2629 = vpack.c.b16 %v2581, %v2565
        %v2630 = vpack.c.b16 %v2582, %v2566
        %v2631 = vpack.c.b16 %v2583, %v2567
        %v2632 = vpack.c.b16 %v2584, %v2568
        %v2633 = vpack.c.b16 %v2585, %v2569
        %v2634 = vpack.c.b16 %v2586, %v2570
        %v2635 = vpack.c.b16 %v2587, %v2571
        %v2636 = vpack.c.b16 %v2588, %v2572
        %v2637 = vpack.c.b16 %v2589, %v2573
        %v2638 = vpack.c.b16 %v2590, %v2574
        %v2639 = vpack.c.b16 %v2591, %v2575
        %v2640 = vpack.c.b16 %v2592, %v2576
        %v2641 = vpack.c.b16 %v2593, %v2577
        %v2642 = vpack.c.b16 %v2594, %v2578
        %v2643 = vpack.c.b16 %v2611, %v2595
        %v2644 = vpack.c.b16 %v2612, %v2596
        %v2645 = vpack.c.b16 %v2613, %v2597
        %v2646 = vpack.c.b16 %v2614, %v2598
        %v2647 = vpack.c.b16 %v2615, %v2599
        %v2648 = vpack.c.b16 %v2616, %v2600
        %v2649 = vpack.c.b16 %v2617, %v2601
        %v2650 = vpack.c.b16 %v2618, %v2602
        %v2651 = vpack.c.b16 %v2619, %v2603
        %v2652 = vpack.c.b16 %v2620, %v2604
        %v2653 = vpack.c.b16 %v2621, %v2605
        %v2654 = vpack.c.b16 %v2622, %v2606
        %v2655 = vpack.c.b16 %v2623, %v2607
        %v2656 = vpack.c.b16 %v2624, %v2608
        %v2657 = vpack.c.b16 %v2625, %v2609
        %v2658 = vpack.c.b16 %v2626, %v2610
        %v2692 = vsel %vm654, %v2447, 0
        %v2695 = vsel %vm654, %v2448, 0
        %2697 = vmatprep.subr.bf16.mxu0 %v2628
        %2698 = vmatpush1.bf16.msra.mxu0 %v2627
        %2699 = vmatprep.subr.bf16.mxu0 %v2644
        %2700 = vmatpush1.bf16.msra.mxu0 %v2643
        %2701 = vmatprep.subr.bf16.mxu0 0
        %2702 = vmatpush1.bf16.msra.mxu0 0
        %2703 = vmatprep.subr.bf16.mxu0 0
        %2704 = vmatpush1.bf16.msra.mxu0 0
        %2705 = vmatprep.subr.bf16.mxu0 0
        %2706 = vmatpush1.bf16.msra.mxu0 0
        %2707 = vmatprep.subr.bf16.mxu0 0
        %2708 = vmatpush1.bf16.msra.mxu0 0
        %2709 = vmatprep.subr.bf16.mxu0 0
        %2710 = vmatpush1.bf16.msra.mxu0 0
        %2711 = vmatprep.subr.bf16.mxu0 0
        %2712 = vmatpush1.bf16.msra.mxu0 0
        %2713 = vmatprep.subr.bf16.mxu0 0
        %2714 = vmatpush1.bf16.msra.mxu0 0
        %2715 = vmatprep.subr.bf16.mxu0 0
        %2716 = vmatpush1.bf16.msra.mxu0 0
        %2717 = vmatprep.subr.bf16.mxu0 0
        %2718 = vmatpush1.bf16.msra.mxu0 0
        %2719 = vmatprep.subr.bf16.mxu0 0
        %2720 = vmatpush1.bf16.msra.mxu0 0
        %2721 = vmatprep.subr.bf16.mxu0 0
        %2722 = vmatpush1.bf16.msra.mxu0 0
        %2723 = vmatprep.subr.bf16.mxu0 0
        %2724 = vmatpush1.bf16.msra.mxu0 0
        %2725 = vmatprep.subr.bf16.mxu0 0
        %2726 = vmatpush1.bf16.msra.mxu0 0
        %2727 = vmatprep.subr.bf16.mxu0 0
        %2728 = vmatpush1.bf16.msra.mxu0 0
        %2729 = vmatprep.mubr.bf16.mxu0 0
        %2730 = vmatmul.mubr.bf16.gmra.mrb[0].mxu0 %v2692
        %v2731 = vpop.f32.mrb[0].mxu0
        %v2732 = vadd.f32 %v2454, %v2731
        %v2733 = vpop.f32.mrb[0].mxu0
        %v2734 = vadd.f32 %v2458, %v2733
        %v2735 = vpop.f32.mrb[0].mxu0
        %v2736 = vadd.f32 %v2454, %v2735
        %v2737 = vpop.f32.mrb[0].mxu0
        %v2738 = vadd.f32 %v2458, %v2737
        %2739 = vmatprep.mubr.bf16.mxu0 0
        %2740 = vmatmul.mubr.bf16.gmra.mrb[0].mxu0 %v2695
        %v2741 = vpop.f32.mrb[0].mxu0
        %v2742 = vadd.f32 %v2454, %v2741
        %v2743 = vpop.f32.mrb[0].mxu0
        %v2744 = vadd.f32 %v2458, %v2743
        %v2745 = vpop.f32.mrb[0].mxu0
        %v2746 = vadd.f32 %v2454, %v2745
        %v2747 = vpop.f32.mrb[0].mxu0
        %v2748 = vadd.f32 %v2458, %v2747
        %2749 = vdwg.mxu0
        %2750 = vmatprep.subr.bf16.mxu0 %v2630
        %2751 = vmatpush1.bf16.msra.mxu0 %v2629
        %2752 = vmatprep.subr.bf16.mxu0 %v2646
        %2753 = vmatpush1.bf16.msra.mxu0 %v2645
        %2754 = vmatprep.subr.bf16.mxu0 0
        %2755 = vmatpush1.bf16.msra.mxu0 0
        %2756 = vmatprep.subr.bf16.mxu0 0
        %2757 = vmatpush1.bf16.msra.mxu0 0
        %2758 = vmatprep.subr.bf16.mxu0 0
        %2759 = vmatpush1.bf16.msra.mxu0 0
        %2760 = vmatprep.subr.bf16.mxu0 0
        %2761 = vmatpush1.bf16.msra.mxu0 0
        %2762 = vmatprep.subr.bf16.mxu0 0
        %2763 = vmatpush1.bf16.msra.mxu0 0
        %2764 = vmatprep.subr.bf16.mxu0 0
        %2765 = vmatpush1.bf16.msra.mxu0 0
        %2766 = vmatprep.subr.bf16.mxu0 0
        %2767 = vmatpush1.bf16.msra.mxu0 0
        %2768 = vmatprep.subr.bf16.mxu0 0
        %2769 = vmatpush1.bf16.msra.mxu0 0
        %2770 = vmatprep.subr.bf16.mxu0 0
        %2771 = vmatpush1.bf16.msra.mxu0 0
        %2772 = vmatprep.subr.bf16.mxu0 0
        %2773 = vmatpush1.bf16.msra.mxu0 0
        %2774 = vmatprep.subr.bf16.mxu0 0
        %2775 = vmatpush1.bf16.msra.mxu0 0
        %2776 = vmatprep.subr.bf16.mxu0 0
        %2777 = vmatpush1.bf16.msra.mxu0 0
        %2778 = vmatprep.subr.bf16.mxu0 0
        %2779 = vmatpush1.bf16.msra.mxu0 0
        %2780 = vmatprep.subr.bf16.mxu0 0
        %2781 = vmatpush1.bf16.msra.mxu0 0
        %2782 = vmatprep.mubr.bf16.mxu0 0
        %2783 = vmatmul.mubr.bf16.gmra.mrb[0].mxu0 %v2692
        %v2784 = vpop.f32.mrb[0].mxu0
        %v2785 = vadd.f32 %v2462, %v2784
        %v2786 = vpop.f32.mrb[0].mxu0
        %v2787 = vadd.f32 %v2466, %v2786
        %v2788 = vpop.f32.mrb[0].mxu0
        %v2789 = vadd.f32 %v2462, %v2788
        %v2790 = vpop.f32.mrb[0].mxu0
        %v2791 = vadd.f32 %v2466, %v2790
        %2792 = vmatprep.mubr.bf16.mxu0 0
        %2793 = vmatmul.mubr.bf16.gmra.mrb[0].mxu0 %v2695
        %v2794 = vpop.f32.mrb[0].mxu0
        %v2795 = vadd.f32 %v2462, %v2794
        %v2796 = vpop.f32.mrb[0].mxu0
        %v2797 = vadd.f32 %v2466, %v2796
        %v2798 = vpop.f32.mrb[0].mxu0
        %v2799 = vadd.f32 %v2462, %v2798
        %v2800 = vpop.f32.mrb[0].mxu0
        %v2801 = vadd.f32 %v2466, %v2800
        %2802 = vdwg.mxu0
        %2803 = vmatprep.subr.bf16.mxu0 %v2632
        %2804 = vmatpush1.bf16.msra.mxu0 %v2631
        %2805 = vmatprep.subr.bf16.mxu0 %v2648
        %2806 = vmatpush1.bf16.msra.mxu0 %v2647
        %2807 = vmatprep.subr.bf16.mxu0 0
        %2808 = vmatpush1.bf16.msra.mxu0 0
        %2809 = vmatprep.subr.bf16.mxu0 0
        %2810 = vmatpush1.bf16.msra.mxu0 0
        %2811 = vmatprep.subr.bf16.mxu0 0
        %2812 = vmatpush1.bf16.msra.mxu0 0
        %2813 = vmatprep.subr.bf16.mxu0 0
        %2814 = vmatpush1.bf16.msra.mxu0 0
        %2815 = vmatprep.subr.bf16.mxu0 0
        %2816 = vmatpush1.bf16.msra.mxu0 0
        %2817 = vmatprep.subr.bf16.mxu0 0
        %2818 = vmatpush1.bf16.msra.mxu0 0
        %2819 = vmatprep.subr.bf16.mxu0 0
        %2820 = vmatpush1.bf16.msra.mxu0 0
        %2821 = vmatprep.subr.bf16.mxu0 0
        %2822 = vmatpush1.bf16.msra.mxu0 0
        %2823 = vmatprep.subr.bf16.mxu0 0
        %2824 = vmatpush1.bf16.msra.mxu0 0
        %2825 = vmatprep.subr.bf16.mxu0 0
        %2826 = vmatpush1.bf16.msra.mxu0 0
        %2827 = vmatprep.subr.bf16.mxu0 0
        %2828 = vmatpush1.bf16.msra.mxu0 0
        %2829 = vmatprep.subr.bf16.mxu0 0
        %2830 = vmatpush1.bf16.msra.mxu0 0
        %2831 = vmatprep.subr.bf16.mxu0 0
        %2832 = vmatpush1.bf16.msra.mxu0 0
        %2833 = vmatprep.subr.bf16.mxu0 0
        %2834 = vmatpush1.bf16.msra.mxu0 0
        %2835 = vmatprep.mubr.bf16.mxu0 0
        %2836 = vmatmul.mubr.bf16.gmra.mrb[0].mxu0 %v2692
        %v2837 = vpop.f32.mrb[0].mxu0
        %v2838 = vadd.f32 %v2470, %v2837
        %v2839 = vpop.f32.mrb[0].mxu0
        %v2840 = vadd.f32 %v2474, %v2839
        %v2841 = vpop.f32.mrb[0].mxu0
        %v2842 = vadd.f32 %v2470, %v2841
        %v2843 = vpop.f32.mrb[0].mxu0
        %v2844 = vadd.f32 %v2474, %v2843
        %2845 = vmatprep.mubr.bf16.mxu0 0
        %2846 = vmatmul.mubr.bf16.gmra.mrb[0].mxu0 %v2695
        %v2847 = vpop.f32.mrb[0].mxu0
        %v2848 = vadd.f32 %v2470, %v2847
        %v2849 = vpop.f32.mrb[0].mxu0
        %v2850 = vadd.f32 %v2474, %v2849
        %v2851 = vpop.f32.mrb[0].mxu0
        %v2852 = vadd.f32 %v2470, %v2851
        %v2853 = vpop.f32.mrb[0].mxu0
        %v2854 = vadd.f32 %v2474, %v2853
        %2855 = vdwg.mxu0
        %2856 = vmatprep.subr.bf16.mxu0 %v2634
        %2857 = vmatpush1.bf16.msra.mxu0 %v2633
        %2858 = vmatprep.subr.bf16.mxu0 %v2650
        %2859 = vmatpush1.bf16.msra.mxu0 %v2649
        %2860 = vmatprep.subr.bf16.mxu0 0
        %2861 = vmatpush1.bf16.msra.mxu0 0
        %2862 = vmatprep.subr.bf16.mxu0 0
        %2863 = vmatpush1.bf16.msra.mxu0 0
        %2864 = vmatprep.subr.bf16.mxu0 0
        %2865 = vmatpush1.bf16.msra.mxu0 0
        %2866 = vmatprep.subr.bf16.mxu0 0
        %2867 = vmatpush1.bf16.msra.mxu0 0
        %2868 = vmatprep.subr.bf16.mxu0 0
        %2869 = vmatpush1.bf16.msra.mxu0 0
        %2870 = vmatprep.subr.bf16.mxu0 0
        %2871 = vmatpush1.bf16.msra.mxu0 0
        %2872 = vmatprep.subr.bf16.mxu0 0
        %2873 = vmatpush1.bf16.msra.mxu0 0
        %2874 = vmatprep.subr.bf16.mxu0 0
        %2875 = vmatpush1.bf16.msra.mxu0 0
        %2876 = vmatprep.subr.bf16.mxu0 0
        %2877 = vmatpush1.bf16.msra.mxu0 0
        %2878 = vmatprep.subr.bf16.mxu0 0
        %2879 = vmatpush1.bf16.msra.mxu0 0
        %2880 = vmatprep.subr.bf16.mxu0 0
        %2881 = vmatpush1.bf16.msra.mxu0 0
        %2882 = vmatprep.subr.bf16.mxu0 0
        %2883 = vmatpush1.bf16.msra.mxu0 0
        %2884 = vmatprep.subr.bf16.mxu0 0
        %2885 = vmatpush1.bf16.msra.mxu0 0
        %2886 = vmatprep.subr.bf16.mxu0 0
        %2887 = vmatpush1.bf16.msra.mxu0 0
        %2888 = vmatprep.mubr.bf16.mxu0 0
        %2889 = vmatmul.mubr.bf16.gmra.mrb[0].mxu0 %v2692
        %v2890 = vpop.f32.mrb[0].mxu0
        %v2891 = vadd.f32 %v2478, %v2890
        %v2892 = vpop.f32.mrb[0].mxu0
        %v2893 = vadd.f32 %v2482, %v2892
        %v2894 = vpop.f32.mrb[0].mxu0
        %v2895 = vadd.f32 %v2478, %v2894
        %v2896 = vpop.f32.mrb[0].mxu0
        %v2897 = vadd.f32 %v2482, %v2896
        %2898 = vmatprep.mubr.bf16.mxu0 0
        %2899 = vmatmul.mubr.bf16.gmra.mrb[0].mxu0 %v2695
        %v2900 = vpop.f32.mrb[0].mxu0
        %v2901 = vadd.f32 %v2478, %v2900
        %v2902 = vpop.f32.mrb[0].mxu0
        %v2903 = vadd.f32 %v2482, %v2902
        %v2904 = vpop.f32.mrb[0].mxu0
        %v2905 = vadd.f32 %v2478, %v2904
        %v2906 = vpop.f32.mrb[0].mxu0
        %v2907 = vadd.f32 %v2482, %v2906
        %2908 = vdwg.mxu0
        %2909 = vmatprep.subr.bf16.mxu0 %v2636
        %2910 = vmatpush1.bf16.msra.mxu0 %v2635
        %2911 = vmatprep.subr.bf16.mxu0 %v2652
        %2912 = vmatpush1.bf16.msra.mxu0 %v2651
        %2913 = vmatprep.subr.bf16.mxu0 0
        %2914 = vmatpush1.bf16.msra.mxu0 0
        %2915 = vmatprep.subr.bf16.mxu0 0
        %2916 = vmatpush1.bf16.msra.mxu0 0
        %2917 = vmatprep.subr.bf16.mxu0 0
        %2918 = vmatpush1.bf16.msra.mxu0 0
        %2919 = vmatprep.subr.bf16.mxu0 0
        %2920 = vmatpush1.bf16.msra.mxu0 0
        %2921 = vmatprep.subr.bf16.mxu0 0
        %2922 = vmatpush1.bf16.msra.mxu0 0
        %2923 = vmatprep.subr.bf16.mxu0 0
        %2924 = vmatpush1.bf16.msra.mxu0 0
        %2925 = vmatprep.subr.bf16.mxu0 0
        %2926 = vmatpush1.bf16.msra.mxu0 0
        %2927 = vmatprep.subr.bf16.mxu0 0
        %2928 = vmatpush1.bf16.msra.mxu0 0
        %2929 = vmatprep.subr.bf16.mxu0 0
        %2930 = vmatpush1.bf16.msra.mxu0 0
        %2931 = vmatprep.subr.bf16.mxu0 0
        %2932 = vmatpush1.bf16.msra.mxu0 0
        %2933 = vmatprep.subr.bf16.mxu0 0
        %2934 = vmatpush1.bf16.msra.mxu0 0
        %2935 = vmatprep.subr.bf16.mxu0 0
        %2936 = vmatpush1.bf16.msra.mxu0 0
        %2937 = vmatprep.subr.bf16.mxu0 0
        %2938 = vmatpush1.bf16.msra.mxu0 0
        %2939 = vmatprep.subr.bf16.mxu0 0
        %2940 = vmatpush1.bf16.msra.mxu0 0
        %2941 = vmatprep.mubr.bf16.mxu0 0
        %2942 = vmatmul.mubr.bf16.gmra.mrb[0].mxu0 %v2692
        %v2943 = vpop.f32.mrb[0].mxu0
        %v2944 = vadd.f32 %v2486, %v2943
        %v2945 = vpop.f32.mrb[0].mxu0
        %v2946 = vadd.f32 %v2490, %v2945
        %v2947 = vpop.f32.mrb[0].mxu0
        %v2948 = vadd.f32 %v2486, %v2947
        %v2949 = vpop.f32.mrb[0].mxu0
        %v2950 = vadd.f32 %v2490, %v2949
        %2951 = vmatprep.mubr.bf16.mxu0 0
        %2952 = vmatmul.mubr.bf16.gmra.mrb[0].mxu0 %v2695
        %v2953 = vpop.f32.mrb[0].mxu0
        %v2954 = vadd.f32 %v2486, %v2953
        %v2955 = vpop.f32.mrb[0].mxu0
        %v2956 = vadd.f32 %v2490, %v2955
        %v2957 = vpop.f32.mrb[0].mxu0
        %v2958 = vadd.f32 %v2486, %v2957
        %v2959 = vpop.f32.mrb[0].mxu0
        %v2960 = vadd.f32 %v2490, %v2959
        %2961 = vdwg.mxu0
        %2962 = vmatprep.subr.bf16.mxu0 %v2638
        %2963 = vmatpush1.bf16.msra.mxu0 %v2637
        %2964 = vmatprep.subr.bf16.mxu0 %v2654
        %2965 = vmatpush1.bf16.msra.mxu0 %v2653
        %2966 = vmatprep.subr.bf16.mxu0 0
        %2967 = vmatpush1.bf16.msra.mxu0 0
        %2968 = vmatprep.subr.bf16.mxu0 0
        %2969 = vmatpush1.bf16.msra.mxu0 0
        %2970 = vmatprep.subr.bf16.mxu0 0
        %2971 = vmatpush1.bf16.msra.mxu0 0
        %2972 = vmatprep.subr.bf16.mxu0 0
        %2973 = vmatpush1.bf16.msra.mxu0 0
        %2974 = vmatprep.subr.bf16.mxu0 0
        %2975 = vmatpush1.bf16.msra.mxu0 0
        %2976 = vmatprep.subr.bf16.mxu0 0
        %2977 = vmatpush1.bf16.msra.mxu0 0
        %2978 = vmatprep.subr.bf16.mxu0 0
        %2979 = vmatpush1.bf16.msra.mxu0 0
        %2980 = vmatprep.subr.bf16.mxu0 0
        %2981 = vmatpush1.bf16.msra.mxu0 0
        %2982 = vmatprep.subr.bf16.mxu0 0
        %2983 = vmatpush1.bf16.msra.mxu0 0
        %2984 = vmatprep.subr.bf16.mxu0 0
        %2985 = vmatpush1.bf16.msra.mxu0 0
        %2986 = vmatprep.subr.bf16.mxu0 0
        %2987 = vmatpush1.bf16.msra.mxu0 0
        %2988 = vmatprep.subr.bf16.mxu0 0
        %2989 = vmatpush1.bf16.msra.mxu0 0
        %2990 = vmatprep.subr.bf16.mxu0 0
        %2991 = vmatpush1.bf16.msra.mxu0 0
        %2992 = vmatprep.subr.bf16.mxu0 0
        %2993 = vmatpush1.bf16.msra.mxu0 0
        %2994 = vmatprep.mubr.bf16.mxu0 0
        %2995 = vmatmul.mubr.bf16.gmra.mrb[0].mxu0 %v2692
        %v2996 = vpop.f32.mrb[0].mxu0
        %v2997 = vadd.f32 %v2494, %v2996
        %v2998 = vpop.f32.mrb[0].mxu0
        %v2999 = vadd.f32 %v2498, %v2998
        %v3000 = vpop.f32.mrb[0].mxu0
        %v3001 = vadd.f32 %v2494, %v3000
        %v3002 = vpop.f32.mrb[0].mxu0
        %v3003 = vadd.f32 %v2498, %v3002
        %3004 = vmatprep.mubr.bf16.mxu0 0
        %3005 = vmatmul.mubr.bf16.gmra.mrb[0].mxu0 %v2695
        %v3006 = vpop.f32.mrb[0].mxu0
        %v3007 = vadd.f32 %v2494, %v3006
        %v3008 = vpop.f32.mrb[0].mxu0
        %v3009 = vadd.f32 %v2498, %v3008
        %v3010 = vpop.f32.mrb[0].mxu0
        %v3011 = vadd.f32 %v2494, %v3010
        %v3012 = vpop.f32.mrb[0].mxu0
        %v3013 = vadd.f32 %v2498, %v3012
        %3014 = vdwg.mxu0
        %3015 = vmatprep.subr.bf16.mxu0 %v2640
        %3016 = vmatpush1.bf16.msra.mxu0 %v2639
        %3017 = vmatprep.subr.bf16.mxu0 %v2656
        %3018 = vmatpush1.bf16.msra.mxu0 %v2655
        %3019 = vmatprep.subr.bf16.mxu0 0
        %3020 = vmatpush1.bf16.msra.mxu0 0
        %3021 = vmatprep.subr.bf16.mxu0 0
        %3022 = vmatpush1.bf16.msra.mxu0 0
        %3023 = vmatprep.subr.bf16.mxu0 0
        %3024 = vmatpush1.bf16.msra.mxu0 0
        %3025 = vmatprep.subr.bf16.mxu0 0
        %3026 = vmatpush1.bf16.msra.mxu0 0
        %3027 = vmatprep.subr.bf16.mxu0 0
        %3028 = vmatpush1.bf16.msra.mxu0 0
        %3029 = vmatprep.subr.bf16.mxu0 0
        %3030 = vmatpush1.bf16.msra.mxu0 0
        %3031 = vmatprep.subr.bf16.mxu0 0
        %3032 = vmatpush1.bf16.msra.mxu0 0
        %3033 = vmatprep.subr.bf16.mxu0 0
        %3034 = vmatpush1.bf16.msra.mxu0 0
        %3035 = vmatprep.subr.bf16.mxu0 0
        %3036 = vmatpush1.bf16.msra.mxu0 0
        %3037 = vmatprep.subr.bf16.mxu0 0
        %3038 = vmatpush1.bf16.msra.mxu0 0
        %3039 = vmatprep.subr.bf16.mxu0 0
        %3040 = vmatpush1.bf16.msra.mxu0 0
        %3041 = vmatprep.subr.bf16.mxu0 0
        %3042 = vmatpush1.bf16.msra.mxu0 0
        %3043 = vmatprep.subr.bf16.mxu0 0
        %3044 = vmatpush1.bf16.msra.mxu0 0
        %3045 = vmatprep.subr.bf16.mxu0 0
        %3046 = vmatpush1.bf16.msra.mxu0 0
        %3047 = vmatprep.mubr.bf16.mxu0 0
        %3048 = vmatmul.mubr.bf16.gmra.mrb[0].mxu0 %v2692
        %v3049 = vpop.f32.mrb[0].mxu0
        %v3050 = vadd.f32 %v2502, %v3049
        %v3051 = vpop.f32.mrb[0].mxu0
        %v3052 = vadd.f32 %v2506, %v3051
        %v3053 = vpop.f32.mrb[0].mxu0
        %v3054 = vadd.f32 %v2502, %v3053
        %v3055 = vpop.f32.mrb[0].mxu0
        %v3056 = vadd.f32 %v2506, %v3055
        %3057 = vmatprep.mubr.bf16.mxu0 0
        %3058 = vmatmul.mubr.bf16.gmra.mrb[0].mxu0 %v2695
        %v3059 = vpop.f32.mrb[0].mxu0
        %v3060 = vadd.f32 %v2502, %v3059
        %v3061 = vpop.f32.mrb[0].mxu0
        %v3062 = vadd.f32 %v2506, %v3061
        %v3063 = vpop.f32.mrb[0].mxu0
        %v3064 = vadd.f32 %v2502, %v3063
        %v3065 = vpop.f32.mrb[0].mxu0
        %v3066 = vadd.f32 %v2506, %v3065
        %3067 = vdwg.mxu0
        %3068 = vmatprep.subr.bf16.mxu0 %v2642
        %3069 = vmatpush1.bf16.msra.mxu0 %v2641
        %3070 = vmatprep.subr.bf16.mxu0 %v2658
        %3071 = vmatpush1.bf16.msra.mxu0 %v2657
        %3072 = vmatprep.subr.bf16.mxu0 0
        %3073 = vmatpush1.bf16.msra.mxu0 0
        %3074 = vmatprep.subr.bf16.mxu0 0
        %3075 = vmatpush1.bf16.msra.mxu0 0
        %3076 = vmatprep.subr.bf16.mxu0 0
        %3077 = vmatpush1.bf16.msra.mxu0 0
        %3078 = vmatprep.subr.bf16.mxu0 0
        %3079 = vmatpush1.bf16.msra.mxu0 0
        %3080 = vmatprep.subr.bf16.mxu0 0
        %3081 = vmatpush1.bf16.msra.mxu0 0
        %3082 = vmatprep.subr.bf16.mxu0 0
        %3083 = vmatpush1.bf16.msra.mxu0 0
        %3084 = vmatprep.subr.bf16.mxu0 0
        %3085 = vmatpush1.bf16.msra.mxu0 0
        %3086 = vmatprep.subr.bf16.mxu0 0
        %3087 = vmatpush1.bf16.msra.mxu0 0
        %3088 = vmatprep.subr.bf16.mxu0 0
        %3089 = vmatpush1.bf16.msra.mxu0 0
        %3090 = vmatprep.subr.bf16.mxu0 0
        %3091 = vmatpush1.bf16.msra.mxu0 0
        %3092 = vmatprep.subr.bf16.mxu0 0
        %3093 = vmatpush1.bf16.msra.mxu0 0
        %3094 = vmatprep.subr.bf16.mxu0 0
        %3095 = vmatpush1.bf16.msra.mxu0 0
        %3096 = vmatprep.subr.bf16.mxu0 0
        %3097 = vmatpush1.bf16.msra.mxu0 0
        %3098 = vmatprep.subr.bf16.mxu0 0
        %3099 = vmatpush1.bf16.msra.mxu0 0
        %3100 = vmatprep.mubr.bf16.mxu0 0
        %3101 = vmatmul.mubr.bf16.gmra.mrb[0].mxu0 %v2692
        %v3102 = vpop.f32.mrb[0].mxu0
        %v3103 = vadd.f32 %v2510, %v3102
        %v3104 = vpop.f32.mrb[0].mxu0
        %v3105 = vadd.f32 %v2514, %v3104
        %v3106 = vpop.f32.mrb[0].mxu0
        %v3107 = vadd.f32 %v2510, %v3106
        %v3108 = vpop.f32.mrb[0].mxu0
        %v3109 = vadd.f32 %v2514, %v3108
        %3110 = vmatprep.mubr.bf16.mxu0 0
        %3111 = vmatmul.mubr.bf16.gmra.mrb[0].mxu0 %v2695
        %v3112 = vpop.f32.mrb[0].mxu0
        %v3113 = vadd.f32 %v2510, %v3112
        %v3114 = vpop.f32.mrb[0].mxu0
        %v3115 = vadd.f32 %v2514, %v3114
        %v3116 = vpop.f32.mrb[0].mxu0
        %v3117 = vadd.f32 %v2510, %v3116
        %v3118 = vpop.f32.mrb[0].mxu0
        %v3119 = vadd.f32 %v2514, %v3118
        %3120 = vdwg.mxu0
        %v3121 = vmax.f32 %v2732, 0.0
        %v3122 = vmax.f32 %v2734, 0.0
        %v3123 = vmax.f32 %v2785, 0.0
        %v3124 = vmax.f32 %v2787, 0.0
        %v3125 = vmax.f32 %v2838, 0.0
        %v3126 = vmax.f32 %v2840, 0.0
        %v3127 = vmax.f32 %v2891, 0.0
        %v3128 = vmax.f32 %v2893, 0.0
        %v3129 = vmax.f32 %v2944, 0.0
        %v3130 = vmax.f32 %v2946, 0.0
        %v3131 = vmax.f32 %v2997, 0.0
        %v3132 = vmax.f32 %v2999, 0.0
        %v3133 = vmax.f32 %v3050, 0.0
        %v3134 = vmax.f32 %v3052, 0.0
        %v3135 = vmax.f32 %v3103, 0.0
        %v3136 = vmax.f32 %v3105, 0.0
        %v3137 = vmax.f32 %v2736, 0.0
        %v3138 = vmax.f32 %v2738, 0.0
        %v3139 = vmax.f32 %v2789, 0.0
        %v3140 = vmax.f32 %v2791, 0.0
        %v3141 = vmax.f32 %v2842, 0.0
        %v3142 = vmax.f32 %v2844, 0.0
        %v3143 = vmax.f32 %v2895, 0.0
        %v3144 = vmax.f32 %v2897, 0.0
        %v3145 = vmax.f32 %v2948, 0.0
        %v3146 = vmax.f32 %v2950, 0.0
        %v3147 = vmax.f32 %v3001, 0.0
        %v3148 = vmax.f32 %v3003, 0.0
        %v3149 = vmax.f32 %v3054, 0.0
        %v3150 = vmax.f32 %v3056, 0.0
        %v3151 = vmax.f32 %v3107, 0.0
        %v3152 = vmax.f32 %v3109, 0.0
        %v3153 = vmax.f32 %v2742, 0.0
        %v3154 = vmax.f32 %v2744, 0.0
        %v3155 = vmax.f32 %v2795, 0.0
        %v3156 = vmax.f32 %v2797, 0.0
        %v3157 = vmax.f32 %v2848, 0.0
        %v3158 = vmax.f32 %v2850, 0.0
        %v3159 = vmax.f32 %v2901, 0.0
        %v3160 = vmax.f32 %v2903, 0.0
        %v3161 = vmax.f32 %v2954, 0.0
        %v3162 = vmax.f32 %v2956, 0.0
        %v3163 = vmax.f32 %v3007, 0.0
        %v3164 = vmax.f32 %v3009, 0.0
        %v3165 = vmax.f32 %v3060, 0.0
        %v3166 = vmax.f32 %v3062, 0.0
        %v3167 = vmax.f32 %v3113, 0.0
        %v3168 = vmax.f32 %v3115, 0.0
        %v3169 = vmax.f32 %v2746, 0.0
        %v3170 = vmax.f32 %v2748, 0.0
        %v3171 = vmax.f32 %v2799, 0.0
        %v3172 = vmax.f32 %v2801, 0.0
        %v3173 = vmax.f32 %v2852, 0.0
        %v3174 = vmax.f32 %v2854, 0.0
        %v3175 = vmax.f32 %v2905, 0.0
        %v3176 = vmax.f32 %v2907, 0.0
        %v3177 = vmax.f32 %v2958, 0.0
        %v3178 = vmax.f32 %v2960, 0.0
        %v3179 = vmax.f32 %v3011, 0.0
        %v3180 = vmax.f32 %v3013, 0.0
        %v3181 = vmax.f32 %v3064, 0.0
        %v3182 = vmax.f32 %v3066, 0.0
        %v3183 = vmax.f32 %v3117, 0.0
        %v3184 = vmax.f32 %v3119, 0.0
        %v3185 = vld [vmem:[%s601] sm:$0xf]
        %v3186 = vld [vmem:[%s601 + $0x4] sm:$0xf]
        %v3187 = vld [vmem:[%s601 + $0x8] sm:$0xf]
        %v3188 = vld [vmem:[%s601 + $0xc] sm:$0xf]
        %v3189 = vld [vmem:[%s601 + $0x10] sm:$0xf]
        %v3190 = vld [vmem:[%s601 + $0x14] sm:$0xf]
        %v3191 = vld [vmem:[%s601 + $0x18] sm:$0xf]
        %v3192 = vld [vmem:[%s601 + $0x1c] sm:$0xf]
        %v3193 = vld [vmem:[%s601 + $0x20] sm:$0xf]
        %v3194 = vld [vmem:[%s601 + $0x24] sm:$0xf]
        %v3195 = vld [vmem:[%s601 + $0x28] sm:$0xf]
        %v3196 = vld [vmem:[%s601 + $0x2c] sm:$0xf]
        %v3197 = vld [vmem:[%s601 + $0x30] sm:$0xf]
        %v3198 = vld [vmem:[%s601 + $0x34] sm:$0xf]
        %v3199 = vld [vmem:[%s601 + $0x38] sm:$0xf]
        %v3200 = vld [vmem:[%s601 + $0x3c] sm:$0xf]
        %v3201 = vld [vmem:[%s601 + $0x40] sm:$0xf]
        %v3202 = vld [vmem:[%s601 + $0x44] sm:$0xf]
        %v3203 = vld [vmem:[%s601 + $0x48] sm:$0xf]
        %v3204 = vld [vmem:[%s601 + $0x4c] sm:$0xf]
        %v3205 = vld [vmem:[%s601 + $0x50] sm:$0xf]
        %v3206 = vld [vmem:[%s601 + $0x54] sm:$0xf]
        %v3207 = vld [vmem:[%s601 + $0x58] sm:$0xf]
        %v3208 = vld [vmem:[%s601 + $0x5c] sm:$0xf]
        %v3209 = vld [vmem:[%s601 + $0x60] sm:$0xf]
        %v3210 = vld [vmem:[%s601 + $0x64] sm:$0xf]
        %v3211 = vld [vmem:[%s601 + $0x68] sm:$0xf]
        %v3212 = vld [vmem:[%s601 + $0x6c] sm:$0xf]
        %v3213 = vld [vmem:[%s601 + $0x70] sm:$0xf]
        %v3214 = vld [vmem:[%s601 + $0x74] sm:$0xf]
        %v3215 = vld [vmem:[%s601 + $0x78] sm:$0xf]
        %v3216 = vld [vmem:[%s601 + $0x7c] sm:$0xf]
        %v3217 = vld [vmem:[%s601 + $0x80] sm:$0xf]
        %v3218 = vld [vmem:[%s601 + $0x84] sm:$0xf]
        %v3219 = vld [vmem:[%s601 + $0x88] sm:$0xf]
        %v3220 = vld [vmem:[%s601 + $0x8c] sm:$0xf]
        %v3221 = vld [vmem:[%s601 + $0x90] sm:$0xf]
        %v3222 = vld [vmem:[%s601 + $0x94] sm:$0xf]
        %v3223 = vld [vmem:[%s601 + $0x98] sm:$0xf]
        %v3224 = vld [vmem:[%s601 + $0x9c] sm:$0xf]
        %v3225 = vld [vmem:[%s601 + $0xa0] sm:$0xf]
        %v3226 = vld [vmem:[%s601 + $0xa4] sm:$0xf]
        %v3227 = vld [vmem:[%s601 + $0xa8] sm:$0xf]
        %v3228 = vld [vmem:[%s601 + $0xac] sm:$0xf]
        %v3229 = vld [vmem:[%s601 + $0xb0] sm:$0xf]
        %v3230 = vld [vmem:[%s601 + $0xb4] sm:$0xf]
        %v3231 = vld [vmem:[%s601 + $0xb8] sm:$0xf]
        %v3232 = vld [vmem:[%s601 + $0xbc] sm:$0xf]
        %v3233 = vld [vmem:[%s601 + $0xc0] sm:$0xf]
        %v3234 = vld [vmem:[%s601 + $0xc4] sm:$0xf]
        %v3235 = vld [vmem:[%s601 + $0xc8] sm:$0xf]
        %v3236 = vld [vmem:[%s601 + $0xcc] sm:$0xf]
        %v3237 = vld [vmem:[%s601 + $0xd0] sm:$0xf]
        %v3238 = vld [vmem:[%s601 + $0xd4] sm:$0xf]
        %v3239 = vld [vmem:[%s601 + $0xd8] sm:$0xf]
        %v3240 = vld [vmem:[%s601 + $0xdc] sm:$0xf]
        %v3241 = vld [vmem:[%s601 + $0xe0] sm:$0xf]
        %v3242 = vld [vmem:[%s601 + $0xe4] sm:$0xf]
        %v3243 = vld [vmem:[%s601 + $0xe8] sm:$0xf]
        %v3244 = vld [vmem:[%s601 + $0xec] sm:$0xf]
        %v3245 = vld [vmem:[%s601 + $0xf0] sm:$0xf]
        %v3246 = vld [vmem:[%s601 + $0xf4] sm:$0xf]
        %v3247 = vld [vmem:[%s601 + $0xf8] sm:$0xf]
        %v3248 = vld [vmem:[%s601 + $0xfc] sm:$0xf]
        %v3249 = vld [vmem:[%s601 + $0x100] sm:$0xf]
        %v3250 = vld [vmem:[%s601 + $0x104] sm:$0xf]
        %v3251 = vld [vmem:[%s601 + $0x108] sm:$0xf]
        %v3252 = vld [vmem:[%s601 + $0x10c] sm:$0xf]
        %v3253 = vld [vmem:[%s601 + $0x110] sm:$0xf]
        %v3254 = vld [vmem:[%s601 + $0x114] sm:$0xf]
        %v3255 = vld [vmem:[%s601 + $0x118] sm:$0xf]
        %v3256 = vld [vmem:[%s601 + $0x11c] sm:$0xf]
        %v3257 = vld [vmem:[%s601 + $0x120] sm:$0xf]
        %v3258 = vld [vmem:[%s601 + $0x124] sm:$0xf]
        %v3259 = vld [vmem:[%s601 + $0x128] sm:$0xf]
        %v3260 = vld [vmem:[%s601 + $0x12c] sm:$0xf]
        %v3261 = vld [vmem:[%s601 + $0x130] sm:$0xf]
        %v3262 = vld [vmem:[%s601 + $0x134] sm:$0xf]
        %v3263 = vld [vmem:[%s601 + $0x138] sm:$0xf]
        %v3264 = vld [vmem:[%s601 + $0x13c] sm:$0xf]
        %v3265 = vld [vmem:[%s601 + $0x140] sm:$0xf]
        %v3266 = vld [vmem:[%s601 + $0x144] sm:$0xf]
        %v3267 = vld [vmem:[%s601 + $0x148] sm:$0xf]
        %v3268 = vld [vmem:[%s601 + $0x14c] sm:$0xf]
        %v3269 = vld [vmem:[%s601 + $0x150] sm:$0xf]
        %v3270 = vld [vmem:[%s601 + $0x154] sm:$0xf]
        %v3271 = vld [vmem:[%s601 + $0x158] sm:$0xf]
        %v3272 = vld [vmem:[%s601 + $0x15c] sm:$0xf]
        %v3273 = vld [vmem:[%s601 + $0x160] sm:$0xf]
        %v3274 = vld [vmem:[%s601 + $0x164] sm:$0xf]
        %v3275 = vld [vmem:[%s601 + $0x168] sm:$0xf]
        %v3276 = vld [vmem:[%s601 + $0x16c] sm:$0xf]
        %v3277 = vld [vmem:[%s601 + $0x170] sm:$0xf]
        %v3278 = vld [vmem:[%s601 + $0x174] sm:$0xf]
        %v3279 = vld [vmem:[%s601 + $0x178] sm:$0xf]
        %v3280 = vld [vmem:[%s601 + $0x17c] sm:$0xf]
        %v3281 = vld [vmem:[%s601 + $0x180] sm:$0xf]
        %v3282 = vld [vmem:[%s601 + $0x184] sm:$0xf]
        %v3283 = vld [vmem:[%s601 + $0x188] sm:$0xf]
        %v3284 = vld [vmem:[%s601 + $0x18c] sm:$0xf]
        %v3285 = vld [vmem:[%s601 + $0x190] sm:$0xf]
        %v3286 = vld [vmem:[%s601 + $0x194] sm:$0xf]
        %v3287 = vld [vmem:[%s601 + $0x198] sm:$0xf]
        %v3288 = vld [vmem:[%s601 + $0x19c] sm:$0xf]
        %v3289 = vld [vmem:[%s601 + $0x1a0] sm:$0xf]
        %v3290 = vld [vmem:[%s601 + $0x1a4] sm:$0xf]
        %v3291 = vld [vmem:[%s601 + $0x1a8] sm:$0xf]
        %v3292 = vld [vmem:[%s601 + $0x1ac] sm:$0xf]
        %v3293 = vld [vmem:[%s601 + $0x1b0] sm:$0xf]
        %v3294 = vld [vmem:[%s601 + $0x1b4] sm:$0xf]
        %v3295 = vld [vmem:[%s601 + $0x1b8] sm:$0xf]
        %v3296 = vld [vmem:[%s601 + $0x1bc] sm:$0xf]
        %v3297 = vld [vmem:[%s601 + $0x1c0] sm:$0xf]
        %v3298 = vld [vmem:[%s601 + $0x1c4] sm:$0xf]
        %v3299 = vld [vmem:[%s601 + $0x1c8] sm:$0xf]
        %v3300 = vld [vmem:[%s601 + $0x1cc] sm:$0xf]
        %v3301 = vld [vmem:[%s601 + $0x1d0] sm:$0xf]
        %v3302 = vld [vmem:[%s601 + $0x1d4] sm:$0xf]
        %v3303 = vld [vmem:[%s601 + $0x1d8] sm:$0xf]
        %v3304 = vld [vmem:[%s601 + $0x1dc] sm:$0xf]
        %v3305 = vld [vmem:[%s601 + $0x1e0] sm:$0xf]
        %v3306 = vld [vmem:[%s601 + $0x1e4] sm:$0xf]
        %v3307 = vld [vmem:[%s601 + $0x1e8] sm:$0xf]
        %v3308 = vld [vmem:[%s601 + $0x1ec] sm:$0xf]
        %v3309 = vld [vmem:[%s601 + $0x1f0] sm:$0xf]
        %v3310 = vld [vmem:[%s601 + $0x1f4] sm:$0xf]
        %v3311 = vld [vmem:[%s601 + $0x1f8] sm:$0xf]
        %v3312 = vld [vmem:[%s601 + $0x1fc] sm:$0xf]
        %v3313 = vld [vmem:[%s601 + $0x200] sm:$0xf]
        %v3314 = vld [vmem:[%s601 + $0x204] sm:$0xf]
        %v3315 = vld [vmem:[%s601 + $0x208] sm:$0xf]
        %v3316 = vld [vmem:[%s601 + $0x20c] sm:$0xf]
        %v3317 = vld [vmem:[%s601 + $0x210] sm:$0xf]
        %v3318 = vld [vmem:[%s601 + $0x214] sm:$0xf]
        %v3319 = vld [vmem:[%s601 + $0x218] sm:$0xf]
        %v3320 = vld [vmem:[%s601 + $0x21c] sm:$0xf]
        %v3321 = vld [vmem:[%s601 + $0x220] sm:$0xf]
        %v3322 = vld [vmem:[%s601 + $0x224] sm:$0xf]
        %v3323 = vld [vmem:[%s601 + $0x228] sm:$0xf]
        %v3324 = vld [vmem:[%s601 + $0x22c] sm:$0xf]
        %v3325 = vld [vmem:[%s601 + $0x230] sm:$0xf]
        %v3326 = vld [vmem:[%s601 + $0x234] sm:$0xf]
        %v3327 = vld [vmem:[%s601 + $0x238] sm:$0xf]
        %v3328 = vld [vmem:[%s601 + $0x23c] sm:$0xf]
        %v3329 = vld [vmem:[%s601 + $0x240] sm:$0xf]
        %v3330 = vld [vmem:[%s601 + $0x244] sm:$0xf]
        %v3331 = vld [vmem:[%s601 + $0x248] sm:$0xf]
        %v3332 = vld [vmem:[%s601 + $0x24c] sm:$0xf]
        %v3333 = vld [vmem:[%s601 + $0x250] sm:$0xf]
        %v3334 = vld [vmem:[%s601 + $0x254] sm:$0xf]
        %v3335 = vld [vmem:[%s601 + $0x258] sm:$0xf]
        %v3336 = vld [vmem:[%s601 + $0x25c] sm:$0xf]
        %v3337 = vld [vmem:[%s601 + $0x260] sm:$0xf]
        %v3338 = vld [vmem:[%s601 + $0x264] sm:$0xf]
        %v3339 = vld [vmem:[%s601 + $0x268] sm:$0xf]
        %v3340 = vld [vmem:[%s601 + $0x26c] sm:$0xf]
        %v3341 = vld [vmem:[%s601 + $0x270] sm:$0xf]
        %v3342 = vld [vmem:[%s601 + $0x274] sm:$0xf]
        %v3343 = vld [vmem:[%s601 + $0x278] sm:$0xf]
        %v3344 = vld [vmem:[%s601 + $0x27c] sm:$0xf]
        %v3345 = vld [vmem:[%s601 + $0x280] sm:$0xf]
        %v3346 = vld [vmem:[%s601 + $0x284] sm:$0xf]
        %v3347 = vld [vmem:[%s601 + $0x288] sm:$0xf]
        %v3348 = vld [vmem:[%s601 + $0x28c] sm:$0xf]
        %v3349 = vld [vmem:[%s601 + $0x290] sm:$0xf]
        %v3350 = vld [vmem:[%s601 + $0x294] sm:$0xf]
        %v3351 = vld [vmem:[%s601 + $0x298] sm:$0xf]
        %v3352 = vld [vmem:[%s601 + $0x29c] sm:$0xf]
        %v3353 = vld [vmem:[%s601 + $0x2a0] sm:$0xf]
        %v3354 = vld [vmem:[%s601 + $0x2a4] sm:$0xf]
        %v3355 = vld [vmem:[%s601 + $0x2a8] sm:$0xf]
        %v3356 = vld [vmem:[%s601 + $0x2ac] sm:$0xf]
        %v3357 = vld [vmem:[%s601 + $0x2b0] sm:$0xf]
        %v3358 = vld [vmem:[%s601 + $0x2b4] sm:$0xf]
        %v3359 = vld [vmem:[%s601 + $0x2b8] sm:$0xf]
        %v3360 = vld [vmem:[%s601 + $0x2bc] sm:$0xf]
        %v3361 = vld [vmem:[%s601 + $0x2c0] sm:$0xf]
        %v3362 = vld [vmem:[%s601 + $0x2c4] sm:$0xf]
        %v3363 = vld [vmem:[%s601 + $0x2c8] sm:$0xf]
        %v3364 = vld [vmem:[%s601 + $0x2cc] sm:$0xf]
        %v3365 = vld [vmem:[%s601 + $0x2d0] sm:$0xf]
        %v3366 = vld [vmem:[%s601 + $0x2d4] sm:$0xf]
        %v3367 = vld [vmem:[%s601 + $0x2d8] sm:$0xf]
        %v3368 = vld [vmem:[%s601 + $0x2dc] sm:$0xf]
        %v3369 = vld [vmem:[%s601 + $0x2e0] sm:$0xf]
        %v3370 = vld [vmem:[%s601 + $0x2e4] sm:$0xf]
        %v3371 = vld [vmem:[%s601 + $0x2e8] sm:$0xf]
        %v3372 = vld [vmem:[%s601 + $0x2ec] sm:$0xf]
        %v3373 = vld [vmem:[%s601 + $0x2f0] sm:$0xf]
        %v3374 = vld [vmem:[%s601 + $0x2f4] sm:$0xf]
        %v3375 = vld [vmem:[%s601 + $0x2f8] sm:$0xf]
        %v3376 = vld [vmem:[%s601 + $0x2fc] sm:$0xf]
        %v3377 = vld [vmem:[%s601 + $0x300] sm:$0xf]
        %v3378 = vld [vmem:[%s601 + $0x304] sm:$0xf]
        %v3379 = vld [vmem:[%s601 + $0x308] sm:$0xf]
        %v3380 = vld [vmem:[%s601 + $0x30c] sm:$0xf]
        %v3381 = vld [vmem:[%s601 + $0x310] sm:$0xf]
        %v3382 = vld [vmem:[%s601 + $0x314] sm:$0xf]
        %v3383 = vld [vmem:[%s601 + $0x318] sm:$0xf]
        %v3384 = vld [vmem:[%s601 + $0x31c] sm:$0xf]
        %v3385 = vld [vmem:[%s601 + $0x320] sm:$0xf]
        %v3386 = vld [vmem:[%s601 + $0x324] sm:$0xf]
        %v3387 = vld [vmem:[%s601 + $0x328] sm:$0xf]
        %v3388 = vld [vmem:[%s601 + $0x32c] sm:$0xf]
        %v3389 = vld [vmem:[%s601 + $0x330] sm:$0xf]
        %v3390 = vld [vmem:[%s601 + $0x334] sm:$0xf]
        %v3391 = vld [vmem:[%s601 + $0x338] sm:$0xf]
        %v3392 = vld [vmem:[%s601 + $0x33c] sm:$0xf]
        %v3393 = vld [vmem:[%s601 + $0x340] sm:$0xf]
        %v3394 = vld [vmem:[%s601 + $0x344] sm:$0xf]
        %v3395 = vld [vmem:[%s601 + $0x348] sm:$0xf]
        %v3396 = vld [vmem:[%s601 + $0x34c] sm:$0xf]
        %v3397 = vld [vmem:[%s601 + $0x350] sm:$0xf]
        %v3398 = vld [vmem:[%s601 + $0x354] sm:$0xf]
        %v3399 = vld [vmem:[%s601 + $0x358] sm:$0xf]
        %v3400 = vld [vmem:[%s601 + $0x35c] sm:$0xf]
        %v3401 = vld [vmem:[%s601 + $0x360] sm:$0xf]
        %v3402 = vld [vmem:[%s601 + $0x364] sm:$0xf]
        %v3403 = vld [vmem:[%s601 + $0x368] sm:$0xf]
        %v3404 = vld [vmem:[%s601 + $0x36c] sm:$0xf]
        %v3405 = vld [vmem:[%s601 + $0x370] sm:$0xf]
        %v3406 = vld [vmem:[%s601 + $0x374] sm:$0xf]
        %v3407 = vld [vmem:[%s601 + $0x378] sm:$0xf]
        %v3408 = vld [vmem:[%s601 + $0x37c] sm:$0xf]
        %v3409 = vld [vmem:[%s601 + $0x380] sm:$0xf]
        %v3410 = vld [vmem:[%s601 + $0x384] sm:$0xf]
        %v3411 = vld [vmem:[%s601 + $0x388] sm:$0xf]
        %v3412 = vld [vmem:[%s601 + $0x38c] sm:$0xf]
        %v3413 = vld [vmem:[%s601 + $0x390] sm:$0xf]
        %v3414 = vld [vmem:[%s601 + $0x394] sm:$0xf]
        %v3415 = vld [vmem:[%s601 + $0x398] sm:$0xf]
        %v3416 = vld [vmem:[%s601 + $0x39c] sm:$0xf]
        %v3417 = vld [vmem:[%s601 + $0x3a0] sm:$0xf]
        %v3418 = vld [vmem:[%s601 + $0x3a4] sm:$0xf]
        %v3419 = vld [vmem:[%s601 + $0x3a8] sm:$0xf]
        %v3420 = vld [vmem:[%s601 + $0x3ac] sm:$0xf]
        %v3421 = vld [vmem:[%s601 + $0x3b0] sm:$0xf]
        %v3422 = vld [vmem:[%s601 + $0x3b4] sm:$0xf]
        %v3423 = vld [vmem:[%s601 + $0x3b8] sm:$0xf]
        %v3424 = vld [vmem:[%s601 + $0x3bc] sm:$0xf]
        %v3425 = vld [vmem:[%s601 + $0x3c0] sm:$0xf]
        %v3426 = vld [vmem:[%s601 + $0x3c4] sm:$0xf]
        %v3427 = vld [vmem:[%s601 + $0x3c8] sm:$0xf]
        %v3428 = vld [vmem:[%s601 + $0x3cc] sm:$0xf]
        %v3429 = vld [vmem:[%s601 + $0x3d0] sm:$0xf]
        %v3430 = vld [vmem:[%s601 + $0x3d4] sm:$0xf]
        %v3431 = vld [vmem:[%s601 + $0x3d8] sm:$0xf]
        %v3432 = vld [vmem:[%s601 + $0x3dc] sm:$0xf]
        %v3433 = vld [vmem:[%s601 + $0x3e0] sm:$0xf]
        %v3434 = vld [vmem:[%s601 + $0x3e4] sm:$0xf]
        %v3435 = vld [vmem:[%s601 + $0x3e8] sm:$0xf]
        %v3436 = vld [vmem:[%s601 + $0x3ec] sm:$0xf]
        %v3437 = vld [vmem:[%s601 + $0x3f0] sm:$0xf]
        %v3438 = vld [vmem:[%s601 + $0x3f4] sm:$0xf]
        %v3439 = vld [vmem:[%s601 + $0x3f8] sm:$0xf]
        %v3440 = vld [vmem:[%s601 + $0x3fc] sm:$0xf]
        %v3441 = vpack.c.bf16 %v3137, %v3121
        %v3442 = vpack.c.bf16 %v3138, %v3122
        %v3443 = vpack.c.bf16 %v3139, %v3123
        %v3444 = vpack.c.bf16 %v3140, %v3124
        %v3445 = vpack.c.bf16 %v3141, %v3125
        %v3446 = vpack.c.bf16 %v3142, %v3126
        %v3447 = vpack.c.bf16 %v3143, %v3127
        %v3448 = vpack.c.bf16 %v3144, %v3128
        %v3449 = vpack.c.bf16 %v3145, %v3129
        %v3450 = vpack.c.bf16 %v3146, %v3130
        %v3451 = vpack.c.bf16 %v3147, %v3131
        %v3452 = vpack.c.bf16 %v3148, %v3132
        %v3453 = vpack.c.bf16 %v3149, %v3133
        %v3454 = vpack.c.bf16 %v3150, %v3134
        %v3455 = vpack.c.bf16 %v3151, %v3135
        %v3456 = vpack.c.bf16 %v3152, %v3136
        %v3457 = vpack.c.bf16 %v3169, %v3153
        %v3458 = vpack.c.bf16 %v3170, %v3154
        %v3459 = vpack.c.bf16 %v3171, %v3155
        %v3460 = vpack.c.bf16 %v3172, %v3156
        %v3461 = vpack.c.bf16 %v3173, %v3157
        %v3462 = vpack.c.bf16 %v3174, %v3158
        %v3463 = vpack.c.bf16 %v3175, %v3159
        %v3464 = vpack.c.bf16 %v3176, %v3160
        %v3465 = vpack.c.bf16 %v3177, %v3161
        %v3466 = vpack.c.bf16 %v3178, %v3162
        %v3467 = vpack.c.bf16 %v3179, %v3163
        %v3468 = vpack.c.bf16 %v3180, %v3164
        %v3469 = vpack.c.bf16 %v3181, %v3165
        %v3470 = vpack.c.bf16 %v3182, %v3166
        %v3471 = vpack.c.bf16 %v3183, %v3167
        %v3472 = vpack.c.bf16 %v3184, %v3168
        %v3473 = vlaneseq
        %v3474 = vshrl.u32 %v3473, 7
        %v3475 = vsub.s32 0, %v3474
        %v3476 = vrot.slane %v634, %v3475
        %v3733 = vunpack.c.l.b16 %v3185
        %v3734 = vunpack.c.l.b16 %v3186
        %v3735 = vunpack.c.l.b16 %v3187
        %v3736 = vunpack.c.l.b16 %v3188
        %v3737 = vunpack.c.l.b16 %v3189
        %v3738 = vunpack.c.l.b16 %v3190
        %v3739 = vunpack.c.l.b16 %v3191
        %v3740 = vunpack.c.l.b16 %v3192
        %v3741 = vunpack.c.l.b16 %v3193
        %v3742 = vunpack.c.l.b16 %v3194
        %v3743 = vunpack.c.l.b16 %v3195
        %v3744 = vunpack.c.l.b16 %v3196
        %v3745 = vunpack.c.l.b16 %v3197
        %v3746 = vunpack.c.l.b16 %v3198
        %v3747 = vunpack.c.l.b16 %v3199
        %v3748 = vunpack.c.l.b16 %v3200
        %v3749 = vunpack.c.l.b16 %v3201
        %v3750 = vunpack.c.l.b16 %v3202
        %v3751 = vunpack.c.l.b16 %v3203
        %v3752 = vunpack.c.l.b16 %v3204
        %v3753 = vunpack.c.l.b16 %v3205
        %v3754 = vunpack.c.l.b16 %v3206
        %v3755 = vunpack.c.l.b16 %v3207
        %v3756 = vunpack.c.l.b16 %v3208
        %v3757 = vunpack.c.l.b16 %v3209
        %v3758 = vunpack.c.l.b16 %v3210
        %v3759 = vunpack.c.l.b16 %v3211
        %v3760 = vunpack.c.l.b16 %v3212
        %v3761 = vunpack.c.l.b16 %v3213
        %v3762 = vunpack.c.l.b16 %v3214
        %v3763 = vunpack.c.l.b16 %v3215
        %v3764 = vunpack.c.l.b16 %v3216
        %v3765 = vunpack.c.l.b16 %v3217
        %v3766 = vunpack.c.l.b16 %v3218
        %v3767 = vunpack.c.l.b16 %v3219
        %v3768 = vunpack.c.l.b16 %v3220
        %v3769 = vunpack.c.l.b16 %v3221
        %v3770 = vunpack.c.l.b16 %v3222
        %v3771 = vunpack.c.l.b16 %v3223
        %v3772 = vunpack.c.l.b16 %v3224
        %v3773 = vunpack.c.l.b16 %v3225
        %v3774 = vunpack.c.l.b16 %v3226
        %v3775 = vunpack.c.l.b16 %v3227
        %v3776 = vunpack.c.l.b16 %v3228
        %v3777 = vunpack.c.l.b16 %v3229
        %v3778 = vunpack.c.l.b16 %v3230
        %v3779 = vunpack.c.l.b16 %v3231
        %v3780 = vunpack.c.l.b16 %v3232
        %v3781 = vunpack.c.l.b16 %v3233
        %v3782 = vunpack.c.l.b16 %v3234
        %v3783 = vunpack.c.l.b16 %v3235
        %v3784 = vunpack.c.l.b16 %v3236
        %v3785 = vunpack.c.l.b16 %v3237
        %v3786 = vunpack.c.l.b16 %v3238
        %v3787 = vunpack.c.l.b16 %v3239
        %v3788 = vunpack.c.l.b16 %v3240
        %v3789 = vunpack.c.l.b16 %v3241
        %v3790 = vunpack.c.l.b16 %v3242
        %v3791 = vunpack.c.l.b16 %v3243
        %v3792 = vunpack.c.l.b16 %v3244
        %v3793 = vunpack.c.l.b16 %v3245
        %v3794 = vunpack.c.l.b16 %v3246
        %v3795 = vunpack.c.l.b16 %v3247
        %v3796 = vunpack.c.l.b16 %v3248
        %v3797 = vunpack.c.l.b16 %v3249
        %v3798 = vunpack.c.l.b16 %v3250
        %v3799 = vunpack.c.l.b16 %v3251
        %v3800 = vunpack.c.l.b16 %v3252
        %v3801 = vunpack.c.l.b16 %v3253
        %v3802 = vunpack.c.l.b16 %v3254
        %v3803 = vunpack.c.l.b16 %v3255
        %v3804 = vunpack.c.l.b16 %v3256
        %v3805 = vunpack.c.l.b16 %v3257
        %v3806 = vunpack.c.l.b16 %v3258
        %v3807 = vunpack.c.l.b16 %v3259
        %v3808 = vunpack.c.l.b16 %v3260
        %v3809 = vunpack.c.l.b16 %v3261
        %v3810 = vunpack.c.l.b16 %v3262
        %v3811 = vunpack.c.l.b16 %v3263
        %v3812 = vunpack.c.l.b16 %v3264
        %v3813 = vunpack.c.l.b16 %v3265
        %v3814 = vunpack.c.l.b16 %v3266
        %v3815 = vunpack.c.l.b16 %v3267
        %v3816 = vunpack.c.l.b16 %v3268
        %v3817 = vunpack.c.l.b16 %v3269
        %v3818 = vunpack.c.l.b16 %v3270
        %v3819 = vunpack.c.l.b16 %v3271
        %v3820 = vunpack.c.l.b16 %v3272
        %v3821 = vunpack.c.l.b16 %v3273
        %v3822 = vunpack.c.l.b16 %v3274
        %v3823 = vunpack.c.l.b16 %v3275
        %v3824 = vunpack.c.l.b16 %v3276
        %v3825 = vunpack.c.l.b16 %v3277
        %v3826 = vunpack.c.l.b16 %v3278
        %v3827 = vunpack.c.l.b16 %v3279
        %v3828 = vunpack.c.l.b16 %v3280
        %v3829 = vunpack.c.l.b16 %v3281
        %v3830 = vunpack.c.l.b16 %v3282
        %v3831 = vunpack.c.l.b16 %v3283
        %v3832 = vunpack.c.l.b16 %v3284
        %v3833 = vunpack.c.l.b16 %v3285
        %v3834 = vunpack.c.l.b16 %v3286
        %v3835 = vunpack.c.l.b16 %v3287
        %v3836 = vunpack.c.l.b16 %v3288
        %v3837 = vunpack.c.l.b16 %v3289
        %v3838 = vunpack.c.l.b16 %v3290
        %v3839 = vunpack.c.l.b16 %v3291
        %v3840 = vunpack.c.l.b16 %v3292
        %v3841 = vunpack.c.l.b16 %v3293
        %v3842 = vunpack.c.l.b16 %v3294
        %v3843 = vunpack.c.l.b16 %v3295
        %v3844 = vunpack.c.l.b16 %v3296
        %v3845 = vunpack.c.l.b16 %v3297
        %v3846 = vunpack.c.l.b16 %v3298
        %v3847 = vunpack.c.l.b16 %v3299
        %v3848 = vunpack.c.l.b16 %v3300
        %v3849 = vunpack.c.l.b16 %v3301
        %v3850 = vunpack.c.l.b16 %v3302
        %v3851 = vunpack.c.l.b16 %v3303
        %v3852 = vunpack.c.l.b16 %v3304
        %v3853 = vunpack.c.l.b16 %v3305
        %v3854 = vunpack.c.l.b16 %v3306
        %v3855 = vunpack.c.l.b16 %v3307
        %v3856 = vunpack.c.l.b16 %v3308
        %v3857 = vunpack.c.l.b16 %v3309
        %v3858 = vunpack.c.l.b16 %v3310
        %v3859 = vunpack.c.l.b16 %v3311
        %v3860 = vunpack.c.l.b16 %v3312
        %v3861 = vunpack.c.l.b16 %v3313
        %v3862 = vunpack.c.l.b16 %v3314
        %v3863 = vunpack.c.l.b16 %v3315
        %v3864 = vunpack.c.l.b16 %v3316
        %v3865 = vunpack.c.l.b16 %v3317
        %v3866 = vunpack.c.l.b16 %v3318
        %v3867 = vunpack.c.l.b16 %v3319
        %v3868 = vunpack.c.l.b16 %v3320
        %v3869 = vunpack.c.l.b16 %v3321
        %v3870 = vunpack.c.l.b16 %v3322
        %v3871 = vunpack.c.l.b16 %v3323
        %v3872 = vunpack.c.l.b16 %v3324
        %v3873 = vunpack.c.l.b16 %v3325
        %v3874 = vunpack.c.l.b16 %v3326
        %v3875 = vunpack.c.l.b16 %v3327
        %v3876 = vunpack.c.l.b16 %v3328
        %v3877 = vunpack.c.l.b16 %v3329
        %v3878 = vunpack.c.l.b16 %v3330
        %v3879 = vunpack.c.l.b16 %v3331
        %v3880 = vunpack.c.l.b16 %v3332
        %v3881 = vunpack.c.l.b16 %v3333
        %v3882 = vunpack.c.l.b16 %v3334
        %v3883 = vunpack.c.l.b16 %v3335
        %v3884 = vunpack.c.l.b16 %v3336
        %v3885 = vunpack.c.l.b16 %v3337
        %v3886 = vunpack.c.l.b16 %v3338
        %v3887 = vunpack.c.l.b16 %v3339
        %v3888 = vunpack.c.l.b16 %v3340
        %v3889 = vunpack.c.l.b16 %v3341
        %v3890 = vunpack.c.l.b16 %v3342
        %v3891 = vunpack.c.l.b16 %v3343
        %v3892 = vunpack.c.l.b16 %v3344
        %v3893 = vunpack.c.l.b16 %v3345
        %v3894 = vunpack.c.l.b16 %v3346
        %v3895 = vunpack.c.l.b16 %v3347
        %v3896 = vunpack.c.l.b16 %v3348
        %v3897 = vunpack.c.l.b16 %v3349
        %v3898 = vunpack.c.l.b16 %v3350
        %v3899 = vunpack.c.l.b16 %v3351
        %v3900 = vunpack.c.l.b16 %v3352
        %v3901 = vunpack.c.l.b16 %v3353
        %v3902 = vunpack.c.l.b16 %v3354
        %v3903 = vunpack.c.l.b16 %v3355
        %v3904 = vunpack.c.l.b16 %v3356
        %v3905 = vunpack.c.l.b16 %v3357
        %v3906 = vunpack.c.l.b16 %v3358
        %v3907 = vunpack.c.l.b16 %v3359
        %v3908 = vunpack.c.l.b16 %v3360
        %v3909 = vunpack.c.l.b16 %v3361
        %v3910 = vunpack.c.l.b16 %v3362
        %v3911 = vunpack.c.l.b16 %v3363
        %v3912 = vunpack.c.l.b16 %v3364
        %v3913 = vunpack.c.l.b16 %v3365
        %v3914 = vunpack.c.l.b16 %v3366
        %v3915 = vunpack.c.l.b16 %v3367
        %v3916 = vunpack.c.l.b16 %v3368
        %v3917 = vunpack.c.l.b16 %v3369
        %v3918 = vunpack.c.l.b16 %v3370
        %v3919 = vunpack.c.l.b16 %v3371
        %v3920 = vunpack.c.l.b16 %v3372
        %v3921 = vunpack.c.l.b16 %v3373
        %v3922 = vunpack.c.l.b16 %v3374
        %v3923 = vunpack.c.l.b16 %v3375
        %v3924 = vunpack.c.l.b16 %v3376
        %v3925 = vunpack.c.l.b16 %v3377
        %v3926 = vunpack.c.l.b16 %v3378
        %v3927 = vunpack.c.l.b16 %v3379
        %v3928 = vunpack.c.l.b16 %v3380
        %v3929 = vunpack.c.l.b16 %v3381
        %v3930 = vunpack.c.l.b16 %v3382
        %v3931 = vunpack.c.l.b16 %v3383
        %v3932 = vunpack.c.l.b16 %v3384
        %v3933 = vunpack.c.l.b16 %v3385
        %v3934 = vunpack.c.l.b16 %v3386
        %v3935 = vunpack.c.l.b16 %v3387
        %v3936 = vunpack.c.l.b16 %v3388
        %v3937 = vunpack.c.l.b16 %v3389
        %v3938 = vunpack.c.l.b16 %v3390
        %v3939 = vunpack.c.l.b16 %v3391
        %v3940 = vunpack.c.l.b16 %v3392
        %v3941 = vunpack.c.l.b16 %v3393
        %v3942 = vunpack.c.l.b16 %v3394
        %v3943 = vunpack.c.l.b16 %v3395
        %v3944 = vunpack.c.l.b16 %v3396
        %v3945 = vunpack.c.l.b16 %v3397
        %v3946 = vunpack.c.l.b16 %v3398
        %v3947 = vunpack.c.l.b16 %v3399
        %v3948 = vunpack.c.l.b16 %v3400
        %v3949 = vunpack.c.l.b16 %v3401
        %v3950 = vunpack.c.l.b16 %v3402
        %v3951 = vunpack.c.l.b16 %v3403
        %v3952 = vunpack.c.l.b16 %v3404
        %v3953 = vunpack.c.l.b16 %v3405
        %v3954 = vunpack.c.l.b16 %v3406
        %v3955 = vunpack.c.l.b16 %v3407
        %v3956 = vunpack.c.l.b16 %v3408
        %v3957 = vunpack.c.l.b16 %v3409
        %v3958 = vunpack.c.l.b16 %v3410
        %v3959 = vunpack.c.l.b16 %v3411
        %v3960 = vunpack.c.l.b16 %v3412
        %v3961 = vunpack.c.l.b16 %v3413
        %v3962 = vunpack.c.l.b16 %v3414
        %v3963 = vunpack.c.l.b16 %v3415
        %v3964 = vunpack.c.l.b16 %v3416
        %v3965 = vunpack.c.l.b16 %v3417
        %v3966 = vunpack.c.l.b16 %v3418
        %v3967 = vunpack.c.l.b16 %v3419
        %v3968 = vunpack.c.l.b16 %v3420
        %v3969 = vunpack.c.l.b16 %v3421
        %v3970 = vunpack.c.l.b16 %v3422
        %v3971 = vunpack.c.l.b16 %v3423
        %v3972 = vunpack.c.l.b16 %v3424
        %v3973 = vunpack.c.l.b16 %v3425
        %v3974 = vunpack.c.l.b16 %v3426
        %v3975 = vunpack.c.l.b16 %v3427
        %v3976 = vunpack.c.l.b16 %v3428
        %v3977 = vunpack.c.l.b16 %v3429
        %v3978 = vunpack.c.l.b16 %v3430
        %v3979 = vunpack.c.l.b16 %v3431
        %v3980 = vunpack.c.l.b16 %v3432
        %v3981 = vunpack.c.l.b16 %v3433
        %v3982 = vunpack.c.l.b16 %v3434
        %v3983 = vunpack.c.l.b16 %v3435
        %v3984 = vunpack.c.l.b16 %v3436
        %v3985 = vunpack.c.l.b16 %v3437
        %v3986 = vunpack.c.l.b16 %v3438
        %v3987 = vunpack.c.l.b16 %v3439
        %v3988 = vunpack.c.l.b16 %v3440
        %v3989 = vpack.c.b16 %v3734, %v3733
        %v3990 = vpack.c.b16 %v3736, %v3735
        %v3991 = vpack.c.b16 %v3738, %v3737
        %v3992 = vpack.c.b16 %v3740, %v3739
        %v3993 = vpack.c.b16 %v3742, %v3741
        %v3994 = vpack.c.b16 %v3744, %v3743
        %v3995 = vpack.c.b16 %v3746, %v3745
        %v3996 = vpack.c.b16 %v3748, %v3747
        %v3997 = vpack.c.b16 %v3750, %v3749
        %v3998 = vpack.c.b16 %v3752, %v3751
        %v3999 = vpack.c.b16 %v3754, %v3753
        %v4000 = vpack.c.b16 %v3756, %v3755
        %v4001 = vpack.c.b16 %v3758, %v3757
        %v4002 = vpack.c.b16 %v3760, %v3759
        %v4003 = vpack.c.b16 %v3762, %v3761
        %v4004 = vpack.c.b16 %v3764, %v3763
        %v4005 = vpack.c.b16 %v3766, %v3765
        %v4006 = vpack.c.b16 %v3768, %v3767
        %v4007 = vpack.c.b16 %v3770, %v3769
        %v4008 = vpack.c.b16 %v3772, %v3771
        %v4009 = vpack.c.b16 %v3774, %v3773
        %v4010 = vpack.c.b16 %v3776, %v3775
        %v4011 = vpack.c.b16 %v3778, %v3777
        %v4012 = vpack.c.b16 %v3780, %v3779
        %v4013 = vpack.c.b16 %v3782, %v3781
        %v4014 = vpack.c.b16 %v3784, %v3783
        %v4015 = vpack.c.b16 %v3786, %v3785
        %v4016 = vpack.c.b16 %v3788, %v3787
        %v4017 = vpack.c.b16 %v3790, %v3789
        %v4018 = vpack.c.b16 %v3792, %v3791
        %v4019 = vpack.c.b16 %v3794, %v3793
        %v4020 = vpack.c.b16 %v3796, %v3795
        %v4021 = vpack.c.b16 %v3798, %v3797
        %v4022 = vpack.c.b16 %v3800, %v3799
        %v4023 = vpack.c.b16 %v3802, %v3801
        %v4024 = vpack.c.b16 %v3804, %v3803
        %v4025 = vpack.c.b16 %v3806, %v3805
        %v4026 = vpack.c.b16 %v3808, %v3807
        %v4027 = vpack.c.b16 %v3810, %v3809
        %v4028 = vpack.c.b16 %v3812, %v3811
        %v4029 = vpack.c.b16 %v3814, %v3813
        %v4030 = vpack.c.b16 %v3816, %v3815
        %v4031 = vpack.c.b16 %v3818, %v3817
        %v4032 = vpack.c.b16 %v3820, %v3819
        %v4033 = vpack.c.b16 %v3822, %v3821
        %v4034 = vpack.c.b16 %v3824, %v3823
        %v4035 = vpack.c.b16 %v3826, %v3825
        %v4036 = vpack.c.b16 %v3828, %v3827
        %v4037 = vpack.c.b16 %v3830, %v3829
        %v4038 = vpack.c.b16 %v3832, %v3831
        %v4039 = vpack.c.b16 %v3834, %v3833
        %v4040 = vpack.c.b16 %v3836, %v3835
        %v4041 = vpack.c.b16 %v3838, %v3837
        %v4042 = vpack.c.b16 %v3840, %v3839
        %v4043 = vpack.c.b16 %v3842, %v3841
        %v4044 = vpack.c.b16 %v3844, %v3843
        %v4045 = vpack.c.b16 %v3846, %v3845
        %v4046 = vpack.c.b16 %v3848, %v3847
        %v4047 = vpack.c.b16 %v3850, %v3849
        %v4048 = vpack.c.b16 %v3852, %v3851
        %v4049 = vpack.c.b16 %v3854, %v3853
        %v4050 = vpack.c.b16 %v3856, %v3855
        %v4051 = vpack.c.b16 %v3858, %v3857
        %v4052 = vpack.c.b16 %v3860, %v3859
        %v4053 = vpack.c.b16 %v3862, %v3861
        %v4054 = vpack.c.b16 %v3864, %v3863
        %v4055 = vpack.c.b16 %v3866, %v3865
        %v4056 = vpack.c.b16 %v3868, %v3867
        %v4057 = vpack.c.b16 %v3870, %v3869
        %v4058 = vpack.c.b16 %v3872, %v3871
        %v4059 = vpack.c.b16 %v3874, %v3873
        %v4060 = vpack.c.b16 %v3876, %v3875
        %v4061 = vpack.c.b16 %v3878, %v3877
        %v4062 = vpack.c.b16 %v3880, %v3879
        %v4063 = vpack.c.b16 %v3882, %v3881
        %v4064 = vpack.c.b16 %v3884, %v3883
        %v4065 = vpack.c.b16 %v3886, %v3885
        %v4066 = vpack.c.b16 %v3888, %v3887
        %v4067 = vpack.c.b16 %v3890, %v3889
        %v4068 = vpack.c.b16 %v3892, %v3891
        %v4069 = vpack.c.b16 %v3894, %v3893
        %v4070 = vpack.c.b16 %v3896, %v3895
        %v4071 = vpack.c.b16 %v3898, %v3897
        %v4072 = vpack.c.b16 %v3900, %v3899
        %v4073 = vpack.c.b16 %v3902, %v3901
        %v4074 = vpack.c.b16 %v3904, %v3903
        %v4075 = vpack.c.b16 %v3906, %v3905
        %v4076 = vpack.c.b16 %v3908, %v3907
        %v4077 = vpack.c.b16 %v3910, %v3909
        %v4078 = vpack.c.b16 %v3912, %v3911
        %v4079 = vpack.c.b16 %v3914, %v3913
        %v4080 = vpack.c.b16 %v3916, %v3915
        %v4081 = vpack.c.b16 %v3918, %v3917
        %v4082 = vpack.c.b16 %v3920, %v3919
        %v4083 = vpack.c.b16 %v3922, %v3921
        %v4084 = vpack.c.b16 %v3924, %v3923
        %v4085 = vpack.c.b16 %v3926, %v3925
        %v4086 = vpack.c.b16 %v3928, %v3927
        %v4087 = vpack.c.b16 %v3930, %v3929
        %v4088 = vpack.c.b16 %v3932, %v3931
        %v4089 = vpack.c.b16 %v3934, %v3933
        %v4090 = vpack.c.b16 %v3936, %v3935
        %v4091 = vpack.c.b16 %v3938, %v3937
        %v4092 = vpack.c.b16 %v3940, %v3939
        %v4093 = vpack.c.b16 %v3942, %v3941
        %v4094 = vpack.c.b16 %v3944, %v3943
        %v4095 = vpack.c.b16 %v3946, %v3945
        %v4096 = vpack.c.b16 %v3948, %v3947
        %v4097 = vpack.c.b16 %v3950, %v3949
        %v4098 = vpack.c.b16 %v3952, %v3951
        %v4099 = vpack.c.b16 %v3954, %v3953
        %v4100 = vpack.c.b16 %v3956, %v3955
        %v4101 = vpack.c.b16 %v3958, %v3957
        %v4102 = vpack.c.b16 %v3960, %v3959
        %v4103 = vpack.c.b16 %v3962, %v3961
        %v4104 = vpack.c.b16 %v3964, %v3963
        %v4105 = vpack.c.b16 %v3966, %v3965
        %v4106 = vpack.c.b16 %v3968, %v3967
        %v4107 = vpack.c.b16 %v3970, %v3969
        %v4108 = vpack.c.b16 %v3972, %v3971
        %v4109 = vpack.c.b16 %v3974, %v3973
        %v4110 = vpack.c.b16 %v3976, %v3975
        %v4111 = vpack.c.b16 %v3978, %v3977
        %v4112 = vpack.c.b16 %v3980, %v3979
        %v4113 = vpack.c.b16 %v3982, %v3981
        %v4114 = vpack.c.b16 %v3984, %v3983
        %v4115 = vpack.c.b16 %v3986, %v3985
        %v4116 = vpack.c.b16 %v3988, %v3987
        %4245 = vmatprep.subr.bf16.mxu0 0
        %4246 = vmatpush1.bf16.msra.mxu0 %v3989
        %4247 = vmatprep.subr.bf16.mxu0 0
        %4248 = vmatpush1.bf16.msra.mxu0 %v3990
        %4249 = vmatprep.subr.bf16.mxu0 0
        %4250 = vmatpush1.bf16.msra.mxu0 %v3991
        %4251 = vmatprep.subr.bf16.mxu0 0
        %4252 = vmatpush1.bf16.msra.mxu0 %v3992
        %4253 = vmatprep.subr.bf16.mxu0 0
        %4254 = vmatpush1.bf16.msra.mxu0 %v3993
        %4255 = vmatprep.subr.bf16.mxu0 0
        %4256 = vmatpush1.bf16.msra.mxu0 %v3994
        %4257 = vmatprep.subr.bf16.mxu0 0
        %4258 = vmatpush1.bf16.msra.mxu0 %v3995
        %4259 = vmatprep.subr.bf16.mxu0 0
        %4260 = vmatpush1.bf16.msra.mxu0 %v3996
        %4261 = vmatprep.subr.bf16.mxu0 0
        %4262 = vmatpush1.bf16.msra.mxu0 %v3997
        %4263 = vmatprep.subr.bf16.mxu0 0
        %4264 = vmatpush1.bf16.msra.mxu0 %v3998
        %4265 = vmatprep.subr.bf16.mxu0 0
        %4266 = vmatpush1.bf16.msra.mxu0 %v3999
        %4267 = vmatprep.subr.bf16.mxu0 0
        %4268 = vmatpush1.bf16.msra.mxu0 %v4000
        %4269 = vmatprep.subr.bf16.mxu0 0
        %4270 = vmatpush1.bf16.msra.mxu0 %v4001
        %4271 = vmatprep.subr.bf16.mxu0 0
        %4272 = vmatpush1.bf16.msra.mxu0 %v4002
        %4273 = vmatprep.subr.bf16.mxu0 0
        %4274 = vmatpush1.bf16.msra.mxu0 %v4003
        %4275 = vmatprep.subr.bf16.mxu0 0
        %4276 = vmatpush1.bf16.msra.mxu0 %v4004
        %4277 = vmatprep.mubr.bf16.mxu0 %v3442
        %4278 = vmatmul.mubr.bf16.gmra.mrb[0].mxu0 %v3441
        %v4279 = vpop.f32.mrb[0].mxu0
        %v4280 = vadd.f32 %v3476, %v4279
        %v4281 = vpop.f32.mrb[0].mxu0
        %v4282 = vpop.f32.mrb[0].mxu0
        %v4283 = vadd.f32 %v3476, %v4282
        %v4284 = vpop.f32.mrb[0].mxu0
        %4285 = vmatprep.mubr.bf16.mxu0 %v3458
        %4286 = vmatmul.mubr.bf16.gmra.mrb[0].mxu0 %v3457
        %v4287 = vpop.f32.mrb[0].mxu0
        %v4288 = vadd.f32 %v3476, %v4287
        %v4289 = vpop.f32.mrb[0].mxu0
        %v4290 = vpop.f32.mrb[0].mxu0
        %v4291 = vadd.f32 %v3476, %v4290
        %v4292 = vpop.f32.mrb[0].mxu0
        %4293 = vdwg.mxu0
        %4294 = vmatprep.subr.bf16.mxu0 0
        %4295 = vmatpush1.bf16.msra.mxu0 %v4005
        %4296 = vmatprep.subr.bf16.mxu0 0
        %4297 = vmatpush1.bf16.msra.mxu0 %v4006
        %4298 = vmatprep.subr.bf16.mxu0 0
        %4299 = vmatpush1.bf16.msra.mxu0 %v4007
        %4300 = vmatprep.subr.bf16.mxu0 0
        %4301 = vmatpush1.bf16.msra.mxu0 %v4008
        %4302 = vmatprep.subr.bf16.mxu0 0
        %4303 = vmatpush1.bf16.msra.mxu0 %v4009
        %4304 = vmatprep.subr.bf16.mxu0 0
        %4305 = vmatpush1.bf16.msra.mxu0 %v4010
        %4306 = vmatprep.subr.bf16.mxu0 0
        %4307 = vmatpush1.bf16.msra.mxu0 %v4011
        %4308 = vmatprep.subr.bf16.mxu0 0
        %4309 = vmatpush1.bf16.msra.mxu0 %v4012
        %4310 = vmatprep.subr.bf16.mxu0 0
        %4311 = vmatpush1.bf16.msra.mxu0 %v4013
        %4312 = vmatprep.subr.bf16.mxu0 0
        %4313 = vmatpush1.bf16.msra.mxu0 %v4014
        %4314 = vmatprep.subr.bf16.mxu0 0
        %4315 = vmatpush1.bf16.msra.mxu0 %v4015
        %4316 = vmatprep.subr.bf16.mxu0 0
        %4317 = vmatpush1.bf16.msra.mxu0 %v4016
        %4318 = vmatprep.subr.bf16.mxu0 0
        %4319 = vmatpush1.bf16.msra.mxu0 %v4017
        %4320 = vmatprep.subr.bf16.mxu0 0
        %4321 = vmatpush1.bf16.msra.mxu0 %v4018
        %4322 = vmatprep.subr.bf16.mxu0 0
        %4323 = vmatpush1.bf16.msra.mxu0 %v4019
        %4324 = vmatprep.subr.bf16.mxu0 0
        %4325 = vmatpush1.bf16.msra.mxu0 %v4020
        %4326 = vmatprep.mubr.bf16.mxu0 %v3444
        %4327 = vmatmul.mubr.bf16.gmra.mrb[0].mxu0 %v3443
        %v4328 = vpop.f32.mrb[0].mxu0
        %v4329 = vadd.f32 %v4280, %v4328
        %v4330 = vpop.f32.mrb[0].mxu0
        %v4331 = vpop.f32.mrb[0].mxu0
        %v4332 = vadd.f32 %v4283, %v4331
        %v4333 = vpop.f32.mrb[0].mxu0
        %4334 = vmatprep.mubr.bf16.mxu0 %v3460
        %4335 = vmatmul.mubr.bf16.gmra.mrb[0].mxu0 %v3459
        %v4336 = vpop.f32.mrb[0].mxu0
        %v4337 = vadd.f32 %v4288, %v4336
        %v4338 = vpop.f32.mrb[0].mxu0
        %v4339 = vpop.f32.mrb[0].mxu0
        %v4340 = vadd.f32 %v4291, %v4339
        %v4341 = vpop.f32.mrb[0].mxu0
        %4342 = vdwg.mxu0
        %4343 = vmatprep.subr.bf16.mxu0 0
        %4344 = vmatpush1.bf16.msra.mxu0 %v4021
        %4345 = vmatprep.subr.bf16.mxu0 0
        %4346 = vmatpush1.bf16.msra.mxu0 %v4022
        %4347 = vmatprep.subr.bf16.mxu0 0
        %4348 = vmatpush1.bf16.msra.mxu0 %v4023
        %4349 = vmatprep.subr.bf16.mxu0 0
        %4350 = vmatpush1.bf16.msra.mxu0 %v4024
        %4351 = vmatprep.subr.bf16.mxu0 0
        %4352 = vmatpush1.bf16.msra.mxu0 %v4025
        %4353 = vmatprep.subr.bf16.mxu0 0
        %4354 = vmatpush1.bf16.msra.mxu0 %v4026
        %4355 = vmatprep.subr.bf16.mxu0 0
        %4356 = vmatpush1.bf16.msra.mxu0 %v4027
        %4357 = vmatprep.subr.bf16.mxu0 0
        %4358 = vmatpush1.bf16.msra.mxu0 %v4028
        %4359 = vmatprep.subr.bf16.mxu0 0
        %4360 = vmatpush1.bf16.msra.mxu0 %v4029
        %4361 = vmatprep.subr.bf16.mxu0 0
        %4362 = vmatpush1.bf16.msra.mxu0 %v4030
        %4363 = vmatprep.subr.bf16.mxu0 0
        %4364 = vmatpush1.bf16.msra.mxu0 %v4031
        %4365 = vmatprep.subr.bf16.mxu0 0
        %4366 = vmatpush1.bf16.msra.mxu0 %v4032
        %4367 = vmatprep.subr.bf16.mxu0 0
        %4368 = vmatpush1.bf16.msra.mxu0 %v4033
        %4369 = vmatprep.subr.bf16.mxu0 0
        %4370 = vmatpush1.bf16.msra.mxu0 %v4034
        %4371 = vmatprep.subr.bf16.mxu0 0
        %4372 = vmatpush1.bf16.msra.mxu0 %v4035
        %4373 = vmatprep.subr.bf16.mxu0 0
        %4374 = vmatpush1.bf16.msra.mxu0 %v4036
        %4375 = vmatprep.mubr.bf16.mxu0 %v3446
        %4376 = vmatmul.mubr.bf16.gmra.mrb[0].mxu0 %v3445
        %v4377 = vpop.f32.mrb[0].mxu0
        %v4378 = vadd.f32 %v4329, %v4377
        %v4379 = vpop.f32.mrb[0].mxu0
        %v4380 = vpop.f32.mrb[0].mxu0
        %v4381 = vadd.f32 %v4332, %v4380
        %v4382 = vpop.f32.mrb[0].mxu0
        %4383 = vmatprep.mubr.bf16.mxu0 %v3462
        %4384 = vmatmul.mubr.bf16.gmra.mrb[0].mxu0 %v3461
        %v4385 = vpop.f32.mrb[0].mxu0
        %v4386 = vadd.f32 %v4337, %v4385
        %v4387 = vpop.f32.mrb[0].mxu0
        %v4388 = vpop.f32.mrb[0].mxu0
        %v4389 = vadd.f32 %v4340, %v4388
        %v4390 = vpop.f32.mrb[0].mxu0
        %4391 = vdwg.mxu0
        %4392 = vmatprep.subr.bf16.mxu0 0
        %4393 = vmatpush1.bf16.msra.mxu0 %v4037
        %4394 = vmatprep.subr.bf16.mxu0 0
        %4395 = vmatpush1.bf16.msra.mxu0 %v4038
        %4396 = vmatprep.subr.bf16.mxu0 0
        %4397 = vmatpush1.bf16.msra.mxu0 %v4039
        %4398 = vmatprep.subr.bf16.mxu0 0
        %4399 = vmatpush1.bf16.msra.mxu0 %v4040
        %4400 = vmatprep.subr.bf16.mxu0 0
        %4401 = vmatpush1.bf16.msra.mxu0 %v4041
        %4402 = vmatprep.subr.bf16.mxu0 0
        %4403 = vmatpush1.bf16.msra.mxu0 %v4042
        %4404 = vmatprep.subr.bf16.mxu0 0
        %4405 = vmatpush1.bf16.msra.mxu0 %v4043
        %4406 = vmatprep.subr.bf16.mxu0 0
        %4407 = vmatpush1.bf16.msra.mxu0 %v4044
        %4408 = vmatprep.subr.bf16.mxu0 0
        %4409 = vmatpush1.bf16.msra.mxu0 %v4045
        %4410 = vmatprep.subr.bf16.mxu0 0
        %4411 = vmatpush1.bf16.msra.mxu0 %v4046
        %4412 = vmatprep.subr.bf16.mxu0 0
        %4413 = vmatpush1.bf16.msra.mxu0 %v4047
        %4414 = vmatprep.subr.bf16.mxu0 0
        %4415 = vmatpush1.bf16.msra.mxu0 %v4048
        %4416 = vmatprep.subr.bf16.mxu0 0
        %4417 = vmatpush1.bf16.msra.mxu0 %v4049
        %4418 = vmatprep.subr.bf16.mxu0 0
        %4419 = vmatpush1.bf16.msra.mxu0 %v4050
        %4420 = vmatprep.subr.bf16.mxu0 0
        %4421 = vmatpush1.bf16.msra.mxu0 %v4051
        %4422 = vmatprep.subr.bf16.mxu0 0
        %4423 = vmatpush1.bf16.msra.mxu0 %v4052
        %4424 = vmatprep.mubr.bf16.mxu0 %v3448
        %4425 = vmatmul.mubr.bf16.gmra.mrb[0].mxu0 %v3447
        %v4426 = vpop.f32.mrb[0].mxu0
        %v4427 = vadd.f32 %v4378, %v4426
        %v4428 = vpop.f32.mrb[0].mxu0
        %v4429 = vpop.f32.mrb[0].mxu0
        %v4430 = vadd.f32 %v4381, %v4429
        %v4431 = vpop.f32.mrb[0].mxu0
        %4432 = vmatprep.mubr.bf16.mxu0 %v3464
        %4433 = vmatmul.mubr.bf16.gmra.mrb[0].mxu0 %v3463
        %v4434 = vpop.f32.mrb[0].mxu0
        %v4435 = vadd.f32 %v4386, %v4434
        %v4436 = vpop.f32.mrb[0].mxu0
        %v4437 = vpop.f32.mrb[0].mxu0
        %v4438 = vadd.f32 %v4389, %v4437
        %v4439 = vpop.f32.mrb[0].mxu0
        %4440 = vdwg.mxu0
        %4441 = vmatprep.subr.bf16.mxu0 0
        %4442 = vmatpush1.bf16.msra.mxu0 %v4053
        %4443 = vmatprep.subr.bf16.mxu0 0
        %4444 = vmatpush1.bf16.msra.mxu0 %v4054
        %4445 = vmatprep.subr.bf16.mxu0 0
        %4446 = vmatpush1.bf16.msra.mxu0 %v4055
        %4447 = vmatprep.subr.bf16.mxu0 0
        %4448 = vmatpush1.bf16.msra.mxu0 %v4056
        %4449 = vmatprep.subr.bf16.mxu0 0
        %4450 = vmatpush1.bf16.msra.mxu0 %v4057
        %4451 = vmatprep.subr.bf16.mxu0 0
        %4452 = vmatpush1.bf16.msra.mxu0 %v4058
        %4453 = vmatprep.subr.bf16.mxu0 0
        %4454 = vmatpush1.bf16.msra.mxu0 %v4059
        %4455 = vmatprep.subr.bf16.mxu0 0
        %4456 = vmatpush1.bf16.msra.mxu0 %v4060
        %4457 = vmatprep.subr.bf16.mxu0 0
        %4458 = vmatpush1.bf16.msra.mxu0 %v4061
        %4459 = vmatprep.subr.bf16.mxu0 0
        %4460 = vmatpush1.bf16.msra.mxu0 %v4062
        %4461 = vmatprep.subr.bf16.mxu0 0
        %4462 = vmatpush1.bf16.msra.mxu0 %v4063
        %4463 = vmatprep.subr.bf16.mxu0 0
        %4464 = vmatpush1.bf16.msra.mxu0 %v4064
        %4465 = vmatprep.subr.bf16.mxu0 0
        %4466 = vmatpush1.bf16.msra.mxu0 %v4065
        %4467 = vmatprep.subr.bf16.mxu0 0
        %4468 = vmatpush1.bf16.msra.mxu0 %v4066
        %4469 = vmatprep.subr.bf16.mxu0 0
        %4470 = vmatpush1.bf16.msra.mxu0 %v4067
        %4471 = vmatprep.subr.bf16.mxu0 0
        %4472 = vmatpush1.bf16.msra.mxu0 %v4068
        %4473 = vmatprep.mubr.bf16.mxu0 %v3450
        %4474 = vmatmul.mubr.bf16.gmra.mrb[0].mxu0 %v3449
        %v4475 = vpop.f32.mrb[0].mxu0
        %v4476 = vadd.f32 %v4427, %v4475
        %v4477 = vpop.f32.mrb[0].mxu0
        %v4478 = vpop.f32.mrb[0].mxu0
        %v4479 = vadd.f32 %v4430, %v4478
        %v4480 = vpop.f32.mrb[0].mxu0
        %4481 = vmatprep.mubr.bf16.mxu0 %v3466
        %4482 = vmatmul.mubr.bf16.gmra.mrb[0].mxu0 %v3465
        %v4483 = vpop.f32.mrb[0].mxu0
        %v4484 = vadd.f32 %v4435, %v4483
        %v4485 = vpop.f32.mrb[0].mxu0
        %v4486 = vpop.f32.mrb[0].mxu0
        %v4487 = vadd.f32 %v4438, %v4486
        %v4488 = vpop.f32.mrb[0].mxu0
        %4489 = vdwg.mxu0
        %4490 = vmatprep.subr.bf16.mxu0 0
        %4491 = vmatpush1.bf16.msra.mxu0 %v4069
        %4492 = vmatprep.subr.bf16.mxu0 0
        %4493 = vmatpush1.bf16.msra.mxu0 %v4070
        %4494 = vmatprep.subr.bf16.mxu0 0
        %4495 = vmatpush1.bf16.msra.mxu0 %v4071
        %4496 = vmatprep.subr.bf16.mxu0 0
        %4497 = vmatpush1.bf16.msra.mxu0 %v4072
        %4498 = vmatprep.subr.bf16.mxu0 0
        %4499 = vmatpush1.bf16.msra.mxu0 %v4073
        %4500 = vmatprep.subr.bf16.mxu0 0
        %4501 = vmatpush1.bf16.msra.mxu0 %v4074
        %4502 = vmatprep.subr.bf16.mxu0 0
        %4503 = vmatpush1.bf16.msra.mxu0 %v4075
        %4504 = vmatprep.subr.bf16.mxu0 0
        %4505 = vmatpush1.bf16.msra.mxu0 %v4076
        %4506 = vmatprep.subr.bf16.mxu0 0
        %4507 = vmatpush1.bf16.msra.mxu0 %v4077
        %4508 = vmatprep.subr.bf16.mxu0 0
        %4509 = vmatpush1.bf16.msra.mxu0 %v4078
        %4510 = vmatprep.subr.bf16.mxu0 0
        %4511 = vmatpush1.bf16.msra.mxu0 %v4079
        %4512 = vmatprep.subr.bf16.mxu0 0
        %4513 = vmatpush1.bf16.msra.mxu0 %v4080
        %4514 = vmatprep.subr.bf16.mxu0 0
        %4515 = vmatpush1.bf16.msra.mxu0 %v4081
        %4516 = vmatprep.subr.bf16.mxu0 0
        %4517 = vmatpush1.bf16.msra.mxu0 %v4082
        %4518 = vmatprep.subr.bf16.mxu0 0
        %4519 = vmatpush1.bf16.msra.mxu0 %v4083
        %4520 = vmatprep.subr.bf16.mxu0 0
        %4521 = vmatpush1.bf16.msra.mxu0 %v4084
        %4522 = vmatprep.mubr.bf16.mxu0 %v3452
        %4523 = vmatmul.mubr.bf16.gmra.mrb[0].mxu0 %v3451
        %v4524 = vpop.f32.mrb[0].mxu0
        %v4525 = vadd.f32 %v4476, %v4524
        %v4526 = vpop.f32.mrb[0].mxu0
        %v4527 = vpop.f32.mrb[0].mxu0
        %v4528 = vadd.f32 %v4479, %v4527
        %v4529 = vpop.f32.mrb[0].mxu0
        %4530 = vmatprep.mubr.bf16.mxu0 %v3468
        %4531 = vmatmul.mubr.bf16.gmra.mrb[0].mxu0 %v3467
        %v4532 = vpop.f32.mrb[0].mxu0
        %v4533 = vadd.f32 %v4484, %v4532
        %v4534 = vpop.f32.mrb[0].mxu0
        %v4535 = vpop.f32.mrb[0].mxu0
        %v4536 = vadd.f32 %v4487, %v4535
        %v4537 = vpop.f32.mrb[0].mxu0
        %4538 = vdwg.mxu0
        %4539 = vmatprep.subr.bf16.mxu0 0
        %4540 = vmatpush1.bf16.msra.mxu0 %v4085
        %4541 = vmatprep.subr.bf16.mxu0 0
        %4542 = vmatpush1.bf16.msra.mxu0 %v4086
        %4543 = vmatprep.subr.bf16.mxu0 0
        %4544 = vmatpush1.bf16.msra.mxu0 %v4087
        %4545 = vmatprep.subr.bf16.mxu0 0
        %4546 = vmatpush1.bf16.msra.mxu0 %v4088
        %4547 = vmatprep.subr.bf16.mxu0 0
        %4548 = vmatpush1.bf16.msra.mxu0 %v4089
        %4549 = vmatprep.subr.bf16.mxu0 0
        %4550 = vmatpush1.bf16.msra.mxu0 %v4090
        %4551 = vmatprep.subr.bf16.mxu0 0
        %4552 = vmatpush1.bf16.msra.mxu0 %v4091
        %4553 = vmatprep.subr.bf16.mxu0 0
        %4554 = vmatpush1.bf16.msra.mxu0 %v4092
        %4555 = vmatprep.subr.bf16.mxu0 0
        %4556 = vmatpush1.bf16.msra.mxu0 %v4093
        %4557 = vmatprep.subr.bf16.mxu0 0
        %4558 = vmatpush1.bf16.msra.mxu0 %v4094
        %4559 = vmatprep.subr.bf16.mxu0 0
        %4560 = vmatpush1.bf16.msra.mxu0 %v4095
        %4561 = vmatprep.subr.bf16.mxu0 0
        %4562 = vmatpush1.bf16.msra.mxu0 %v4096
        %4563 = vmatprep.subr.bf16.mxu0 0
        %4564 = vmatpush1.bf16.msra.mxu0 %v4097
        %4565 = vmatprep.subr.bf16.mxu0 0
        %4566 = vmatpush1.bf16.msra.mxu0 %v4098
        %4567 = vmatprep.subr.bf16.mxu0 0
        %4568 = vmatpush1.bf16.msra.mxu0 %v4099
        %4569 = vmatprep.subr.bf16.mxu0 0
        %4570 = vmatpush1.bf16.msra.mxu0 %v4100
        %4571 = vmatprep.mubr.bf16.mxu0 %v3454
        %4572 = vmatmul.mubr.bf16.gmra.mrb[0].mxu0 %v3453
        %v4573 = vpop.f32.mrb[0].mxu0
        %v4574 = vadd.f32 %v4525, %v4573
        %v4575 = vpop.f32.mrb[0].mxu0
        %v4576 = vpop.f32.mrb[0].mxu0
        %v4577 = vadd.f32 %v4528, %v4576
        %v4578 = vpop.f32.mrb[0].mxu0
        %4579 = vmatprep.mubr.bf16.mxu0 %v3470
        %4580 = vmatmul.mubr.bf16.gmra.mrb[0].mxu0 %v3469
        %v4581 = vpop.f32.mrb[0].mxu0
        %v4582 = vadd.f32 %v4533, %v4581
        %v4583 = vpop.f32.mrb[0].mxu0
        %v4584 = vpop.f32.mrb[0].mxu0
        %v4585 = vadd.f32 %v4536, %v4584
        %v4586 = vpop.f32.mrb[0].mxu0
        %4587 = vdwg.mxu0
        %4588 = vmatprep.subr.bf16.mxu0 0
        %4589 = vmatpush1.bf16.msra.mxu0 %v4101
        %4590 = vmatprep.subr.bf16.mxu0 0
        %4591 = vmatpush1.bf16.msra.mxu0 %v4102
        %4592 = vmatprep.subr.bf16.mxu0 0
        %4593 = vmatpush1.bf16.msra.mxu0 %v4103
        %4594 = vmatprep.subr.bf16.mxu0 0
        %4595 = vmatpush1.bf16.msra.mxu0 %v4104
        %4596 = vmatprep.subr.bf16.mxu0 0
        %4597 = vmatpush1.bf16.msra.mxu0 %v4105
        %4598 = vmatprep.subr.bf16.mxu0 0
        %4599 = vmatpush1.bf16.msra.mxu0 %v4106
        %4600 = vmatprep.subr.bf16.mxu0 0
        %4601 = vmatpush1.bf16.msra.mxu0 %v4107
        %4602 = vmatprep.subr.bf16.mxu0 0
        %4603 = vmatpush1.bf16.msra.mxu0 %v4108
        %4604 = vmatprep.subr.bf16.mxu0 0
        %4605 = vmatpush1.bf16.msra.mxu0 %v4109
        %4606 = vmatprep.subr.bf16.mxu0 0
        %4607 = vmatpush1.bf16.msra.mxu0 %v4110
        %4608 = vmatprep.subr.bf16.mxu0 0
        %4609 = vmatpush1.bf16.msra.mxu0 %v4111
        %4610 = vmatprep.subr.bf16.mxu0 0
        %4611 = vmatpush1.bf16.msra.mxu0 %v4112
        %4612 = vmatprep.subr.bf16.mxu0 0
        %4613 = vmatpush1.bf16.msra.mxu0 %v4113
        %4614 = vmatprep.subr.bf16.mxu0 0
        %4615 = vmatpush1.bf16.msra.mxu0 %v4114
        %4616 = vmatprep.subr.bf16.mxu0 0
        %4617 = vmatpush1.bf16.msra.mxu0 %v4115
        %4618 = vmatprep.subr.bf16.mxu0 0
        %4619 = vmatpush1.bf16.msra.mxu0 %v4116
        %4620 = vmatprep.mubr.bf16.mxu0 %v3456
        %4621 = vmatmul.mubr.bf16.gmra.mrb[0].mxu0 %v3455
        %v4622 = vpop.f32.mrb[0].mxu0
        %v4623 = vadd.f32 %v4574, %v4622
        %v4624 = vpop.f32.mrb[0].mxu0
        %v4625 = vpop.f32.mrb[0].mxu0
        %v4626 = vadd.f32 %v4577, %v4625
        %v4627 = vpop.f32.mrb[0].mxu0
        %4628 = vmatprep.mubr.bf16.mxu0 %v3472
        %4629 = vmatmul.mubr.bf16.gmra.mrb[0].mxu0 %v3471
        %v4630 = vpop.f32.mrb[0].mxu0
        %v4631 = vadd.f32 %v4582, %v4630
        %v4632 = vpop.f32.mrb[0].mxu0
        %v4633 = vpop.f32.mrb[0].mxu0
        %v4634 = vadd.f32 %v4585, %v4633
        %v4635 = vpop.f32.mrb[0].mxu0
        %4636 = vdwg.mxu0
        %v4637 = vadd.f32 %v2411, %v4623
        %v4638 = vadd.f32 %v2412, %v4626
        %v4639 = vadd.f32 %v2413, %v4631
        %v4640 = vadd.f32 %v2414, %v4634
        %v4641 = vsel %vm654, %v4637, 0.0
        %4642 = vadd.xlane.f32.xlu0 %v4641
        %v4643 = vpop.xlane.xlu0 %4642
        %v4644 = vsel %vm654, %v4638, 0.0
        %4645 = vadd.xlane.f32.xlu0 %v4644
        %v4646 = vpop.xlane.xlu0 %4645
        %v4647 = vsel %vm654, %v4639, 0.0
        %4648 = vadd.xlane.f32.xlu0 %v4647
        %v4649 = vpop.xlane.xlu0 %4648
        %v4650 = vsel %vm654, %v4640, 0.0
        %4651 = vadd.xlane.f32.xlu0 %v4650
        %v4652 = vpop.xlane.xlu0 %4651
        %v4653 = vmul.f32 %v4643, %v1319
        %v4654 = vmul.f32 %v4646, %v1319
        %v4655 = vmul.f32 %v4649, %v1319
        %v4656 = vmul.f32 %v4652, %v1319
        %v4657 = vsub.f32 %v4637, %v4653
        %v4658 = vsub.f32 %v4638, %v4654
        %v4659 = vsub.f32 %v4639, %v4655
        %v4660 = vsub.f32 %v4640, %v4656
        %v4661 = vmul.f32 %v4657, %v4657
        %v4662 = vmul.f32 %v4658, %v4658
        %v4663 = vmul.f32 %v4659, %v4659
        %v4664 = vmul.f32 %v4660, %v4660
        %v4665 = vsel %vm654, %v4661, 0.0
        %4666 = vadd.xlane.f32.xlu0 %v4665
        %v4667 = vpop.xlane.xlu0 %4666
        %v4668 = vsel %vm654, %v4662, 0.0
        %4669 = vadd.xlane.f32.xlu0 %v4668
        %v4670 = vpop.xlane.xlu0 %4669
        %v4671 = vsel %vm654, %v4663, 0.0
        %4672 = vadd.xlane.f32.xlu0 %v4671
        %v4673 = vpop.xlane.xlu0 %4672
        %v4674 = vsel %vm654, %v4664, 0.0
        %4675 = vadd.xlane.f32.xlu0 %v4674
        %v4676 = vpop.xlane.xlu0 %4675
        %v4677 = vmul.f32 %v4667, %v1319
        %v4678 = vmul.f32 %v4670, %v1319
        %v4679 = vmul.f32 %v4673, %v1319
        %v4680 = vmul.f32 %v4676, %v1319
        %v4681 = vadd.f32 %v4677, 1e-05
        %v4682 = vadd.f32 %v4678, 1e-05
        %v4683 = vadd.f32 %v4679, 1e-05
        %v4684 = vadd.f32 %v4680, 1e-05
        %v4685 = vrsqrt.pop %v4681
        %v4686 = vrsqrt.pop %v4682
        %v4687 = vrsqrt.pop %v4683
        %v4688 = vrsqrt.pop %v4684
        %v4689 = vmul.f32 %v4657, %v4685
        %v4690 = vmul.f32 %v4658, %v4686
        %v4691 = vmul.f32 %v4659, %v4687
        %v4692 = vmul.f32 %v4660, %v4688
        %v4693 = vlaneseq
        %v4694 = vshrl.u32 %v4693, 7
        %v4695 = vsub.s32 5, %v4694
        %v4696 = vrot.slane %v634, %v4695
        %v4697 = vmul.f32 %v4689, %v4696
        %v4698 = vmul.f32 %v4690, %v4696
        %v4699 = vmul.f32 %v4691, %v4696
        %v4700 = vmul.f32 %v4692, %v4696
        %v4701 = vlaneseq
        %v4702 = vshrl.u32 %v4701, 7
        %v4703 = vsub.s32 6, %v4702
        %v4704 = vrot.slane %v634, %v4703
        %v4705 = vadd.f32 %v4697, %v4704
        %v4706 = vadd.f32 %v4698, %v4704
        %v4707 = vadd.f32 %v4699, %v4704
        %v4708 = vadd.f32 %v4700, %v4704
        %4711 = vrot.lane.b32.xlu0 %v4707, 32
        %v4712 = vpop.permute.xlu0 %4711
        %4713 = vrot.lane.b32.xlu0 %v4708, 32
        %v4714 = vpop.permute.xlu0 %4713
        %v4717 = vsel %vm654, %v4705, %v4712
        %v4718 = vsel %vm654, %v4706, %v4714
        %v4719 = vld [vmem:[%s13] sm:$0xf]
        %v4720 = vld [vmem:[%s13 + $0x4] sm:$0xf]
        %v4721 = vld [vmem:[%s13 + $0x8] sm:$0xf]
        %v4722 = vld [vmem:[%s13 + $0xc] sm:$0xf]
        %v4723 = vld [vmem:[%s13 + $0x10] sm:$0xf]
        %v4724 = vld [vmem:[%s13 + $0x14] sm:$0xf]
        %v4725 = vld [vmem:[%s13 + $0x18] sm:$0xf]
        %v4726 = vld [vmem:[%s13 + $0x1c] sm:$0xf]
        %v4727 = vpack.c.bf16 %v4718, %v4717
        %v4728 = vlaneseq
        %v4729 = vshrl.u32 %v4728, 7
        %v4730 = vsub.s32 7, %v4729
        %v4731 = vrot.slane %v634, %v4730
        %v4740 = vunpack.c.l.b16 %v4719
        %v4741 = vunpack.c.l.b16 %v4720
        %v4742 = vunpack.c.l.b16 %v4721
        %v4743 = vunpack.c.l.b16 %v4722
        %v4744 = vunpack.c.l.b16 %v4723
        %v4745 = vunpack.c.l.b16 %v4724
        %v4746 = vunpack.c.l.b16 %v4725
        %v4747 = vunpack.c.l.b16 %v4726
        %v4748 = vpack.c.b16 %v4741, %v4740
        %v4749 = vpack.c.b16 %v4743, %v4742
        %v4750 = vpack.c.b16 %v4745, %v4744
        %v4751 = vpack.c.b16 %v4747, %v4746
        %vm4756 = vcmask 523264
        %v4758 = vsel %vm4756, %v4727, 0
        %4760 = vmatprep.subr.bf16.mxu0 0
        %4761 = vmatpush1.bf16.msra.mxu0 %v4748
        %4762 = vmatprep.subr.bf16.mxu0 0
        %4763 = vmatpush1.bf16.msra.mxu0 %v4749
        %4764 = vmatprep.subr.bf16.mxu0 0
        %4765 = vmatpush1.bf16.msra.mxu0 %v4750
        %4766 = vmatprep.subr.bf16.mxu0 0
        %4767 = vmatpush1.bf16.msra.mxu0 %v4751
        %4768 = vmatprep.subr.bf16.mxu0 0
        %4769 = vmatpush1.bf16.msra.mxu0 0
        %4770 = vmatprep.subr.bf16.mxu0 0
        %4771 = vmatpush1.bf16.msra.mxu0 0
        %4772 = vmatprep.subr.bf16.mxu0 0
        %4773 = vmatpush1.bf16.msra.mxu0 0
        %4774 = vmatprep.subr.bf16.mxu0 0
        %4775 = vmatpush1.bf16.msra.mxu0 0
        %4776 = vmatprep.subr.bf16.mxu0 0
        %4777 = vmatpush1.bf16.msra.mxu0 0
        %4778 = vmatprep.subr.bf16.mxu0 0
        %4779 = vmatpush1.bf16.msra.mxu0 0
        %4780 = vmatprep.subr.bf16.mxu0 0
        %4781 = vmatpush1.bf16.msra.mxu0 0
        %4782 = vmatprep.subr.bf16.mxu0 0
        %4783 = vmatpush1.bf16.msra.mxu0 0
        %4784 = vmatprep.subr.bf16.mxu0 0
        %4785 = vmatpush1.bf16.msra.mxu0 0
        %4786 = vmatprep.subr.bf16.mxu0 0
        %4787 = vmatpush1.bf16.msra.mxu0 0
        %4788 = vmatprep.subr.bf16.mxu0 0
        %4789 = vmatpush1.bf16.msra.mxu0 0
        %4790 = vmatprep.subr.bf16.mxu0 0
        %4791 = vmatpush1.bf16.msra.mxu0 0
        %4792 = vmatprep.mubr.bf16.mxu0 0
        %4793 = vmatmul.mubr.bf16.gmra.mrb[0].mxu0 %v4758
        %v4794 = vpop.f32.mrb[0].mxu0
        %v4795 = vadd.f32 %v4731, %v4794
        %v4796 = vpop.f32.mrb[0].mxu0
        %v4797 = vpop.f32.mrb[0].mxu0
        %v4798 = vadd.f32 %v4731, %v4797
        %v4799 = vpop.f32.mrb[0].mxu0
        %4800 = vdwg.mxu0
        %v4801 = vxor.u32 %v4795, 2147483648
        %v4802 = vxor.u32 %v4798, 2147483648
        %v4803 = vmul.f32 %v4801, 1.442695
        %v4804 = vpow.pop %v4803
        %v4805 = vmul.f32 %v4802, 1.442695
        %v4806 = vpow.pop %v4805
        %v4807 = vadd.f32 %v4804, 1.0
        %v4808 = vadd.f32 %v4806, 1.0
        %v4809 = vrcp.pop %v4807
        %v4810 = vmul.f32 1.0, %v4809
        %v4811 = vrcp.pop %v4808
        %v4812 = vmul.f32 1.0, %v4811
        %v4813 = vmul.f32 %v4810, %v4705
        %v4814 = vmul.f32 %v4812, %v4706
        %v4815 = vsub.f32 1.0, %v4810
        %v4816 = vsub.f32 1.0, %v4812
        %v4817 = vmul.f32 %v4815, %v4707
        %v4818 = vmul.f32 %v4816, %v4708
        %v4819 = vadd.f32 %v4813, %v4817
        %v4820 = vadd.f32 %v4814, %v4818
        %4821 = vst.msk [vmem:[#allocation2] sm:$0xff] %vm654, %v4819
        %4822 = vst.msk [vmem:[#allocation2 + $0x8] sm:$0xff] %vm654, %v4820
        %p4823 = scmp.eq.s32.totalorder %s26, 1
        // Predicated region
        $region81: #{tpu_custom_call.1} parent=75 // pred_check
          %p4824 = pneg %p4823
        $region82: #{tpu_custom_call.1} parent=75 // pred_check_branch
          %4826 = sbr.rel (%p4824) target = $region84
        $region83: #{tpu_custom_call.1} parent=75 // pred_region
          %4827 = vst.msk [vmem:[#allocation3] sm:$0xff] %vm654, %v4819
          %4828 = vst.msk [vmem:[#allocation3 + $0x8] sm:$0xff] %vm654, %v4820
        $region84: #{tpu_custom_call.1} parent=75 // pred_fallthru
          _
        // Predicated region
        $region85: #{tpu_custom_call.1} parent=75 // pred_check
          %p4829 = pneg %p378
        $region86: #{tpu_custom_call.1} parent=75 // pred_check_branch
          %4831 = sbr.rel (%p4829) target = $region88
        $region87: #{tpu_custom_call.1} parent=75 // pred_region
          %s4833 = ssub.s32 256, 256
          %4834 = vsyncadd [#allocation4], %s4833
          %s4835 = sshll.u32 [#allocation3], 4
          %s4836 = int_to_ptr.vmem [resolvable:$true] %s4835
          %4841 = dma.vmem_to_hbm [thread:$0]  %s4836, 256, %s14, [#allocation4], 128, 128, 8
        $region88: #{tpu_custom_call.1} parent=75 // pred_fallthru
          _
        // Predicated region
        $region89: #{tpu_custom_call.1} parent=75 // pred_check
          %p4842 = pneg %p378
        $region90: #{tpu_custom_call.1} parent=75 // pred_check_branch
          %4844 = sbr.rel (%p4842) target = $region92
        $region91: #{tpu_custom_call.1} parent=75 // pred_region
          %4845 = dma.done [#allocation4], 256
        $region92: #{tpu_custom_call.1} parent=75 // pred_fallthru
          _
      $region76: #{tpu_custom_call.1} parent=5 // pred_fallthru
        _
      %p4846 = scmp.le.s32.totalorder 2, %s21
      // Predicated region
      $region93: #{tpu_custom_call.1} parent=5 // pred_check
        %p4847 = pneg %p4846
      $region94: #{tpu_custom_call.1} parent=5 // pred_check_branch
        %4849 = sbr.rel (%p4847) target = $region96
      $region95: #{tpu_custom_call.1} parent=5 // pred_region
        %s4850 = ssub.s32 %s21, 2
      $region96: #{tpu_custom_call.1} parent=5 // pred_fallthru
        _
    $region6: #{tpu_custom_call.1} parent=1 // loop_footer
      %s25 = sadd.s32 1, %s21
    $region7: #{tpu_custom_call.1} parent=1 // loop_footer_branch
      %20 = sbr.rel target = $region3
    $region8: #{tpu_custom_call.1} parent=1 // loop_exit
      _
    %4851 = vsyncpa [#allocation4], 1
    %s4852 = scalar_lea.sflag [#allocation4], 1
    %4853 = vsyncpa %s4852, 1

</llo_original>
